<compile_context>
chip_gen: v7x
topology: tpu7x:2x2x1
jax: 0.10.0
libtpu: 0.0.40
codegen_flags: <defaults>
</compile_context>

<pallas_src>
import jax
import jax.numpy as jnp
from jax.experimental import pallas as pl
from jax.experimental.pallas import tpu as pltpu

S = 8        # meta['S']
Z = 4        # meta['Z']
B = 8        # batch
CIN = S + 3  # TimeEncoder_IdentSquareCube.getSize(S)
EPS = 1e-5

# ---- row layout of the packed small-parameter blob P, shape (32, 512) f32 ----
# rows  0:8   cols 0:256  w_m1[0:8]          (s -> 256 weight)
# rows  8:12  cols 0:256  w_c1               (z -> 256 weight)
# rows 12:15  cols 0:256  w_m1[8:11]         (t, t^2, t^3 coefficient rows)
# row  15                 zeros
# rows 16:24  cols 0:256  g_m1,b_m1,g_c1,b_c1,g_2c,b_2c,g_3b,b_3b
# rows 24:30  cols 0:512  g_2a,b_2a,g_2b,b_2b,g_3a,b_3a
# rows 30:32              zeros
R_WS, R_WC1, R_WT = 0, 8, 12
R_GM1, R_BM1, R_GC1, R_BC1, R_G2C, R_B2C, R_G3B, R_B3B = 16, 17, 18, 19, 20, 21, 22, 23
R_G2A, R_B2A, R_G2B, R_B2B, R_G3A, R_B3A = 24, 25, 26, 27, 28, 29

# W512 blob (1024, 512) bf16: rows 0:256 w_2a | 256:768 w_2b | 768:1024 w_3a
# W256 blob (1024, 256) bf16: rows 0:512 w_2c | 512:1024 w_3b
# WFIN blob (257, 8) f32:     rows 0:256 w_fin | row 256 bias_fin

_FLOPS = 2 * B * (S * 256 + 3 * 256 + Z * 256 + 256 * 512 + 512 * 512
                  + 512 * 256 + 256 * 512 + 512 * 256 + 256 * S)
_BYTES = (1024 * 512 * 2) + (1024 * 256 * 2) + (32 * 512 * 4) + (257 * 8 * 4) \
         + (B * S * 4) * 2 + (B * 4) + (B * Z * 4)
_TRANSCEND = 4 * 256 + 3 * 512  # rsqrt per BN channel


def _bn_train(x, gamma, beta):
    """BatchNorm1d, training mode (batch stats, biased var) as scale/shift."""
    mean = jnp.mean(x, axis=0, keepdims=True)
    var = jnp.mean(x * x, axis=0, keepdims=True) - mean * mean
    scale = gamma * jax.lax.rsqrt(var + EPS)
    return x * scale + (beta - mean * scale)


def _residual_net2_kernel(s_ref, t_ref, z_ref, p_ref, w256_ref, w512_ref,
                          wfin_ref, out_ref):
    f32 = jnp.float32
    bf16 = jnp.bfloat16

    def p256(r):                      # one 256-wide parameter row
        return p_ref[r:r + 1, 0:256]

    def p512(r):                      # one 512-wide parameter row
        return p_ref[r:r + 1, :]

    def bdot(x, w_bf16):              # bf16 MXU matmul, f32 accumulation
        return jnp.dot(x.astype(bf16), w_bf16, preferred_element_type=f32)

    s = s_ref[...]                    # (B, S)   f32
    t1 = t_ref[...]                   # (B, 1)   f32
    z = z_ref[...]                    # (B, Z)   f32
    t2 = t1 * t1
    t3 = t2 * t1

    # b = mod1(timeEncoder(s, t)) + conditional_mod1(z)   (time-encode fused)
    pre1 = jnp.dot(s, p_ref[0:8, 0:256], preferred_element_type=f32)
    pre1 = pre1 + t1 * p256(R_WT) + t2 * p256(R_WT + 1) + t3 * p256(R_WT + 2)
    pre2 = jnp.dot(z, p_ref[8:12, 0:256], preferred_element_type=f32)
    b = _bn_train(pre1, p256(R_GM1), p256(R_BM1)) \
      + _bn_train(pre2, p256(R_GC1), p256(R_BC1))

    # c = mod2(b) + b
    h = jnp.maximum(b, 0.0)
    h = _bn_train(bdot(h, w512_ref[0:256, :]),   p512(R_G2A), p512(R_B2A))
    h = jnp.maximum(h, 0.0)
    h = _bn_train(bdot(h, w512_ref[256:768, :]), p512(R_G2B), p512(R_B2B))
    h = jnp.maximum(h, 0.0)
    h = _bn_train(bdot(h, w256_ref[0:512, :]),   p256(R_G2C), p256(R_B2C))
    c = h + b

    # d = mod3(c) + c
    h = jnp.maximum(c, 0.0)
    h = _bn_train(bdot(h, w512_ref[768:1024, :]), p512(R_G3A), p512(R_B3A))
    h = jnp.maximum(h, 0.0)
    h = _bn_train(bdot(h, w256_ref[512:1024, :]), p256(R_G3B), p256(R_B3B))
    d = h + c

    # e = fin(d)
    e = jnp.dot(jnp.maximum(d, 0.0), wfin_ref[0:256, :],
                preferred_element_type=f32) + wfin_ref[256:257, :]
    out_ref[...] = e.astype(out_ref.dtype)


@jax.jit
def residual_net2_forward(s, t, z, p_blob, w256, w512, wfin):
    vmem = pl.BlockSpec(memory_space=pltpu.MemorySpace.VMEM)
    return pl.pallas_call(
        _residual_net2_kernel,
        out_shape=jax.ShapeDtypeStruct((s.shape[0], S), jnp.float32),
        in_specs=[vmem] * 7,
        out_specs=vmem,
        cost_estimate=pl.CostEstimate(flops=_FLOPS, transcendentals=_TRANSCEND,
                                      bytes_accessed=_BYTES),
    )(s, t.reshape(-1, 1), z, p_blob, w256, w512, wfin)


# ----------------------------- parameters ------------------------------------

def make_raw_params(key):
    """Synthetic parameters with the module's shapes (big weights in bf16)."""
    def lin(k, fi, fo, dtype):
        bound = 1.0 / jnp.sqrt(jnp.float32(fi))
        return jax.random.uniform(k, (fi, fo), jnp.float32, -bound, bound).astype(dtype)

    def bn(k, c):
        kg, kb = jax.random.split(k)
        return (jax.random.uniform(kg, (1, c), jnp.float32, 0.5, 1.5),
                jax.random.uniform(kb, (1, c), jnp.float32, -0.5, 0.5))

    ks = jax.random.split(key, 16)
    raw = {}
    raw['w_m1'] = lin(ks[0], CIN, 256, jnp.float32)
    raw['g_m1'], raw['b_m1'] = bn(ks[1], 256)
    raw['w_c1'] = lin(ks[2], Z, 256, jnp.float32)
    raw['g_c1'], raw['b_c1'] = bn(ks[3], 256)
    raw['w_2a'] = lin(ks[4], 256, 512, jnp.bfloat16)
    raw['g_2a'], raw['b_2a'] = bn(ks[5], 512)
    raw['w_2b'] = lin(ks[6], 512, 512, jnp.bfloat16)
    raw['g_2b'], raw['b_2b'] = bn(ks[7], 512)
    raw['w_2c'] = lin(ks[8], 512, 256, jnp.bfloat16)
    raw['g_2c'], raw['b_2c'] = bn(ks[9], 256)
    raw['w_3a'] = lin(ks[10], 256, 512, jnp.bfloat16)
    raw['g_3a'], raw['b_3a'] = bn(ks[11], 512)
    raw['w_3b'] = lin(ks[12], 512, 256, jnp.bfloat16)
    raw['g_3b'], raw['b_3b'] = bn(ks[13], 256)
    raw['w_fin'] = lin(ks[14], 256, S, jnp.float32)
    bound = 1.0 / jnp.sqrt(256.0)
    raw['b_fin'] = jax.random.uniform(ks[15], (1, S), jnp.float32, -bound, bound)
    return raw


def pack_params(raw):
    """Pack 25 parameter arrays into 4 kernel operands."""
    f32 = jnp.float32

    def pad512(x):
        return jnp.pad(x.astype(f32), ((0, 0), (0, 512 - x.shape[1])))

    p_blob = jnp.concatenate([
        pad512(raw['w_m1'][:S]),                      # rows  0:8
        pad512(raw['w_c1']),                          # rows  8:12
        pad512(raw['w_m1'][S:]),                      # rows 12:15
        jnp.zeros((1, 512), f32),                     # row  15
        pad512(jnp.concatenate([raw['g_m1'], raw['b_m1'], raw['g_c1'], raw['b_c1'],
                                raw['g_2c'], raw['b_2c'], raw['g_3b'], raw['b_3b']],
                               axis=0)),              # rows 16:24
        jnp.concatenate([raw['g_2a'], raw['b_2a'], raw['g_2b'], raw['b_2b'],
                         raw['g_3a'], raw['b_3a']], axis=0).astype(f32),  # 24:30
        jnp.zeros((2, 512), f32),                     # rows 30:32
    ], axis=0)                                        # (32, 512) f32

    w512 = jnp.concatenate([raw['w_2a'], raw['w_2b'], raw['w_3a']], axis=0)  # (1024,512) bf16
    w256 = jnp.concatenate([raw['w_2c'], raw['w_3b']], axis=0)               # (1024,256) bf16
    wfin = jnp.concatenate([raw['w_fin'], raw['b_fin']], axis=0)             # (257, 8) f32
    return p_blob, w256, w512, wfin


# ----------------------------- reference --------------------------------------

def residual_net2_reference(s, t, z, raw):
    """Pure-JAX reference with the same math (bf16 weights, f32 accumulation)."""
    f32, bf16 = jnp.float32, jnp.bfloat16

    def bdot(x, w):
        return jnp.dot(x.astype(bf16), w.astype(bf16), preferred_element_type=f32)

    et = t.reshape(-1, 1)
    a = jnp.concatenate([s, et, et ** 2, et ** 3], axis=1)
    b = _bn_train(jnp.dot(a, raw['w_m1'], preferred_element_type=f32),
                  raw['g_m1'], raw['b_m1']) \
      + _bn_train(jnp.dot(z, raw['w_c1'], preferred_element_type=f32),
                  raw['g_c1'], raw['b_c1'])
    h = jax.nn.relu(b)
    h = _bn_train(bdot(h, raw['w_2a']), raw['g_2a'], raw['b_2a'])
    h = _bn_train(bdot(jax.nn.relu(h), raw['w_2b']), raw['g_2b'], raw['b_2b'])
    h = _bn_train(bdot(jax.nn.relu(h), raw['w_2c']), raw['g_2c'], raw['b_2c'])
    c = h + b
    h = _bn_train(bdot(jax.nn.relu(c), raw['w_3a']), raw['g_3a'], raw['b_3a'])
    h = _bn_train(bdot(jax.nn.relu(h), raw['w_3b']), raw['g_3b'], raw['b_3b'])
    d = h + c
    return jnp.dot(jax.nn.relu(d), raw['w_fin'],
                   preferred_element_type=f32) + raw['b_fin']


if __name__ == "__main__":
    key = jax.random.PRNGKey(0)
    k_s, k_t, k_z, k_p = jax.random.split(key, 4)

    s = jax.random.normal(k_s, (B, S), jnp.float32)
    t = jax.random.uniform(k_t, (B,), jnp.float32)
    z = jax.random.normal(k_z, (B, Z), jnp.float32)

    raw = make_raw_params(k_p)
    p_blob, w256, w512, wfin = pack_params(raw)

    out = residual_net2_forward(s, t, z, p_blob, w256, w512, wfin)
    out = jax.block_until_ready(out)

    ref = residual_net2_reference(s, t, z, raw)
    assert out.shape == (B, S)
    assert bool(jnp.all(jnp.isfinite(out)))
    err = float(jnp.max(jnp.abs(out - ref)))
    assert err < 2e-2, f"mismatch vs pure-JAX reference: {err}"

    print("KERNEL_OK")
</pallas_src>

<mosaic_0001>
module attributes {stable_mosaic.version = 11 : i64} {
  func.func @_residual_net2_kernel(%arg0: memref<8x8xf32, #tpu.memory_space<vmem>>, %arg1: memref<8x1xf32, #tpu.memory_space<vmem>>, %arg2: memref<8x4xf32, #tpu.memory_space<vmem>>, %arg3: memref<32x512xf32, #tpu.memory_space<vmem>>, %arg4: memref<1024x256xbf16, #tpu.memory_space<vmem>>, %arg5: memref<1024x512xbf16, #tpu.memory_space<vmem>>, %arg6: memref<257x8xf32, #tpu.memory_space<vmem>>, %arg7: memref<8x8xf32, #tpu.memory_space<vmem>>) attributes {dimension_semantics = [], scalar_prefetch = 0 : i64, scratch_operands = 0 : i64, tpu.core_type = #tpu.core_type<tc>} {
    %c0 = arith.constant 0 : index
    %c0_0 = arith.constant 0 : index
    %0 = vector.load %arg0[%c0, %c0_0] : memref<8x8xf32, #tpu.memory_space<vmem>>, vector<8x8xf32>
    %c0_1 = arith.constant 0 : index
    %c0_2 = arith.constant 0 : index
    %1 = vector.load %arg1[%c0_1, %c0_2] : memref<8x1xf32, #tpu.memory_space<vmem>>, vector<8x1xf32>
    %c0_3 = arith.constant 0 : index
    %c0_4 = arith.constant 0 : index
    %2 = vector.load %arg2[%c0_3, %c0_4] : memref<8x4xf32, #tpu.memory_space<vmem>>, vector<8x4xf32>
    %3 = arith.mulf %1, %1 : vector<8x1xf32>
    %4 = arith.mulf %3, %1 : vector<8x1xf32>
    %c0_5 = arith.constant 0 : index
    %c0_6 = arith.constant 0 : index
    %5 = vector.load %arg3[%c0_5, %c0_6] : memref<32x512xf32, #tpu.memory_space<vmem>>, vector<8x256xf32>
    %cst = arith.constant dense<0.000000e+00> : vector<8x256xf32>
    %6 = tpu.matmul %0, %5, %cst {dimension_numbers = #tpu.dot_dimension_numbers<[1], [0], [0], [1], [0, 0, 1, 1], [], []>} : vector<8x8xf32>, vector<8x256xf32>, vector<8x256xf32> -> vector<8x256xf32>
    %c12 = arith.constant 12 : index
    %c0_7 = arith.constant 0 : index
    %7 = vector.load %arg3[%c12, %c0_7] : memref<32x512xf32, #tpu.memory_space<vmem>>, vector<1x256xf32>
    %8 = vector.broadcast %1 : vector<8x1xf32> to vector<8x256xf32>
    %9 = vector.broadcast %7 : vector<1x256xf32> to vector<8x256xf32>
    %10 = arith.mulf %8, %9 : vector<8x256xf32>
    %11 = arith.addf %6, %10 : vector<8x256xf32>
    %c13 = arith.constant 13 : index
    %c0_8 = arith.constant 0 : index
    %12 = vector.load %arg3[%c13, %c0_8] : memref<32x512xf32, #tpu.memory_space<vmem>>, vector<1x256xf32>
    %13 = vector.broadcast %3 : vector<8x1xf32> to vector<8x256xf32>
    %14 = vector.broadcast %12 : vector<1x256xf32> to vector<8x256xf32>
    %15 = arith.mulf %13, %14 : vector<8x256xf32>
    %16 = arith.addf %11, %15 : vector<8x256xf32>
    %c14 = arith.constant 14 : index
    %c0_9 = arith.constant 0 : index
    %17 = vector.load %arg3[%c14, %c0_9] : memref<32x512xf32, #tpu.memory_space<vmem>>, vector<1x256xf32>
    %18 = vector.broadcast %4 : vector<8x1xf32> to vector<8x256xf32>
    %19 = vector.broadcast %17 : vector<1x256xf32> to vector<8x256xf32>
    %20 = arith.mulf %18, %19 : vector<8x256xf32>
    %21 = arith.addf %16, %20 : vector<8x256xf32>
    %c8 = arith.constant 8 : index
    %c0_10 = arith.constant 0 : index
    %22 = vector.load %arg3[%c8, %c0_10] : memref<32x512xf32, #tpu.memory_space<vmem>>, vector<4x256xf32>
    %cst_11 = arith.constant dense<0.000000e+00> : vector<8x256xf32>
    %23 = tpu.matmul %2, %22, %cst_11 {dimension_numbers = #tpu.dot_dimension_numbers<[1], [0], [0], [1], [0, 0, 1, 1], [], []>} : vector<8x4xf32>, vector<4x256xf32>, vector<8x256xf32> -> vector<8x256xf32>
    %c16 = arith.constant 16 : index
    %c0_12 = arith.constant 0 : index
    %24 = vector.load %arg3[%c16, %c0_12] : memref<32x512xf32, #tpu.memory_space<vmem>>, vector<1x256xf32>
    %c17 = arith.constant 17 : index
    %c0_13 = arith.constant 0 : index
    %25 = vector.load %arg3[%c17, %c0_13] : memref<32x512xf32, #tpu.memory_space<vmem>>, vector<1x256xf32>
    %cst_14 = arith.constant dense<0.000000e+00> : vector<256xf32>
    %26 = vector.multi_reduction <add>, %21, %cst_14 [0] : vector<8x256xf32> to vector<256xf32>
    %27 = vector.shape_cast %26 : vector<256xf32> to vector<1x256xf32>
    %cst_15 = arith.constant 8.000000e+00 : f32
    %28 = vector.broadcast %cst_15 : f32 to vector<1x256xf32>
    %29 = arith.divf %27, %28 : vector<1x256xf32>
    %30 = arith.mulf %21, %21 : vector<8x256xf32>
    %cst_16 = arith.constant dense<0.000000e+00> : vector<256xf32>
    %31 = vector.multi_reduction <add>, %30, %cst_16 [0] : vector<8x256xf32> to vector<256xf32>
    %32 = vector.shape_cast %31 : vector<256xf32> to vector<1x256xf32>
    %cst_17 = arith.constant 8.000000e+00 : f32
    %33 = vector.broadcast %cst_17 : f32 to vector<1x256xf32>
    %34 = arith.divf %32, %33 : vector<1x256xf32>
    %35 = arith.mulf %29, %29 : vector<1x256xf32>
    %36 = arith.subf %34, %35 : vector<1x256xf32>
    %cst_18 = arith.constant 9.99999974E-6 : f32
    %37 = vector.broadcast %cst_18 : f32 to vector<1x256xf32>
    %38 = arith.addf %36, %37 : vector<1x256xf32>
    %39 = math.rsqrt %38 : vector<1x256xf32>
    %40 = arith.mulf %24, %39 : vector<1x256xf32>
    %41 = vector.broadcast %40 : vector<1x256xf32> to vector<8x256xf32>
    %42 = arith.mulf %21, %41 : vector<8x256xf32>
    %43 = arith.mulf %29, %40 : vector<1x256xf32>
    %44 = arith.subf %25, %43 : vector<1x256xf32>
    %45 = vector.broadcast %44 : vector<1x256xf32> to vector<8x256xf32>
    %46 = arith.addf %42, %45 : vector<8x256xf32>
    %c18 = arith.constant 18 : index
    %c0_19 = arith.constant 0 : index
    %47 = vector.load %arg3[%c18, %c0_19] : memref<32x512xf32, #tpu.memory_space<vmem>>, vector<1x256xf32>
    %c19 = arith.constant 19 : index
    %c0_20 = arith.constant 0 : index
    %48 = vector.load %arg3[%c19, %c0_20] : memref<32x512xf32, #tpu.memory_space<vmem>>, vector<1x256xf32>
    %cst_21 = arith.constant dense<0.000000e+00> : vector<256xf32>
    %49 = vector.multi_reduction <add>, %23, %cst_21 [0] : vector<8x256xf32> to vector<256xf32>
    %50 = vector.shape_cast %49 : vector<256xf32> to vector<1x256xf32>
    %cst_22 = arith.constant 8.000000e+00 : f32
    %51 = vector.broadcast %cst_22 : f32 to vector<1x256xf32>
    %52 = arith.divf %50, %51 : vector<1x256xf32>
    %53 = arith.mulf %23, %23 : vector<8x256xf32>
    %cst_23 = arith.constant dense<0.000000e+00> : vector<256xf32>
    %54 = vector.multi_reduction <add>, %53, %cst_23 [0] : vector<8x256xf32> to vector<256xf32>
    %55 = vector.shape_cast %54 : vector<256xf32> to vector<1x256xf32>
    %cst_24 = arith.constant 8.000000e+00 : f32
    %56 = vector.broadcast %cst_24 : f32 to vector<1x256xf32>
    %57 = arith.divf %55, %56 : vector<1x256xf32>
    %58 = arith.mulf %52, %52 : vector<1x256xf32>
    %59 = arith.subf %57, %58 : vector<1x256xf32>
    %cst_25 = arith.constant 9.99999974E-6 : f32
    %60 = vector.broadcast %cst_25 : f32 to vector<1x256xf32>
    %61 = arith.addf %59, %60 : vector<1x256xf32>
    %62 = math.rsqrt %61 : vector<1x256xf32>
    %63 = arith.mulf %47, %62 : vector<1x256xf32>
    %64 = vector.broadcast %63 : vector<1x256xf32> to vector<8x256xf32>
    %65 = arith.mulf %23, %64 : vector<8x256xf32>
    %66 = arith.mulf %52, %63 : vector<1x256xf32>
    %67 = arith.subf %48, %66 : vector<1x256xf32>
    %68 = vector.broadcast %67 : vector<1x256xf32> to vector<8x256xf32>
    %69 = arith.addf %65, %68 : vector<8x256xf32>
    %70 = arith.addf %46, %69 : vector<8x256xf32>
    %cst_26 = arith.constant 0.000000e+00 : f32
    %71 = vector.broadcast %cst_26 : f32 to vector<8x256xf32>
    %72 = arith.maximumf %70, %71 : vector<8x256xf32>
    %c0_27 = arith.constant 0 : index
    %c0_28 = arith.constant 0 : index
    %73 = vector.load %arg5[%c0_27, %c0_28] : memref<1024x512xbf16, #tpu.memory_space<vmem>>, vector<256x512xbf16>
    %74 = arith.truncf %72 : vector<8x256xf32> to vector<8x256xbf16>
    %cst_29 = arith.constant dense<0.000000e+00> : vector<8x512xf32>
    %75 = tpu.matmul %74, %73, %cst_29 {dimension_numbers = #tpu.dot_dimension_numbers<[1], [0], [0], [1], [0, 0, 1, 1], [], []>} : vector<8x256xbf16>, vector<256x512xbf16>, vector<8x512xf32> -> vector<8x512xf32>
    %c24 = arith.constant 24 : index
    %c0_30 = arith.constant 0 : index
    %76 = vector.load %arg3[%c24, %c0_30] : memref<32x512xf32, #tpu.memory_space<vmem>>, vector<1x512xf32>
    %c25 = arith.constant 25 : index
    %c0_31 = arith.constant 0 : index
    %77 = vector.load %arg3[%c25, %c0_31] : memref<32x512xf32, #tpu.memory_space<vmem>>, vector<1x512xf32>
    %cst_32 = arith.constant dense<0.000000e+00> : vector<512xf32>
    %78 = vector.multi_reduction <add>, %75, %cst_32 [0] : vector<8x512xf32> to vector<512xf32>
    %79 = vector.shape_cast %78 : vector<512xf32> to vector<1x512xf32>
    %cst_33 = arith.constant 8.000000e+00 : f32
    %80 = vector.broadcast %cst_33 : f32 to vector<1x512xf32>
    %81 = arith.divf %79, %80 : vector<1x512xf32>
    %82 = arith.mulf %75, %75 : vector<8x512xf32>
    %cst_34 = arith.constant dense<0.000000e+00> : vector<512xf32>
    %83 = vector.multi_reduction <add>, %82, %cst_34 [0] : vector<8x512xf32> to vector<512xf32>
    %84 = vector.shape_cast %83 : vector<512xf32> to vector<1x512xf32>
    %cst_35 = arith.constant 8.000000e+00 : f32
    %85 = vector.broadcast %cst_35 : f32 to vector<1x512xf32>
    %86 = arith.divf %84, %85 : vector<1x512xf32>
    %87 = arith.mulf %81, %81 : vector<1x512xf32>
    %88 = arith.subf %86, %87 : vector<1x512xf32>
    %cst_36 = arith.constant 9.99999974E-6 : f32
    %89 = vector.broadcast %cst_36 : f32 to vector<1x512xf32>
    %90 = arith.addf %88, %89 : vector<1x512xf32>
    %91 = math.rsqrt %90 : vector<1x512xf32>
    %92 = arith.mulf %76, %91 : vector<1x512xf32>
    %93 = vector.broadcast %92 : vector<1x512xf32> to vector<8x512xf32>
    %94 = arith.mulf %75, %93 : vector<8x512xf32>
    %95 = arith.mulf %81, %92 : vector<1x512xf32>
    %96 = arith.subf %77, %95 : vector<1x512xf32>
    %97 = vector.broadcast %96 : vector<1x512xf32> to vector<8x512xf32>
    %98 = arith.addf %94, %97 : vector<8x512xf32>
    %cst_37 = arith.constant 0.000000e+00 : f32
    %99 = vector.broadcast %cst_37 : f32 to vector<8x512xf32>
    %100 = arith.maximumf %98, %99 : vector<8x512xf32>
    %c256 = arith.constant 256 : index
    %c0_38 = arith.constant 0 : index
    %101 = vector.load %arg5[%c256, %c0_38] : memref<1024x512xbf16, #tpu.memory_space<vmem>>, vector<512x512xbf16>
    %102 = arith.truncf %100 : vector<8x512xf32> to vector<8x512xbf16>
    %cst_39 = arith.constant dense<0.000000e+00> : vector<8x512xf32>
    %103 = tpu.matmul %102, %101, %cst_39 {dimension_numbers = #tpu.dot_dimension_numbers<[1], [0], [0], [1], [0, 0, 1, 1], [], []>} : vector<8x512xbf16>, vector<512x512xbf16>, vector<8x512xf32> -> vector<8x512xf32>
    %c26 = arith.constant 26 : index
    %c0_40 = arith.constant 0 : index
    %104 = vector.load %arg3[%c26, %c0_40] : memref<32x512xf32, #tpu.memory_space<vmem>>, vector<1x512xf32>
    %c27 = arith.constant 27 : index
    %c0_41 = arith.constant 0 : index
    %105 = vector.load %arg3[%c27, %c0_41] : memref<32x512xf32, #tpu.memory_space<vmem>>, vector<1x512xf32>
    %cst_42 = arith.constant dense<0.000000e+00> : vector<512xf32>
    %106 = vector.multi_reduction <add>, %103, %cst_42 [0] : vector<8x512xf32> to vector<512xf32>
    %107 = vector.shape_cast %106 : vector<512xf32> to vector<1x512xf32>
    %cst_43 = arith.constant 8.000000e+00 : f32
    %108 = vector.broadcast %cst_43 : f32 to vector<1x512xf32>
    %109 = arith.divf %107, %108 : vector<1x512xf32>
    %110 = arith.mulf %103, %103 : vector<8x512xf32>
    %cst_44 = arith.constant dense<0.000000e+00> : vector<512xf32>
    %111 = vector.multi_reduction <add>, %110, %cst_44 [0] : vector<8x512xf32> to vector<512xf32>
    %112 = vector.shape_cast %111 : vector<512xf32> to vector<1x512xf32>
    %cst_45 = arith.constant 8.000000e+00 : f32
    %113 = vector.broadcast %cst_45 : f32 to vector<1x512xf32>
    %114 = arith.divf %112, %113 : vector<1x512xf32>
    %115 = arith.mulf %109, %109 : vector<1x512xf32>
    %116 = arith.subf %114, %115 : vector<1x512xf32>
    %cst_46 = arith.constant 9.99999974E-6 : f32
    %117 = vector.broadcast %cst_46 : f32 to vector<1x512xf32>
    %118 = arith.addf %116, %117 : vector<1x512xf32>
    %119 = math.rsqrt %118 : vector<1x512xf32>
    %120 = arith.mulf %104, %119 : vector<1x512xf32>
    %121 = vector.broadcast %120 : vector<1x512xf32> to vector<8x512xf32>
    %122 = arith.mulf %103, %121 : vector<8x512xf32>
    %123 = arith.mulf %109, %120 : vector<1x512xf32>
    %124 = arith.subf %105, %123 : vector<1x512xf32>
    %125 = vector.broadcast %124 : vector<1x512xf32> to vector<8x512xf32>
    %126 = arith.addf %122, %125 : vector<8x512xf32>
    %cst_47 = arith.constant 0.000000e+00 : f32
    %127 = vector.broadcast %cst_47 : f32 to vector<8x512xf32>
    %128 = arith.maximumf %126, %127 : vector<8x512xf32>
    %c0_48 = arith.constant 0 : index
    %c0_49 = arith.constant 0 : index
    %129 = vector.load %arg4[%c0_48, %c0_49] : memref<1024x256xbf16, #tpu.memory_space<vmem>>, vector<512x256xbf16>
    %130 = arith.truncf %128 : vector<8x512xf32> to vector<8x512xbf16>
    %cst_50 = arith.constant dense<0.000000e+00> : vector<8x256xf32>
    %131 = tpu.matmul %130, %129, %cst_50 {dimension_numbers = #tpu.dot_dimension_numbers<[1], [0], [0], [1], [0, 0, 1, 1], [], []>} : vector<8x512xbf16>, vector<512x256xbf16>, vector<8x256xf32> -> vector<8x256xf32>
    %c20 = arith.constant 20 : index
    %c0_51 = arith.constant 0 : index
    %132 = vector.load %arg3[%c20, %c0_51] : memref<32x512xf32, #tpu.memory_space<vmem>>, vector<1x256xf32>
    %c21 = arith.constant 21 : index
    %c0_52 = arith.constant 0 : index
    %133 = vector.load %arg3[%c21, %c0_52] : memref<32x512xf32, #tpu.memory_space<vmem>>, vector<1x256xf32>
    %cst_53 = arith.constant dense<0.000000e+00> : vector<256xf32>
    %134 = vector.multi_reduction <add>, %131, %cst_53 [0] : vector<8x256xf32> to vector<256xf32>
    %135 = vector.shape_cast %134 : vector<256xf32> to vector<1x256xf32>
    %cst_54 = arith.constant 8.000000e+00 : f32
    %136 = vector.broadcast %cst_54 : f32 to vector<1x256xf32>
    %137 = arith.divf %135, %136 : vector<1x256xf32>
    %138 = arith.mulf %131, %131 : vector<8x256xf32>
    %cst_55 = arith.constant dense<0.000000e+00> : vector<256xf32>
    %139 = vector.multi_reduction <add>, %138, %cst_55 [0] : vector<8x256xf32> to vector<256xf32>
    %140 = vector.shape_cast %139 : vector<256xf32> to vector<1x256xf32>
    %cst_56 = arith.constant 8.000000e+00 : f32
    %141 = vector.broadcast %cst_56 : f32 to vector<1x256xf32>
    %142 = arith.divf %140, %141 : vector<1x256xf32>
    %143 = arith.mulf %137, %137 : vector<1x256xf32>
    %144 = arith.subf %142, %143 : vector<1x256xf32>
    %cst_57 = arith.constant 9.99999974E-6 : f32
    %145 = vector.broadcast %cst_57 : f32 to vector<1x256xf32>
    %146 = arith.addf %144, %145 : vector<1x256xf32>
    %147 = math.rsqrt %146 : vector<1x256xf32>
    %148 = arith.mulf %132, %147 : vector<1x256xf32>
    %149 = vector.broadcast %148 : vector<1x256xf32> to vector<8x256xf32>
    %150 = arith.mulf %131, %149 : vector<8x256xf32>
    %151 = arith.mulf %137, %148 : vector<1x256xf32>
    %152 = arith.subf %133, %151 : vector<1x256xf32>
    %153 = vector.broadcast %152 : vector<1x256xf32> to vector<8x256xf32>
    %154 = arith.addf %150, %153 : vector<8x256xf32>
    %155 = arith.addf %154, %70 : vector<8x256xf32>
    %cst_58 = arith.constant 0.000000e+00 : f32
    %156 = vector.broadcast %cst_58 : f32 to vector<8x256xf32>
    %157 = arith.maximumf %155, %156 : vector<8x256xf32>
    %c768 = arith.constant 768 : index
    %c0_59 = arith.constant 0 : index
    %158 = vector.load %arg5[%c768, %c0_59] : memref<1024x512xbf16, #tpu.memory_space<vmem>>, vector<256x512xbf16>
    %159 = arith.truncf %157 : vector<8x256xf32> to vector<8x256xbf16>
    %cst_60 = arith.constant dense<0.000000e+00> : vector<8x512xf32>
    %160 = tpu.matmul %159, %158, %cst_60 {dimension_numbers = #tpu.dot_dimension_numbers<[1], [0], [0], [1], [0, 0, 1, 1], [], []>} : vector<8x256xbf16>, vector<256x512xbf16>, vector<8x512xf32> -> vector<8x512xf32>
    %c28 = arith.constant 28 : index
    %c0_61 = arith.constant 0 : index
    %161 = vector.load %arg3[%c28, %c0_61] : memref<32x512xf32, #tpu.memory_space<vmem>>, vector<1x512xf32>
    %c29 = arith.constant 29 : index
    %c0_62 = arith.constant 0 : index
    %162 = vector.load %arg3[%c29, %c0_62] : memref<32x512xf32, #tpu.memory_space<vmem>>, vector<1x512xf32>
    %cst_63 = arith.constant dense<0.000000e+00> : vector<512xf32>
    %163 = vector.multi_reduction <add>, %160, %cst_63 [0] : vector<8x512xf32> to vector<512xf32>
    %164 = vector.shape_cast %163 : vector<512xf32> to vector<1x512xf32>
    %cst_64 = arith.constant 8.000000e+00 : f32
    %165 = vector.broadcast %cst_64 : f32 to vector<1x512xf32>
    %166 = arith.divf %164, %165 : vector<1x512xf32>
    %167 = arith.mulf %160, %160 : vector<8x512xf32>
    %cst_65 = arith.constant dense<0.000000e+00> : vector<512xf32>
    %168 = vector.multi_reduction <add>, %167, %cst_65 [0] : vector<8x512xf32> to vector<512xf32>
    %169 = vector.shape_cast %168 : vector<512xf32> to vector<1x512xf32>
    %cst_66 = arith.constant 8.000000e+00 : f32
    %170 = vector.broadcast %cst_66 : f32 to vector<1x512xf32>
    %171 = arith.divf %169, %170 : vector<1x512xf32>
    %172 = arith.mulf %166, %166 : vector<1x512xf32>
    %173 = arith.subf %171, %172 : vector<1x512xf32>
    %cst_67 = arith.constant 9.99999974E-6 : f32
    %174 = vector.broadcast %cst_67 : f32 to vector<1x512xf32>
    %175 = arith.addf %173, %174 : vector<1x512xf32>
    %176 = math.rsqrt %175 : vector<1x512xf32>
    %177 = arith.mulf %161, %176 : vector<1x512xf32>
    %178 = vector.broadcast %177 : vector<1x512xf32> to vector<8x512xf32>
    %179 = arith.mulf %160, %178 : vector<8x512xf32>
    %180 = arith.mulf %166, %177 : vector<1x512xf32>
    %181 = arith.subf %162, %180 : vector<1x512xf32>
    %182 = vector.broadcast %181 : vector<1x512xf32> to vector<8x512xf32>
    %183 = arith.addf %179, %182 : vector<8x512xf32>
    %cst_68 = arith.constant 0.000000e+00 : f32
    %184 = vector.broadcast %cst_68 : f32 to vector<8x512xf32>
    %185 = arith.maximumf %183, %184 : vector<8x512xf32>
    %c512 = arith.constant 512 : index
    %c0_69 = arith.constant 0 : index
    %186 = vector.load %arg4[%c512, %c0_69] : memref<1024x256xbf16, #tpu.memory_space<vmem>>, vector<512x256xbf16>
    %187 = arith.truncf %185 : vector<8x512xf32> to vector<8x512xbf16>
    %cst_70 = arith.constant dense<0.000000e+00> : vector<8x256xf32>
    %188 = tpu.matmul %187, %186, %cst_70 {dimension_numbers = #tpu.dot_dimension_numbers<[1], [0], [0], [1], [0, 0, 1, 1], [], []>} : vector<8x512xbf16>, vector<512x256xbf16>, vector<8x256xf32> -> vector<8x256xf32>
    %c22 = arith.constant 22 : index
    %c0_71 = arith.constant 0 : index
    %189 = vector.load %arg3[%c22, %c0_71] : memref<32x512xf32, #tpu.memory_space<vmem>>, vector<1x256xf32>
    %c23 = arith.constant 23 : index
    %c0_72 = arith.constant 0 : index
    %190 = vector.load %arg3[%c23, %c0_72] : memref<32x512xf32, #tpu.memory_space<vmem>>, vector<1x256xf32>
    %cst_73 = arith.constant dense<0.000000e+00> : vector<256xf32>
    %191 = vector.multi_reduction <add>, %188, %cst_73 [0] : vector<8x256xf32> to vector<256xf32>
    %192 = vector.shape_cast %191 : vector<256xf32> to vector<1x256xf32>
    %cst_74 = arith.constant 8.000000e+00 : f32
    %193 = vector.broadcast %cst_74 : f32 to vector<1x256xf32>
    %194 = arith.divf %192, %193 : vector<1x256xf32>
    %195 = arith.mulf %188, %188 : vector<8x256xf32>
    %cst_75 = arith.constant dense<0.000000e+00> : vector<256xf32>
    %196 = vector.multi_reduction <add>, %195, %cst_75 [0] : vector<8x256xf32> to vector<256xf32>
    %197 = vector.shape_cast %196 : vector<256xf32> to vector<1x256xf32>
    %cst_76 = arith.constant 8.000000e+00 : f32
    %198 = vector.broadcast %cst_76 : f32 to vector<1x256xf32>
    %199 = arith.divf %197, %198 : vector<1x256xf32>
    %200 = arith.mulf %194, %194 : vector<1x256xf32>
    %201 = arith.subf %199, %200 : vector<1x256xf32>
    %cst_77 = arith.constant 9.99999974E-6 : f32
    %202 = vector.broadcast %cst_77 : f32 to vector<1x256xf32>
    %203 = arith.addf %201, %202 : vector<1x256xf32>
    %204 = math.rsqrt %203 : vector<1x256xf32>
    %205 = arith.mulf %189, %204 : vector<1x256xf32>
    %206 = vector.broadcast %205 : vector<1x256xf32> to vector<8x256xf32>
    %207 = arith.mulf %188, %206 : vector<8x256xf32>
    %208 = arith.mulf %194, %205 : vector<1x256xf32>
    %209 = arith.subf %190, %208 : vector<1x256xf32>
    %210 = vector.broadcast %209 : vector<1x256xf32> to vector<8x256xf32>
    %211 = arith.addf %207, %210 : vector<8x256xf32>
    %212 = arith.addf %211, %155 : vector<8x256xf32>
    %cst_78 = arith.constant 0.000000e+00 : f32
    %213 = vector.broadcast %cst_78 : f32 to vector<8x256xf32>
    %214 = arith.maximumf %212, %213 : vector<8x256xf32>
    %c0_79 = arith.constant 0 : index
    %c0_80 = arith.constant 0 : index
    %215 = vector.load %arg6[%c0_79, %c0_80] : memref<257x8xf32, #tpu.memory_space<vmem>>, vector<256x8xf32>
    %cst_81 = arith.constant dense<0.000000e+00> : vector<8x8xf32>
    %216 = tpu.matmul %214, %215, %cst_81 {dimension_numbers = #tpu.dot_dimension_numbers<[1], [0], [0], [1], [0, 0, 1, 1], [], []>} : vector<8x256xf32>, vector<256x8xf32>, vector<8x8xf32> -> vector<8x8xf32>
    %c256_82 = arith.constant 256 : index
    %c0_83 = arith.constant 0 : index
    %217 = vector.load %arg6[%c256_82, %c0_83] : memref<257x8xf32, #tpu.memory_space<vmem>>, vector<1x8xf32>
    %218 = vector.broadcast %217 : vector<1x8xf32> to vector<8x8xf32>
    %219 = arith.addf %216, %218 : vector<8x8xf32>
    %c0_84 = arith.constant 0 : index
    %c0_85 = arith.constant 0 : index
    %220 = vector.load %arg7[%c0_84, %c0_85] : memref<8x8xf32, #tpu.memory_space<vmem>>, vector<8x8xf32>
    tpu.vector_store %arg7[%c0_84, %c0_85], %219 {strides = array<i32>} : memref<8x8xf32, #tpu.memory_space<vmem>>, vector<8x8xf32>,
    return
  }
}

</mosaic_0001>

<llo_original>
// kernel: residual_net2_forward.1
$region0: #{residual_net2_forward.1}
  #allocation0 [shape = 'u32[]', space=smem, size = 0x4, offset = 0x4, fixed_abs, tag = 'smem constant byte address 0x4 - core index']
  #allocation1 [shape = 'u32[144,128]{1,0:T(1,128)}', space=vmem, size = 0x12000, scoped, tag = 'internal scratch']
  %s0 = inlined_call_operand.vmem [shape: f32[8,8], index: 0, kind: input, shape index: {}]
  %s1 = inlined_call_operand.vmem [shape: f32[8,1], index: 1, kind: input, shape index: {}]
  %s2 = inlined_call_operand.vmem [shape: f32[8,4], index: 2, kind: input, shape index: {}]
  %s3 = inlined_call_operand.vmem [shape: f32[32,512], index: 3, kind: input, shape index: {}]
  %s4 = inlined_call_operand.hbm [shape: bf16[1024,256], index: 4, kind: input, shape index: {}]
  %s5 = inlined_call_operand.hbm [shape: bf16[1024,512], index: 5, kind: input, shape index: {}]
  %s6 = inlined_call_operand.vmem [shape: f32[257,8], index: 6, kind: input, shape index: {}]
  %s7 = inlined_call_operand.hbm [shape: f32[8,8], index: 7, kind: output, shape index: {}]
  %s8 = sld [smem:[#allocation0]]
  $region46: #{residual_net2_forward.1} parent=0
    _
  %s10 = ssub.s32 1, %s8
  %s11 = scalar_select 0, %s10, %s8
  $region1: #{residual_net2_forward.1} parent=0
    #allocation2 [shape = 'u8[524288]{0}', space=vmem, size = 0x80000, scoped, tag = 'input window, operand 4, single buffered']
    #allocation3 [shape = 's32[1]{0}', space=sflag, size = 0x4, scoped, tag = 'scoped memory for residual_net2_forward.1']
    #allocation4 [shape = 's32[1]{0}', space=sflag, size = 0x4, scoped, tag = 'scoped memory for residual_net2_forward.1']
    #allocation5 [shape = 'u8[1048576]{0}', space=vmem, size = 0x100000, scoped, tag = 'input window, operand 5, single buffered']
    #allocation6 [shape = 's32[1]{0}', space=sflag, size = 0x4, scoped, tag = 'scoped memory for residual_net2_forward.1']
    #allocation7 [shape = 'u8[4096]{0}', space=vmem, size = 0x1000, scoped, tag = 'output window, operand 0, single buffered']
    %12 = vsyncpa [#allocation3], 0
    %13 = vsyncpa [#allocation6], 0
    %14 = vsyncpa [#allocation4], 0
    // Predicated region
    $region2: #{residual_net2_forward.1} parent=1 // pred_check
      _
    $region3: #{residual_net2_forward.1} parent=1 // pred_check_branch
      %16 = sbr.rel (0) target = $region5
    $region4: #{residual_net2_forward.1} parent=1 // pred_region
      _
    $region5: #{residual_net2_forward.1} parent=1 // pred_fallthru
      _
    // Predicated region
    $region6: #{residual_net2_forward.1} parent=1 // pred_check
      _
    $region7: #{residual_net2_forward.1} parent=1 // pred_check_branch
      %18 = sbr.rel (0) target = $region9
    $region8: #{residual_net2_forward.1} parent=1 // pred_region
      _
    $region9: #{residual_net2_forward.1} parent=1 // pred_fallthru
      _
    // Predicated region
    $region10: #{residual_net2_forward.1} parent=1 // pred_check
      _
    $region11: #{residual_net2_forward.1} parent=1 // pred_check_branch
      %20 = sbr.rel (0) target = $region13
    $region12: #{residual_net2_forward.1} parent=1 // pred_region
      _
    $region13: #{residual_net2_forward.1} parent=1 // pred_fallthru
      _
    // Predicated region
    $region14: #{residual_net2_forward.1} parent=1 // pred_check
      _
    $region15: #{residual_net2_forward.1} parent=1 // pred_check_branch
      %22 = sbr.rel (0) target = $region17
    $region16: #{residual_net2_forward.1} parent=1 // pred_region
      _
    $region17: #{residual_net2_forward.1} parent=1 // pred_fallthru
      _
    // Predicated region
    $region18: #{residual_net2_forward.1} parent=1 // pred_check
      _
    $region19: #{residual_net2_forward.1} parent=1 // pred_check_branch
      %24 = sbr.rel (0) target = $region21
    $region20: #{residual_net2_forward.1} parent=1 // pred_region
      %s26 = ssub.s32 16384, 16384
      %27 = vsyncadd [#allocation3], %s26
      %s28 = sshll.u32 [#allocation2], 4
      %s29 = int_to_ptr.vmem [resolvable:$true] %s28
      %34 = dma.hbm_to_vmem [thread:$0]  %s4, 16384, %s29, [#allocation3], 128, 128, 8
    $region21: #{residual_net2_forward.1} parent=1 // pred_fallthru
      _
    // Predicated region
    $region22: #{residual_net2_forward.1} parent=1 // pred_check
      _
    $region23: #{residual_net2_forward.1} parent=1 // pred_check_branch
      %36 = sbr.rel (0) target = $region25
    $region24: #{residual_net2_forward.1} parent=1 // pred_region
      %s38 = ssub.s32 32768, 32768
      %39 = vsyncadd [#allocation6], %s38
      %s40 = sshll.u32 [#allocation5], 4
      %s41 = int_to_ptr.vmem [resolvable:$true] %s40
      %46 = dma.hbm_to_vmem [thread:$0]  %s5, 32768, %s41, [#allocation6], 256, 256, 16
    $region25: #{residual_net2_forward.1} parent=1 // pred_fallthru
      _
    // Predicated region
    $region26: #{residual_net2_forward.1} parent=1 // pred_check
      _
    $region27: #{residual_net2_forward.1} parent=1 // pred_check_branch
      %48 = sbr.rel (0) target = $region29
    $region28: #{residual_net2_forward.1} parent=1 // pred_region
      _
    $region29: #{residual_net2_forward.1} parent=1 // pred_fallthru
      _
    // Predicated region
    $region30: #{residual_net2_forward.1} parent=1 // pred_check
      _
    $region31: #{residual_net2_forward.1} parent=1 // pred_check_branch
      %50 = sbr.rel (0) target = $region33
    $region32: #{residual_net2_forward.1} parent=1 // pred_region
      %51 = dma.done [#allocation3], 16384
    $region33: #{residual_net2_forward.1} parent=1 // pred_fallthru
      _
    // Predicated region
    $region34: #{residual_net2_forward.1} parent=1 // pred_check
      _
    $region35: #{residual_net2_forward.1} parent=1 // pred_check_branch
      %53 = sbr.rel (0) target = $region37
    $region36: #{residual_net2_forward.1} parent=1 // pred_region
      %54 = dma.done [#allocation6], 32768
    $region37: #{residual_net2_forward.1} parent=1 // pred_fallthru
      _
    %v55 = vld [vmem:[%s0] sm:$0xff]
    %v56 = vld [vmem:[%s1] sm:$0xff]
    %v57 = vld [vmem:[%s2] sm:$0xff]
    %v58 = vmul.f32 %v56, %v56
    %v59 = vmul.f32 %v58, %v56
    %v60 = vld [vmem:[%s3] sm:$0xff]
    %v61 = vld [vmem:[%s3 + $0x8] sm:$0xff]
    %s62 = scalar_lea.vmem %s3, 36
    %v63 = vld [vmem:[%s62] ss:$8 sm:$0x3]
    %65 = vset.pattern.permute.xlu0 0
    %66 = vperm.xlu0 %65, %v56
    %v67 = vpop.permute.xlu0 %66
    %v70 = vlaneseq
    %v71 = vshrl.u32 %v70, 7
    %v72 = vsub.s32 0, %v71
    %v73 = vrot.slane %v63, %v72
    %v74 = vlaneseq
    %v75 = vshrl.u32 %v74, 7
    %v76 = vsub.s32 1, %v75
    %v77 = vrot.slane %v63, %v76
    %v80 = vmul.f32 %v67, %v73
    %v81 = vmul.f32 %v67, %v77
    %vm82 = vcmask 64512
    %v84 = vsel %vm82, %v55, 0
    %86 = vmatprep.subr.mxu0 %v61
    %87 = vmatpush1.msra.mxu0 %v60
    %88 = vmatprep.subr.mxu0 0.0
    %89 = vmatpush1.msra.mxu0 0.0
    %90 = vmatprep.subr.mxu0 0.0
    %91 = vmatpush1.msra.mxu0 0.0
    %92 = vmatprep.subr.mxu0 0.0
    %93 = vmatpush1.msra.mxu0 0.0
    %94 = vmatprep.subr.mxu0 0.0
    %95 = vmatpush1.msra.mxu0 0.0
    %96 = vmatprep.subr.mxu0 0.0
    %97 = vmatpush1.msra.mxu0 0.0
    %98 = vmatprep.subr.mxu0 0.0
    %99 = vmatpush1.msra.mxu0 0.0
    %100 = vmatprep.subr.mxu0 0.0
    %101 = vmatpush1.msra.mxu0 0.0
    %102 = vmatprep.subr.mxu0 0.0
    %103 = vmatpush1.msra.mxu0 0.0
    %104 = vmatprep.subr.mxu0 0.0
    %105 = vmatpush1.msra.mxu0 0.0
    %106 = vmatprep.subr.mxu0 0.0
    %107 = vmatpush1.msra.mxu0 0.0
    %108 = vmatprep.subr.mxu0 0.0
    %109 = vmatpush1.msra.mxu0 0.0
    %110 = vmatprep.subr.mxu0 0.0
    %111 = vmatpush1.msra.mxu0 0.0
    %112 = vmatprep.subr.mxu0 0.0
    %113 = vmatpush1.msra.mxu0 0.0
    %114 = vmatprep.subr.mxu0 0.0
    %115 = vmatpush1.msra.mxu0 0.0
    %116 = vmatprep.subr.mxu0 0.0
    %117 = vmatpush1.msra.mxu0 0.0
    %118 = vmatprep.subr.mxu0 0.0
    %119 = vmatpush1.msra.mxu0 0.0
    %120 = vmatprep.subr.mxu0 0.0
    %121 = vmatpush1.msra.mxu0 0.0
    %122 = vmatprep.subr.mxu0 0.0
    %123 = vmatpush1.msra.mxu0 0.0
    %124 = vmatprep.subr.mxu0 0.0
    %125 = vmatpush1.msra.mxu0 0.0
    %126 = vmatprep.subr.mxu0 0.0
    %127 = vmatpush1.msra.mxu0 0.0
    %128 = vmatprep.subr.mxu0 0.0
    %129 = vmatpush1.msra.mxu0 0.0
    %130 = vmatprep.subr.mxu0 0.0
    %131 = vmatpush1.msra.mxu0 0.0
    %132 = vmatprep.subr.mxu0 0.0
    %133 = vmatpush1.msra.mxu0 0.0
    %134 = vmatprep.subr.mxu0 0.0
    %135 = vmatpush1.msra.mxu0 0.0
    %136 = vmatprep.subr.mxu0 0.0
    %137 = vmatpush1.msra.mxu0 0.0
    %138 = vmatprep.subr.mxu0 0.0
    %139 = vmatpush1.msra.mxu0 0.0
    %140 = vmatprep.subr.mxu0 0.0
    %141 = vmatpush1.msra.mxu0 0.0
    %142 = vmatprep.subr.mxu0 0.0
    %143 = vmatpush1.msra.mxu0 0.0
    %144 = vmatprep.subr.mxu0 0.0
    %145 = vmatpush1.msra.mxu0 0.0
    %146 = vmatprep.subr.mxu0 0.0
    %147 = vmatpush1.msra.mxu0 0.0
    %148 = vmatprep.subr.mxu0 0.0
    %149 = vmatpush1.msra.mxu0 0.0
    %150 = vmatprep.mubr.f32.mxu0 0.0
    %151 = vmatmul.mubr.f32.gmra.mrb[0].mxu0 %v84
    %v152 = vpop.f32.mrb[0].mxu0
    %v153 = vadd.f32 %v80, %v152
    %v154 = vpop.f32.mrb[0].mxu0
    %v155 = vadd.f32 %v81, %v154
    %156 = vdwg.mxu0
    %s157 = scalar_lea.vmem %s3, 37
    %v158 = vld [vmem:[%s157] ss:$8 sm:$0x3]
    %160 = vset.pattern.permute.xlu0 0
    %161 = vperm.xlu0 %160, %v58
    %v162 = vpop.permute.xlu0 %161
    %v165 = vlaneseq
    %v166 = vshrl.u32 %v165, 7
    %v167 = vsub.s32 0, %v166
    %v168 = vrot.slane %v158, %v167
    %v169 = vlaneseq
    %v170 = vshrl.u32 %v169, 7
    %v171 = vsub.s32 1, %v170
    %v172 = vrot.slane %v158, %v171
    %v175 = vmul.f32 %v162, %v168
    %v176 = vmul.f32 %v162, %v172
    %v177 = vadd.f32 %v153, %v175
    %v178 = vadd.f32 %v155, %v176
    %s179 = scalar_lea.vmem %s3, 38
    %v180 = vld [vmem:[%s179] ss:$8 sm:$0x3]
    %182 = vset.pattern.permute.xlu0 0
    %183 = vperm.xlu0 %182, %v59
    %v184 = vpop.permute.xlu0 %183
    %v187 = vlaneseq
    %v188 = vshrl.u32 %v187, 7
    %v189 = vsub.s32 0, %v188
    %v190 = vrot.slane %v180, %v189
    %v191 = vlaneseq
    %v192 = vshrl.u32 %v191, 7
    %v193 = vsub.s32 1, %v192
    %v194 = vrot.slane %v180, %v193
    %v197 = vmul.f32 %v184, %v190
    %v198 = vmul.f32 %v184, %v194
    %v199 = vadd.f32 %v177, %v197
    %v200 = vadd.f32 %v178, %v198
    %v201 = vld [vmem:[%s3 + $0x20] sm:$0xf]
    %v202 = vld [vmem:[%s3 + $0x28] sm:$0xf]
    %vm203 = vcmask 31744
    %v205 = vsel %vm203, %v57, 0
    %vm207 = vcmask 1043456
    %v209 = vsel %vm207, %v201, 0
    %v212 = vsel %vm207, %v202, 0
    %214 = vmatprep.subr.mxu0 %v212
    %215 = vmatpush1.msra.mxu0 %v209
    %216 = vmatprep.subr.mxu0 0.0
    %217 = vmatpush1.msra.mxu0 0.0
    %218 = vmatprep.subr.mxu0 0.0
    %219 = vmatpush1.msra.mxu0 0.0
    %220 = vmatprep.subr.mxu0 0.0
    %221 = vmatpush1.msra.mxu0 0.0
    %222 = vmatprep.subr.mxu0 0.0
    %223 = vmatpush1.msra.mxu0 0.0
    %224 = vmatprep.subr.mxu0 0.0
    %225 = vmatpush1.msra.mxu0 0.0
    %226 = vmatprep.subr.mxu0 0.0
    %227 = vmatpush1.msra.mxu0 0.0
    %228 = vmatprep.subr.mxu0 0.0
    %229 = vmatpush1.msra.mxu0 0.0
    %230 = vmatprep.subr.mxu0 0.0
    %231 = vmatpush1.msra.mxu0 0.0
    %232 = vmatprep.subr.mxu0 0.0
    %233 = vmatpush1.msra.mxu0 0.0
    %234 = vmatprep.subr.mxu0 0.0
    %235 = vmatpush1.msra.mxu0 0.0
    %236 = vmatprep.subr.mxu0 0.0
    %237 = vmatpush1.msra.mxu0 0.0
    %238 = vmatprep.subr.mxu0 0.0
    %239 = vmatpush1.msra.mxu0 0.0
    %240 = vmatprep.subr.mxu0 0.0
    %241 = vmatpush1.msra.mxu0 0.0
    %242 = vmatprep.subr.mxu0 0.0
    %243 = vmatpush1.msra.mxu0 0.0
    %244 = vmatprep.subr.mxu0 0.0
    %245 = vmatpush1.msra.mxu0 0.0
    %246 = vmatprep.subr.mxu0 0.0
    %247 = vmatpush1.msra.mxu0 0.0
    %248 = vmatprep.subr.mxu0 0.0
    %249 = vmatpush1.msra.mxu0 0.0
    %250 = vmatprep.subr.mxu0 0.0
    %251 = vmatpush1.msra.mxu0 0.0
    %252 = vmatprep.subr.mxu0 0.0
    %253 = vmatpush1.msra.mxu0 0.0
    %254 = vmatprep.subr.mxu0 0.0
    %255 = vmatpush1.msra.mxu0 0.0
    %256 = vmatprep.subr.mxu0 0.0
    %257 = vmatpush1.msra.mxu0 0.0
    %258 = vmatprep.subr.mxu0 0.0
    %259 = vmatpush1.msra.mxu0 0.0
    %260 = vmatprep.subr.mxu0 0.0
    %261 = vmatpush1.msra.mxu0 0.0
    %262 = vmatprep.subr.mxu0 0.0
    %263 = vmatpush1.msra.mxu0 0.0
    %264 = vmatprep.subr.mxu0 0.0
    %265 = vmatpush1.msra.mxu0 0.0
    %266 = vmatprep.subr.mxu0 0.0
    %267 = vmatpush1.msra.mxu0 0.0
    %268 = vmatprep.subr.mxu0 0.0
    %269 = vmatpush1.msra.mxu0 0.0
    %270 = vmatprep.subr.mxu0 0.0
    %271 = vmatpush1.msra.mxu0 0.0
    %272 = vmatprep.subr.mxu0 0.0
    %273 = vmatpush1.msra.mxu0 0.0
    %274 = vmatprep.subr.mxu0 0.0
    %275 = vmatpush1.msra.mxu0 0.0
    %276 = vmatprep.subr.mxu0 0.0
    %277 = vmatpush1.msra.mxu0 0.0
    %278 = vmatprep.mubr.f32.mxu0 0.0
    %279 = vmatmul.mubr.f32.gmra.mrb[0].mxu0 %v205
    %v280 = vpop.f32.mrb[0].mxu0
    %v281 = vadd.f32 0.0, %v280
    %v282 = vpop.f32.mrb[0].mxu0
    %v283 = vadd.f32 0.0, %v282
    %284 = vdwg.mxu0
    %s285 = scalar_lea.vmem %s3, 64
    %v286 = vld [vmem:[%s285] ss:$8 sm:$0x3]
    %s287 = scalar_lea.vmem %s3, 65
    %v288 = vld [vmem:[%s287] ss:$8 sm:$0x3]
    %v289 = vrot.slane %v199, 4
    %v290 = vadd.f32 %v199, %v289
    %v291 = vrot.slane %v290, 2
    %v292 = vadd.f32 %v290, %v291
    %v293 = vrot.slane %v292, 1
    %v294 = vadd.f32 %v292, %v293
    %v295 = vrot.slane %v200, 4
    %v296 = vadd.f32 %v200, %v295
    %v297 = vrot.slane %v296, 2
    %v298 = vadd.f32 %v296, %v297
    %v299 = vrot.slane %v298, 1
    %v300 = vadd.f32 %v298, %v299
    %v301 = vrcp.pop 8.0
    %v302 = vmul.f32 %v294, %v301
    %v303 = vmul.f32 %v300, %v301
    %v304 = vmul.f32 %v199, %v199
    %v305 = vmul.f32 %v200, %v200
    %v306 = vrot.slane %v304, 4
    %v307 = vadd.f32 %v304, %v306
    %v308 = vrot.slane %v307, 2
    %v309 = vadd.f32 %v307, %v308
    %v310 = vrot.slane %v309, 1
    %v311 = vadd.f32 %v309, %v310
    %v312 = vrot.slane %v305, 4
    %v313 = vadd.f32 %v305, %v312
    %v314 = vrot.slane %v313, 2
    %v315 = vadd.f32 %v313, %v314
    %v316 = vrot.slane %v315, 1
    %v317 = vadd.f32 %v315, %v316
    %v318 = vmul.f32 %v311, %v301
    %v319 = vmul.f32 %v317, %v301
    %v320 = vmul.f32 %v302, %v302
    %v321 = vmul.f32 %v303, %v303
    %v322 = vsub.f32 %v318, %v320
    %v323 = vsub.f32 %v319, %v321
    %v324 = vadd.f32 %v322, 1e-05
    %v325 = vadd.f32 %v323, 1e-05
    %v326 = vrsqrt.pop %v324
    %v327 = vrsqrt.pop %v325
    %v330 = vcombine.low %v326, %v327
    %v332 = vunpack.c.l.s4 1966171168
    %v333 = vunpack.c.0.s8 %v332
    %v334 = vlaneseq
    %v335 = vshrl.u32 %v334, 7
    %v336 = vsub.s32 %v333, %v335
    %v337 = vrot.slane %v330, %v336
    %v339 = vunpack.c.l.s4 1966171168
    %v340 = vunpack.c.0.s8 %v339
    %v341 = vlaneseq
    %v342 = vshrl.u32 %v341, 7
    %v343 = vsub.s32 %v340, %v342
    %v344 = vrot.slane %v337, %v343
    %v346 = vmul.f32 %v286, %v344
    %v348 = vlaneseq
    %v349 = vshrl.u32 %v348, 7
    %v350 = vsub.s32 0, %v349
    %v351 = vrot.slane %v346, %v350
    %v352 = vlaneseq
    %v353 = vshrl.u32 %v352, 7
    %v354 = vsub.s32 1, %v353
    %v355 = vrot.slane %v346, %v354
    %v358 = vmul.f32 %v199, %v351
    %v359 = vmul.f32 %v200, %v355
    %v360 = vmul.f32 %v302, %v351
    %v361 = vmul.f32 %v303, %v355
    %v364 = vcombine.low %v360, %v361
    %v366 = vunpack.c.l.s4 1966171168
    %v367 = vunpack.c.0.s8 %v366
    %v368 = vlaneseq
    %v369 = vshrl.u32 %v368, 7
    %v370 = vsub.s32 %v367, %v369
    %v371 = vrot.slane %v364, %v370
    %v373 = vunpack.c.l.s4 1966171168
    %v374 = vunpack.c.0.s8 %v373
    %v375 = vlaneseq
    %v376 = vshrl.u32 %v375, 7
    %v377 = vsub.s32 %v374, %v376
    %v378 = vrot.slane %v371, %v377
    %v380 = vsub.f32 %v288, %v378
    %v382 = vlaneseq
    %v383 = vshrl.u32 %v382, 7
    %v384 = vsub.s32 0, %v383
    %v385 = vrot.slane %v380, %v384
    %v386 = vlaneseq
    %v387 = vshrl.u32 %v386, 7
    %v388 = vsub.s32 1, %v387
    %v389 = vrot.slane %v380, %v388
    %v392 = vadd.f32 %v358, %v385
    %v393 = vadd.f32 %v359, %v389
    %s394 = scalar_lea.vmem %s3, 66
    %v395 = vld [vmem:[%s394] ss:$8 sm:$0x3]
    %s396 = scalar_lea.vmem %s3, 67
    %v397 = vld [vmem:[%s396] ss:$8 sm:$0x3]
    %v398 = vrot.slane %v281, 4
    %v399 = vadd.f32 %v281, %v398
    %v400 = vrot.slane %v399, 2
    %v401 = vadd.f32 %v399, %v400
    %v402 = vrot.slane %v401, 1
    %v403 = vadd.f32 %v401, %v402
    %v404 = vrot.slane %v283, 4
    %v405 = vadd.f32 %v283, %v404
    %v406 = vrot.slane %v405, 2
    %v407 = vadd.f32 %v405, %v406
    %v408 = vrot.slane %v407, 1
    %v409 = vadd.f32 %v407, %v408
    %v410 = vmul.f32 %v403, %v301
    %v411 = vmul.f32 %v409, %v301
    %v412 = vmul.f32 %v281, %v281
    %v413 = vmul.f32 %v283, %v283
    %v414 = vrot.slane %v412, 4
    %v415 = vadd.f32 %v412, %v414
    %v416 = vrot.slane %v415, 2
    %v417 = vadd.f32 %v415, %v416
    %v418 = vrot.slane %v417, 1
    %v419 = vadd.f32 %v417, %v418
    %v420 = vrot.slane %v413, 4
    %v421 = vadd.f32 %v413, %v420
    %v422 = vrot.slane %v421, 2
    %v423 = vadd.f32 %v421, %v422
    %v424 = vrot.slane %v423, 1
    %v425 = vadd.f32 %v423, %v424
    %v426 = vmul.f32 %v419, %v301
    %v427 = vmul.f32 %v425, %v301
    %v428 = vmul.f32 %v410, %v410
    %v429 = vmul.f32 %v411, %v411
    %v430 = vsub.f32 %v426, %v428
    %v431 = vsub.f32 %v427, %v429
    %v432 = vadd.f32 %v430, 1e-05
    %v433 = vadd.f32 %v431, 1e-05
    %v434 = vrsqrt.pop %v432
    %v435 = vrsqrt.pop %v433
    %v438 = vcombine.low %v434, %v435
    %v440 = vunpack.c.l.s4 1966171168
    %v441 = vunpack.c.0.s8 %v440
    %v442 = vlaneseq
    %v443 = vshrl.u32 %v442, 7
    %v444 = vsub.s32 %v441, %v443
    %v445 = vrot.slane %v438, %v444
    %v447 = vunpack.c.l.s4 1966171168
    %v448 = vunpack.c.0.s8 %v447
    %v449 = vlaneseq
    %v450 = vshrl.u32 %v449, 7
    %v451 = vsub.s32 %v448, %v450
    %v452 = vrot.slane %v445, %v451
    %v454 = vmul.f32 %v395, %v452
    %v456 = vlaneseq
    %v457 = vshrl.u32 %v456, 7
    %v458 = vsub.s32 0, %v457
    %v459 = vrot.slane %v454, %v458
    %v460 = vlaneseq
    %v461 = vshrl.u32 %v460, 7
    %v462 = vsub.s32 1, %v461
    %v463 = vrot.slane %v454, %v462
    %v466 = vmul.f32 %v281, %v459
    %v467 = vmul.f32 %v283, %v463
    %v468 = vmul.f32 %v410, %v459
    %v469 = vmul.f32 %v411, %v463
    %v472 = vcombine.low %v468, %v469
    %v474 = vunpack.c.l.s4 1966171168
    %v475 = vunpack.c.0.s8 %v474
    %v476 = vlaneseq
    %v477 = vshrl.u32 %v476, 7
    %v478 = vsub.s32 %v475, %v477
    %v479 = vrot.slane %v472, %v478
    %v481 = vunpack.c.l.s4 1966171168
    %v482 = vunpack.c.0.s8 %v481
    %v483 = vlaneseq
    %v484 = vshrl.u32 %v483, 7
    %v485 = vsub.s32 %v482, %v484
    %v486 = vrot.slane %v479, %v485
    %v488 = vsub.f32 %v397, %v486
    %v490 = vlaneseq
    %v491 = vshrl.u32 %v490, 7
    %v492 = vsub.s32 0, %v491
    %v493 = vrot.slane %v488, %v492
    %v494 = vlaneseq
    %v495 = vshrl.u32 %v494, 7
    %v496 = vsub.s32 1, %v495
    %v497 = vrot.slane %v488, %v496
    %v500 = vadd.f32 %v466, %v493
    %v501 = vadd.f32 %v467, %v497
    %v502 = vadd.f32 %v392, %v500
    %v503 = vadd.f32 %v393, %v501
    %v504 = vmax.f32 %v502, 0.0
    %v505 = vmax.f32 %v503, 0.0
    %v506 = vld [vmem:[#allocation5] sm:$0xff]
    %v507 = vld [vmem:[#allocation5 + $0x8] sm:$0xff]
    %v508 = vld [vmem:[#allocation5 + $0x10] sm:$0xff]
    %v509 = vld [vmem:[#allocation5 + $0x18] sm:$0xff]
    %v510 = vld [vmem:[#allocation5 + $0x20] sm:$0xff]
    %v511 = vld [vmem:[#allocation5 + $0x28] sm:$0xff]
    %v512 = vld [vmem:[#allocation5 + $0x30] sm:$0xff]
    %v513 = vld [vmem:[#allocation5 + $0x38] sm:$0xff]
    %v514 = vld [vmem:[#allocation5 + $0x40] sm:$0xff]
    %v515 = vld [vmem:[#allocation5 + $0x48] sm:$0xff]
    %v516 = vld [vmem:[#allocation5 + $0x50] sm:$0xff]
    %v517 = vld [vmem:[#allocation5 + $0x58] sm:$0xff]
    %v518 = vld [vmem:[#allocation5 + $0x60] sm:$0xff]
    %v519 = vld [vmem:[#allocation5 + $0x68] sm:$0xff]
    %v520 = vld [vmem:[#allocation5 + $0x70] sm:$0xff]
    %v521 = vld [vmem:[#allocation5 + $0x78] sm:$0xff]
    %v522 = vld [vmem:[#allocation5 + $0x80] sm:$0xff]
    %v523 = vld [vmem:[#allocation5 + $0x88] sm:$0xff]
    %v524 = vld [vmem:[#allocation5 + $0x90] sm:$0xff]
    %v525 = vld [vmem:[#allocation5 + $0x98] sm:$0xff]
    %v526 = vld [vmem:[#allocation5 + $0xa0] sm:$0xff]
    %v527 = vld [vmem:[#allocation5 + $0xa8] sm:$0xff]
    %v528 = vld [vmem:[#allocation5 + $0xb0] sm:$0xff]
    %v529 = vld [vmem:[#allocation5 + $0xb8] sm:$0xff]
    %v530 = vld [vmem:[#allocation5 + $0xc0] sm:$0xff]
    %v531 = vld [vmem:[#allocation5 + $0xc8] sm:$0xff]
    %v532 = vld [vmem:[#allocation5 + $0xd0] sm:$0xff]
    %v533 = vld [vmem:[#allocation5 + $0xd8] sm:$0xff]
    %v534 = vld [vmem:[#allocation5 + $0xe0] sm:$0xff]
    %v535 = vld [vmem:[#allocation5 + $0xe8] sm:$0xff]
    %v536 = vld [vmem:[#allocation5 + $0xf0] sm:$0xff]
    %v537 = vld [vmem:[#allocation5 + $0xf8] sm:$0xff]
    %v538 = vld [vmem:[#allocation5 + $0x100] sm:$0xff]
    %v539 = vld [vmem:[#allocation5 + $0x108] sm:$0xff]
    %v540 = vld [vmem:[#allocation5 + $0x110] sm:$0xff]
    %v541 = vld [vmem:[#allocation5 + $0x118] sm:$0xff]
    %v542 = vld [vmem:[#allocation5 + $0x120] sm:$0xff]
    %v543 = vld [vmem:[#allocation5 + $0x128] sm:$0xff]
    %v544 = vld [vmem:[#allocation5 + $0x130] sm:$0xff]
    %v545 = vld [vmem:[#allocation5 + $0x138] sm:$0xff]
    %v546 = vld [vmem:[#allocation5 + $0x140] sm:$0xff]
    %v547 = vld [vmem:[#allocation5 + $0x148] sm:$0xff]
    %v548 = vld [vmem:[#allocation5 + $0x150] sm:$0xff]
    %v549 = vld [vmem:[#allocation5 + $0x158] sm:$0xff]
    %v550 = vld [vmem:[#allocation5 + $0x160] sm:$0xff]
    %v551 = vld [vmem:[#allocation5 + $0x168] sm:$0xff]
    %v552 = vld [vmem:[#allocation5 + $0x170] sm:$0xff]
    %v553 = vld [vmem:[#allocation5 + $0x178] sm:$0xff]
    %v554 = vld [vmem:[#allocation5 + $0x180] sm:$0xff]
    %v555 = vld [vmem:[#allocation5 + $0x188] sm:$0xff]
    %v556 = vld [vmem:[#allocation5 + $0x190] sm:$0xff]
    %v557 = vld [vmem:[#allocation5 + $0x198] sm:$0xff]
    %v558 = vld [vmem:[#allocation5 + $0x1a0] sm:$0xff]
    %v559 = vld [vmem:[#allocation5 + $0x1a8] sm:$0xff]
    %v560 = vld [vmem:[#allocation5 + $0x1b0] sm:$0xff]
    %v561 = vld [vmem:[#allocation5 + $0x1b8] sm:$0xff]
    %v562 = vld [vmem:[#allocation5 + $0x1c0] sm:$0xff]
    %v563 = vld [vmem:[#allocation5 + $0x1c8] sm:$0xff]
    %v564 = vld [vmem:[#allocation5 + $0x1d0] sm:$0xff]
    %v565 = vld [vmem:[#allocation5 + $0x1d8] sm:$0xff]
    %v566 = vld [vmem:[#allocation5 + $0x1e0] sm:$0xff]
    %v567 = vld [vmem:[#allocation5 + $0x1e8] sm:$0xff]
    %v568 = vld [vmem:[#allocation5 + $0x1f0] sm:$0xff]
    %v569 = vld [vmem:[#allocation5 + $0x1f8] sm:$0xff]
    %v570 = vpack.c.bf16 %v504, %v504
    %v571 = vpack.c.bf16 %v505, %v505
    %v636 = vunpack.c.l.b16 %v506
    %v637 = vunpack.c.h.b16 %v506
    %v638 = vunpack.c.l.b16 %v507
    %v639 = vunpack.c.h.b16 %v507
    %v640 = vunpack.c.l.b16 %v508
    %v641 = vunpack.c.h.b16 %v508
    %v642 = vunpack.c.l.b16 %v509
    %v643 = vunpack.c.h.b16 %v509
    %v644 = vunpack.c.l.b16 %v510
    %v645 = vunpack.c.h.b16 %v510
    %v646 = vunpack.c.l.b16 %v511
    %v647 = vunpack.c.h.b16 %v511
    %v648 = vunpack.c.l.b16 %v512
    %v649 = vunpack.c.h.b16 %v512
    %v650 = vunpack.c.l.b16 %v513
    %v651 = vunpack.c.h.b16 %v513
    %v652 = vunpack.c.l.b16 %v514
    %v653 = vunpack.c.h.b16 %v514
    %v654 = vunpack.c.l.b16 %v515
    %v655 = vunpack.c.h.b16 %v515
    %v656 = vunpack.c.l.b16 %v516
    %v657 = vunpack.c.h.b16 %v516
    %v658 = vunpack.c.l.b16 %v517
    %v659 = vunpack.c.h.b16 %v517
    %v660 = vunpack.c.l.b16 %v518
    %v661 = vunpack.c.h.b16 %v518
    %v662 = vunpack.c.l.b16 %v519
    %v663 = vunpack.c.h.b16 %v519
    %v664 = vunpack.c.l.b16 %v520
    %v665 = vunpack.c.h.b16 %v520
    %v666 = vunpack.c.l.b16 %v521
    %v667 = vunpack.c.h.b16 %v521
    %v668 = vunpack.c.l.b16 %v522
    %v669 = vunpack.c.h.b16 %v522
    %v670 = vunpack.c.l.b16 %v523
    %v671 = vunpack.c.h.b16 %v523
    %v672 = vunpack.c.l.b16 %v524
    %v673 = vunpack.c.h.b16 %v524
    %v674 = vunpack.c.l.b16 %v525
    %v675 = vunpack.c.h.b16 %v525
    %v676 = vunpack.c.l.b16 %v526
    %v677 = vunpack.c.h.b16 %v526
    %v678 = vunpack.c.l.b16 %v527
    %v679 = vunpack.c.h.b16 %v527
    %v680 = vunpack.c.l.b16 %v528
    %v681 = vunpack.c.h.b16 %v528
    %v682 = vunpack.c.l.b16 %v529
    %v683 = vunpack.c.h.b16 %v529
    %v684 = vunpack.c.l.b16 %v530
    %v685 = vunpack.c.h.b16 %v530
    %v686 = vunpack.c.l.b16 %v531
    %v687 = vunpack.c.h.b16 %v531
    %v688 = vunpack.c.l.b16 %v532
    %v689 = vunpack.c.h.b16 %v532
    %v690 = vunpack.c.l.b16 %v533
    %v691 = vunpack.c.h.b16 %v533
    %v692 = vunpack.c.l.b16 %v534
    %v693 = vunpack.c.h.b16 %v534
    %v694 = vunpack.c.l.b16 %v535
    %v695 = vunpack.c.h.b16 %v535
    %v696 = vunpack.c.l.b16 %v536
    %v697 = vunpack.c.h.b16 %v536
    %v698 = vunpack.c.l.b16 %v537
    %v699 = vunpack.c.h.b16 %v537
    %v700 = vunpack.c.l.b16 %v538
    %v701 = vunpack.c.h.b16 %v538
    %v702 = vunpack.c.l.b16 %v539
    %v703 = vunpack.c.h.b16 %v539
    %v704 = vunpack.c.l.b16 %v540
    %v705 = vunpack.c.h.b16 %v540
    %v706 = vunpack.c.l.b16 %v541
    %v707 = vunpack.c.h.b16 %v541
    %v708 = vunpack.c.l.b16 %v542
    %v709 = vunpack.c.h.b16 %v542
    %v710 = vunpack.c.l.b16 %v543
    %v711 = vunpack.c.h.b16 %v543
    %v712 = vunpack.c.l.b16 %v544
    %v713 = vunpack.c.h.b16 %v544
    %v714 = vunpack.c.l.b16 %v545
    %v715 = vunpack.c.h.b16 %v545
    %v716 = vunpack.c.l.b16 %v546
    %v717 = vunpack.c.h.b16 %v546
    %v718 = vunpack.c.l.b16 %v547
    %v719 = vunpack.c.h.b16 %v547
    %v720 = vunpack.c.l.b16 %v548
    %v721 = vunpack.c.h.b16 %v548
    %v722 = vunpack.c.l.b16 %v549
    %v723 = vunpack.c.h.b16 %v549
    %v724 = vunpack.c.l.b16 %v550
    %v725 = vunpack.c.h.b16 %v550
    %v726 = vunpack.c.l.b16 %v551
    %v727 = vunpack.c.h.b16 %v551
    %v728 = vunpack.c.l.b16 %v552
    %v729 = vunpack.c.h.b16 %v552
    %v730 = vunpack.c.l.b16 %v553
    %v731 = vunpack.c.h.b16 %v553
    %v732 = vunpack.c.l.b16 %v554
    %v733 = vunpack.c.h.b16 %v554
    %v734 = vunpack.c.l.b16 %v555
    %v735 = vunpack.c.h.b16 %v555
    %v736 = vunpack.c.l.b16 %v556
    %v737 = vunpack.c.h.b16 %v556
    %v738 = vunpack.c.l.b16 %v557
    %v739 = vunpack.c.h.b16 %v557
    %v740 = vunpack.c.l.b16 %v558
    %v741 = vunpack.c.h.b16 %v558
    %v742 = vunpack.c.l.b16 %v559
    %v743 = vunpack.c.h.b16 %v559
    %v744 = vunpack.c.l.b16 %v560
    %v745 = vunpack.c.h.b16 %v560
    %v746 = vunpack.c.l.b16 %v561
    %v747 = vunpack.c.h.b16 %v561
    %v748 = vunpack.c.l.b16 %v562
    %v749 = vunpack.c.h.b16 %v562
    %v750 = vunpack.c.l.b16 %v563
    %v751 = vunpack.c.h.b16 %v563
    %v752 = vunpack.c.l.b16 %v564
    %v753 = vunpack.c.h.b16 %v564
    %v754 = vunpack.c.l.b16 %v565
    %v755 = vunpack.c.h.b16 %v565
    %v756 = vunpack.c.l.b16 %v566
    %v757 = vunpack.c.h.b16 %v566
    %v758 = vunpack.c.l.b16 %v567
    %v759 = vunpack.c.h.b16 %v567
    %v760 = vunpack.c.l.b16 %v568
    %v761 = vunpack.c.h.b16 %v568
    %v762 = vunpack.c.l.b16 %v569
    %v763 = vunpack.c.h.b16 %v569
    %v764 = vpack.c.b16 %v640, %v636
    %v765 = vpack.c.b16 %v641, %v637
    %v766 = vpack.c.b16 %v642, %v638
    %v767 = vpack.c.b16 %v643, %v639
    %v768 = vpack.c.b16 %v648, %v644
    %v769 = vpack.c.b16 %v649, %v645
    %v770 = vpack.c.b16 %v650, %v646
    %v771 = vpack.c.b16 %v651, %v647
    %v772 = vpack.c.b16 %v656, %v652
    %v773 = vpack.c.b16 %v657, %v653
    %v774 = vpack.c.b16 %v658, %v654
    %v775 = vpack.c.b16 %v659, %v655
    %v776 = vpack.c.b16 %v664, %v660
    %v777 = vpack.c.b16 %v665, %v661
    %v778 = vpack.c.b16 %v666, %v662
    %v779 = vpack.c.b16 %v667, %v663
    %v780 = vpack.c.b16 %v672, %v668
    %v781 = vpack.c.b16 %v673, %v669
    %v782 = vpack.c.b16 %v674, %v670
    %v783 = vpack.c.b16 %v675, %v671
    %v784 = vpack.c.b16 %v680, %v676
    %v785 = vpack.c.b16 %v681, %v677
    %v786 = vpack.c.b16 %v682, %v678
    %v787 = vpack.c.b16 %v683, %v679
    %v788 = vpack.c.b16 %v688, %v684
    %v789 = vpack.c.b16 %v689, %v685
    %v790 = vpack.c.b16 %v690, %v686
    %v791 = vpack.c.b16 %v691, %v687
    %v792 = vpack.c.b16 %v696, %v692
    %v793 = vpack.c.b16 %v697, %v693
    %v794 = vpack.c.b16 %v698, %v694
    %v795 = vpack.c.b16 %v699, %v695
    %v796 = vpack.c.b16 %v704, %v700
    %v797 = vpack.c.b16 %v705, %v701
    %v798 = vpack.c.b16 %v706, %v702
    %v799 = vpack.c.b16 %v707, %v703
    %v800 = vpack.c.b16 %v712, %v708
    %v801 = vpack.c.b16 %v713, %v709
    %v802 = vpack.c.b16 %v714, %v710
    %v803 = vpack.c.b16 %v715, %v711
    %v804 = vpack.c.b16 %v720, %v716
    %v805 = vpack.c.b16 %v721, %v717
    %v806 = vpack.c.b16 %v722, %v718
    %v807 = vpack.c.b16 %v723, %v719
    %v808 = vpack.c.b16 %v728, %v724
    %v809 = vpack.c.b16 %v729, %v725
    %v810 = vpack.c.b16 %v730, %v726
    %v811 = vpack.c.b16 %v731, %v727
    %v812 = vpack.c.b16 %v736, %v732
    %v813 = vpack.c.b16 %v737, %v733
    %v814 = vpack.c.b16 %v738, %v734
    %v815 = vpack.c.b16 %v739, %v735
    %v816 = vpack.c.b16 %v744, %v740
    %v817 = vpack.c.b16 %v745, %v741
    %v818 = vpack.c.b16 %v746, %v742
    %v819 = vpack.c.b16 %v747, %v743
    %v820 = vpack.c.b16 %v752, %v748
    %v821 = vpack.c.b16 %v753, %v749
    %v822 = vpack.c.b16 %v754, %v750
    %v823 = vpack.c.b16 %v755, %v751
    %v824 = vpack.c.b16 %v760, %v756
    %v825 = vpack.c.b16 %v761, %v757
    %v826 = vpack.c.b16 %v762, %v758
    %v827 = vpack.c.b16 %v763, %v759
    %892 = vmatprep.subr.bf16.mxu0 %v765
    %893 = vmatpush1.bf16.msra.mxu0 %v764
    %894 = vmatprep.subr.bf16.mxu0 %v769
    %895 = vmatpush1.bf16.msra.mxu0 %v768
    %896 = vmatprep.subr.bf16.mxu0 %v773
    %897 = vmatpush1.bf16.msra.mxu0 %v772
    %898 = vmatprep.subr.bf16.mxu0 %v777
    %899 = vmatpush1.bf16.msra.mxu0 %v776
    %900 = vmatprep.subr.bf16.mxu0 %v781
    %901 = vmatpush1.bf16.msra.mxu0 %v780
    %902 = vmatprep.subr.bf16.mxu0 %v785
    %903 = vmatpush1.bf16.msra.mxu0 %v784
    %904 = vmatprep.subr.bf16.mxu0 %v789
    %905 = vmatpush1.bf16.msra.mxu0 %v788
    %906 = vmatprep.subr.bf16.mxu0 %v793
    %907 = vmatpush1.bf16.msra.mxu0 %v792
    %908 = vmatprep.subr.bf16.mxu0 %v797
    %909 = vmatpush1.bf16.msra.mxu0 %v796
    %910 = vmatprep.subr.bf16.mxu0 %v801
    %911 = vmatpush1.bf16.msra.mxu0 %v800
    %912 = vmatprep.subr.bf16.mxu0 %v805
    %913 = vmatpush1.bf16.msra.mxu0 %v804
    %914 = vmatprep.subr.bf16.mxu0 %v809
    %915 = vmatpush1.bf16.msra.mxu0 %v808
    %916 = vmatprep.subr.bf16.mxu0 %v813
    %917 = vmatpush1.bf16.msra.mxu0 %v812
    %918 = vmatprep.subr.bf16.mxu0 %v817
    %919 = vmatpush1.bf16.msra.mxu0 %v816
    %920 = vmatprep.subr.bf16.mxu0 %v821
    %921 = vmatpush1.bf16.msra.mxu0 %v820
    %922 = vmatprep.subr.bf16.mxu0 %v825
    %923 = vmatpush1.bf16.msra.mxu0 %v824
    %924 = vmatprep.mubr.bf16.mxu0 %v571
    %925 = vmatmul.mubr.bf16.gmra.mrb[0].mxu0 %v570
    %v926 = vpop.f32.mrb[0].mxu0
    %v927 = vadd.f32 0.0, %v926
    %v928 = vpop.f32.mrb[0].mxu0
    %v929 = vadd.f32 0.0, %v928
    %v930 = vpop.f32.mrb[0].mxu0
    %v931 = vpop.f32.mrb[0].mxu0
    %932 = vdwg.mxu0
    %933 = vmatprep.subr.bf16.mxu0 %v767
    %934 = vmatpush1.bf16.msra.mxu0 %v766
    %935 = vmatprep.subr.bf16.mxu0 %v771
    %936 = vmatpush1.bf16.msra.mxu0 %v770
    %937 = vmatprep.subr.bf16.mxu0 %v775
    %938 = vmatpush1.bf16.msra.mxu0 %v774
    %939 = vmatprep.subr.bf16.mxu0 %v779
    %940 = vmatpush1.bf16.msra.mxu0 %v778
    %941 = vmatprep.subr.bf16.mxu0 %v783
    %942 = vmatpush1.bf16.msra.mxu0 %v782
    %943 = vmatprep.subr.bf16.mxu0 %v787
    %944 = vmatpush1.bf16.msra.mxu0 %v786
    %945 = vmatprep.subr.bf16.mxu0 %v791
    %946 = vmatpush1.bf16.msra.mxu0 %v790
    %947 = vmatprep.subr.bf16.mxu0 %v795
    %948 = vmatpush1.bf16.msra.mxu0 %v794
    %949 = vmatprep.subr.bf16.mxu0 %v799
    %950 = vmatpush1.bf16.msra.mxu0 %v798
    %951 = vmatprep.subr.bf16.mxu0 %v803
    %952 = vmatpush1.bf16.msra.mxu0 %v802
    %953 = vmatprep.subr.bf16.mxu0 %v807
    %954 = vmatpush1.bf16.msra.mxu0 %v806
    %955 = vmatprep.subr.bf16.mxu0 %v811
    %956 = vmatpush1.bf16.msra.mxu0 %v810
    %957 = vmatprep.subr.bf16.mxu0 %v815
    %958 = vmatpush1.bf16.msra.mxu0 %v814
    %959 = vmatprep.subr.bf16.mxu0 %v819
    %960 = vmatpush1.bf16.msra.mxu0 %v818
    %961 = vmatprep.subr.bf16.mxu0 %v823
    %962 = vmatpush1.bf16.msra.mxu0 %v822
    %963 = vmatprep.subr.bf16.mxu0 %v827
    %964 = vmatpush1.bf16.msra.mxu0 %v826
    %965 = vmatprep.mubr.bf16.mxu0 %v571
    %966 = vmatmul.mubr.bf16.gmra.mrb[0].mxu0 %v570
    %v967 = vpop.f32.mrb[0].mxu0
    %v968 = vadd.f32 0.0, %v967
    %v969 = vpop.f32.mrb[0].mxu0
    %v970 = vadd.f32 0.0, %v969
    %v971 = vpop.f32.mrb[0].mxu0
    %v972 = vpop.f32.mrb[0].mxu0
    %973 = vdwg.mxu0
    %s974 = scalar_lea.vmem %s3, 96
    %v975 = vld [vmem:[%s974] ss:$8 sm:$0xf]
    %s976 = scalar_lea.vmem %s3, 97
    %v977 = vld [vmem:[%s976] ss:$8 sm:$0xf]
    %v978 = vrot.slane %v927, 4
    %v979 = vadd.f32 %v927, %v978
    %v980 = vrot.slane %v979, 2
    %v981 = vadd.f32 %v979, %v980
    %v982 = vrot.slane %v981, 1
    %v983 = vadd.f32 %v981, %v982
    %v984 = vrot.slane %v929, 4
    %v985 = vadd.f32 %v929, %v984
    %v986 = vrot.slane %v985, 2
    %v987 = vadd.f32 %v985, %v986
    %v988 = vrot.slane %v987, 1
    %v989 = vadd.f32 %v987, %v988
    %v990 = vrot.slane %v968, 4
    %v991 = vadd.f32 %v968, %v990
    %v992 = vrot.slane %v991, 2
    %v993 = vadd.f32 %v991, %v992
    %v994 = vrot.slane %v993, 1
    %v995 = vadd.f32 %v993, %v994
    %v996 = vrot.slane %v970, 4
    %v997 = vadd.f32 %v970, %v996
    %v998 = vrot.slane %v997, 2
    %v999 = vadd.f32 %v997, %v998
    %v1000 = vrot.slane %v999, 1
    %v1001 = vadd.f32 %v999, %v1000
    %v1002 = vmul.f32 %v983, %v301
    %v1003 = vmul.f32 %v989, %v301
    %v1004 = vmul.f32 %v995, %v301
    %v1005 = vmul.f32 %v1001, %v301
    %v1006 = vmul.f32 %v927, %v927
    %v1007 = vmul.f32 %v929, %v929
    %v1008 = vmul.f32 %v968, %v968
    %v1009 = vmul.f32 %v970, %v970
    %v1010 = vrot.slane %v1006, 4
    %v1011 = vadd.f32 %v1006, %v1010
    %v1012 = vrot.slane %v1011, 2
    %v1013 = vadd.f32 %v1011, %v1012
    %v1014 = vrot.slane %v1013, 1
    %v1015 = vadd.f32 %v1013, %v1014
    %v1016 = vrot.slane %v1007, 4
    %v1017 = vadd.f32 %v1007, %v1016
    %v1018 = vrot.slane %v1017, 2
    %v1019 = vadd.f32 %v1017, %v1018
    %v1020 = vrot.slane %v1019, 1
    %v1021 = vadd.f32 %v1019, %v1020
    %v1022 = vrot.slane %v1008, 4
    %v1023 = vadd.f32 %v1008, %v1022
    %v1024 = vrot.slane %v1023, 2
    %v1025 = vadd.f32 %v1023, %v1024
    %v1026 = vrot.slane %v1025, 1
    %v1027 = vadd.f32 %v1025, %v1026
    %v1028 = vrot.slane %v1009, 4
    %v1029 = vadd.f32 %v1009, %v1028
    %v1030 = vrot.slane %v1029, 2
    %v1031 = vadd.f32 %v1029, %v1030
    %v1032 = vrot.slane %v1031, 1
    %v1033 = vadd.f32 %v1031, %v1032
    %v1034 = vmul.f32 %v1015, %v301
    %v1035 = vmul.f32 %v1021, %v301
    %v1036 = vmul.f32 %v1027, %v301
    %v1037 = vmul.f32 %v1033, %v301
    %v1038 = vmul.f32 %v1002, %v1002
    %v1039 = vmul.f32 %v1003, %v1003
    %v1040 = vmul.f32 %v1004, %v1004
    %v1041 = vmul.f32 %v1005, %v1005
    %v1042 = vsub.f32 %v1034, %v1038
    %v1043 = vsub.f32 %v1035, %v1039
    %v1044 = vsub.f32 %v1036, %v1040
    %v1045 = vsub.f32 %v1037, %v1041
    %v1046 = vadd.f32 %v1042, 1e-05
    %v1047 = vadd.f32 %v1043, 1e-05
    %v1048 = vadd.f32 %v1044, 1e-05
    %v1049 = vadd.f32 %v1045, 1e-05
    %v1050 = vrsqrt.pop %v1046
    %v1051 = vrsqrt.pop %v1047
    %v1052 = vrsqrt.pop %v1048
    %v1053 = vrsqrt.pop %v1049
    %v1058 = vcombine.low %v1050, %v1051
    %v1059 = vcombine.low %v1052, %v1053
    %v1061 = vunpack.c.l.s4 1966171168
    %v1062 = vunpack.c.0.s8 %v1061
    %v1063 = vlaneseq
    %v1064 = vshrl.u32 %v1063, 7
    %v1065 = vsub.s32 %v1062, %v1064
    %v1066 = vrot.slane %v1058, %v1065
    %v1068 = vunpack.c.l.s4 1966171168
    %v1069 = vunpack.c.0.s8 %v1068
    %v1070 = vlaneseq
    %v1071 = vshrl.u32 %v1070, 7
    %v1072 = vsub.s32 %v1069, %v1071
    %v1073 = vrot.slane %v1059, %v1072
    %v1074 = vcombine.low %v1066, %v1073
    %v1076 = vunpack.c.l.s4 1966171168
    %v1077 = vunpack.c.0.s8 %v1076
    %v1078 = vlaneseq
    %v1079 = vshrl.u32 %v1078, 7
    %v1080 = vsub.s32 %v1077, %v1079
    %v1081 = vrot.slane %v1074, %v1080
    %v1083 = vmul.f32 %v975, %v1081
    %v1085 = vlaneseq
    %v1086 = vshrl.u32 %v1085, 7
    %v1087 = vsub.s32 0, %v1086
    %v1088 = vrot.slane %v1083, %v1087
    %v1089 = vlaneseq
    %v1090 = vshrl.u32 %v1089, 7
    %v1091 = vsub.s32 1, %v1090
    %v1092 = vrot.slane %v1083, %v1091
    %v1093 = vlaneseq
    %v1094 = vshrl.u32 %v1093, 7
    %v1095 = vsub.s32 2, %v1094
    %v1096 = vrot.slane %v1083, %v1095
    %v1097 = vlaneseq
    %v1098 = vshrl.u32 %v1097, 7
    %v1099 = vsub.s32 3, %v1098
    %v1100 = vrot.slane %v1083, %v1099
    %v1105 = vmul.f32 %v927, %v1088
    %v1106 = vmul.f32 %v929, %v1092
    %v1107 = vmul.f32 %v968, %v1096
    %v1108 = vmul.f32 %v970, %v1100
    %v1109 = vmul.f32 %v1002, %v1088
    %v1110 = vmul.f32 %v1003, %v1092
    %v1111 = vmul.f32 %v1004, %v1096
    %v1112 = vmul.f32 %v1005, %v1100
    %v1117 = vcombine.low %v1109, %v1110
    %v1118 = vcombine.low %v1111, %v1112
    %v1120 = vunpack.c.l.s4 1966171168
    %v1121 = vunpack.c.0.s8 %v1120
    %v1122 = vlaneseq
    %v1123 = vshrl.u32 %v1122, 7
    %v1124 = vsub.s32 %v1121, %v1123
    %v1125 = vrot.slane %v1117, %v1124
    %v1127 = vunpack.c.l.s4 1966171168
    %v1128 = vunpack.c.0.s8 %v1127
    %v1129 = vlaneseq
    %v1130 = vshrl.u32 %v1129, 7
    %v1131 = vsub.s32 %v1128, %v1130
    %v1132 = vrot.slane %v1118, %v1131
    %v1133 = vcombine.low %v1125, %v1132
    %v1135 = vunpack.c.l.s4 1966171168
    %v1136 = vunpack.c.0.s8 %v1135
    %v1137 = vlaneseq
    %v1138 = vshrl.u32 %v1137, 7
    %v1139 = vsub.s32 %v1136, %v1138
    %v1140 = vrot.slane %v1133, %v1139
    %v1142 = vsub.f32 %v977, %v1140
    %v1144 = vlaneseq
    %v1145 = vshrl.u32 %v1144, 7
    %v1146 = vsub.s32 0, %v1145
    %v1147 = vrot.slane %v1142, %v1146
    %v1148 = vlaneseq
    %v1149 = vshrl.u32 %v1148, 7
    %v1150 = vsub.s32 1, %v1149
    %v1151 = vrot.slane %v1142, %v1150
    %v1152 = vlaneseq
    %v1153 = vshrl.u32 %v1152, 7
    %v1154 = vsub.s32 2, %v1153
    %v1155 = vrot.slane %v1142, %v1154
    %v1156 = vlaneseq
    %v1157 = vshrl.u32 %v1156, 7
    %v1158 = vsub.s32 3, %v1157
    %v1159 = vrot.slane %v1142, %v1158
    %v1164 = vadd.f32 %v1105, %v1147
    %v1165 = vadd.f32 %v1106, %v1151
    %v1166 = vadd.f32 %v1107, %v1155
    %v1167 = vadd.f32 %v1108, %v1159
    %v1168 = vmax.f32 %v1164, 0.0
    %v1169 = vmax.f32 %v1165, 0.0
    %v1170 = vmax.f32 %v1166, 0.0
    %v1171 = vmax.f32 %v1167, 0.0
    %v1172 = vld [vmem:[#allocation5 + $0x200] sm:$0xff]
    %v1173 = vld [vmem:[#allocation5 + $0x208] sm:$0xff]
    %v1174 = vld [vmem:[#allocation5 + $0x210] sm:$0xff]
    %v1175 = vld [vmem:[#allocation5 + $0x218] sm:$0xff]
    %v1176 = vld [vmem:[#allocation5 + $0x220] sm:$0xff]
    %v1177 = vld [vmem:[#allocation5 + $0x228] sm:$0xff]
    %v1178 = vld [vmem:[#allocation5 + $0x230] sm:$0xff]
    %v1179 = vld [vmem:[#allocation5 + $0x238] sm:$0xff]
    %v1180 = vld [vmem:[#allocation5 + $0x240] sm:$0xff]
    %v1181 = vld [vmem:[#allocation5 + $0x248] sm:$0xff]
    %v1182 = vld [vmem:[#allocation5 + $0x250] sm:$0xff]
    %v1183 = vld [vmem:[#allocation5 + $0x258] sm:$0xff]
    %v1184 = vld [vmem:[#allocation5 + $0x260] sm:$0xff]
    %v1185 = vld [vmem:[#allocation5 + $0x268] sm:$0xff]
    %v1186 = vld [vmem:[#allocation5 + $0x270] sm:$0xff]
    %v1187 = vld [vmem:[#allocation5 + $0x278] sm:$0xff]
    %v1188 = vld [vmem:[#allocation5 + $0x280] sm:$0xff]
    %v1189 = vld [vmem:[#allocation5 + $0x288] sm:$0xff]
    %v1190 = vld [vmem:[#allocation5 + $0x290] sm:$0xff]
    %v1191 = vld [vmem:[#allocation5 + $0x298] sm:$0xff]
    %v1192 = vld [vmem:[#allocation5 + $0x2a0] sm:$0xff]
    %v1193 = vld [vmem:[#allocation5 + $0x2a8] sm:$0xff]
    %v1194 = vld [vmem:[#allocation5 + $0x2b0] sm:$0xff]
    %v1195 = vld [vmem:[#allocation5 + $0x2b8] sm:$0xff]
    %v1196 = vld [vmem:[#allocation5 + $0x2c0] sm:$0xff]
    %v1197 = vld [vmem:[#allocation5 + $0x2c8] sm:$0xff]
    %v1198 = vld [vmem:[#allocation5 + $0x2d0] sm:$0xff]
    %v1199 = vld [vmem:[#allocation5 + $0x2d8] sm:$0xff]
    %v1200 = vld [vmem:[#allocation5 + $0x2e0] sm:$0xff]
    %v1201 = vld [vmem:[#allocation5 + $0x2e8] sm:$0xff]
    %v1202 = vld [vmem:[#allocation5 + $0x2f0] sm:$0xff]
    %v1203 = vld [vmem:[#allocation5 + $0x2f8] sm:$0xff]
    %v1204 = vld [vmem:[#allocation5 + $0x300] sm:$0xff]
    %v1205 = vld [vmem:[#allocation5 + $0x308] sm:$0xff]
    %v1206 = vld [vmem:[#allocation5 + $0x310] sm:$0xff]
    %v1207 = vld [vmem:[#allocation5 + $0x318] sm:$0xff]
    %v1208 = vld [vmem:[#allocation5 + $0x320] sm:$0xff]
    %v1209 = vld [vmem:[#allocation5 + $0x328] sm:$0xff]
    %v1210 = vld [vmem:[#allocation5 + $0x330] sm:$0xff]
    %v1211 = vld [vmem:[#allocation5 + $0x338] sm:$0xff]
    %v1212 = vld [vmem:[#allocation5 + $0x340] sm:$0xff]
    %v1213 = vld [vmem:[#allocation5 + $0x348] sm:$0xff]
    %v1214 = vld [vmem:[#allocation5 + $0x350] sm:$0xff]
    %v1215 = vld [vmem:[#allocation5 + $0x358] sm:$0xff]
    %v1216 = vld [vmem:[#allocation5 + $0x360] sm:$0xff]
    %v1217 = vld [vmem:[#allocation5 + $0x368] sm:$0xff]
    %v1218 = vld [vmem:[#allocation5 + $0x370] sm:$0xff]
    %v1219 = vld [vmem:[#allocation5 + $0x378] sm:$0xff]
    %v1220 = vld [vmem:[#allocation5 + $0x380] sm:$0xff]
    %v1221 = vld [vmem:[#allocation5 + $0x388] sm:$0xff]
    %v1222 = vld [vmem:[#allocation5 + $0x390] sm:$0xff]
    %v1223 = vld [vmem:[#allocation5 + $0x398] sm:$0xff]
    %v1224 = vld [vmem:[#allocation5 + $0x3a0] sm:$0xff]
    %v1225 = vld [vmem:[#allocation5 + $0x3a8] sm:$0xff]
    %v1226 = vld [vmem:[#allocation5 + $0x3b0] sm:$0xff]
    %v1227 = vld [vmem:[#allocation5 + $0x3b8] sm:$0xff]
    %v1228 = vld [vmem:[#allocation5 + $0x3c0] sm:$0xff]
    %v1229 = vld [vmem:[#allocation5 + $0x3c8] sm:$0xff]
    %v1230 = vld [vmem:[#allocation5 + $0x3d0] sm:$0xff]
    %v1231 = vld [vmem:[#allocation5 + $0x3d8] sm:$0xff]
    %v1232 = vld [vmem:[#allocation5 + $0x3e0] sm:$0xff]
    %v1233 = vld [vmem:[#allocation5 + $0x3e8] sm:$0xff]
    %v1234 = vld [vmem:[#allocation5 + $0x3f0] sm:$0xff]
    %v1235 = vld [vmem:[#allocation5 + $0x3f8] sm:$0xff]
    %v1236 = vld [vmem:[#allocation5 + $0x400] sm:$0xff]
    %v1237 = vld [vmem:[#allocation5 + $0x408] sm:$0xff]
    %v1238 = vld [vmem:[#allocation5 + $0x410] sm:$0xff]
    %v1239 = vld [vmem:[#allocation5 + $0x418] sm:$0xff]
    %v1240 = vld [vmem:[#allocation5 + $0x420] sm:$0xff]
    %v1241 = vld [vmem:[#allocation5 + $0x428] sm:$0xff]
    %v1242 = vld [vmem:[#allocation5 + $0x430] sm:$0xff]
    %v1243 = vld [vmem:[#allocation5 + $0x438] sm:$0xff]
    %v1244 = vld [vmem:[#allocation5 + $0x440] sm:$0xff]
    %v1245 = vld [vmem:[#allocation5 + $0x448] sm:$0xff]
    %v1246 = vld [vmem:[#allocation5 + $0x450] sm:$0xff]
    %v1247 = vld [vmem:[#allocation5 + $0x458] sm:$0xff]
    %v1248 = vld [vmem:[#allocation5 + $0x460] sm:$0xff]
    %v1249 = vld [vmem:[#allocation5 + $0x468] sm:$0xff]
    %v1250 = vld [vmem:[#allocation5 + $0x470] sm:$0xff]
    %v1251 = vld [vmem:[#allocation5 + $0x478] sm:$0xff]
    %v1252 = vld [vmem:[#allocation5 + $0x480] sm:$0xff]
    %v1253 = vld [vmem:[#allocation5 + $0x488] sm:$0xff]
    %v1254 = vld [vmem:[#allocation5 + $0x490] sm:$0xff]
    %v1255 = vld [vmem:[#allocation5 + $0x498] sm:$0xff]
    %v1256 = vld [vmem:[#allocation5 + $0x4a0] sm:$0xff]
    %v1257 = vld [vmem:[#allocation5 + $0x4a8] sm:$0xff]
    %v1258 = vld [vmem:[#allocation5 + $0x4b0] sm:$0xff]
    %v1259 = vld [vmem:[#allocation5 + $0x4b8] sm:$0xff]
    %v1260 = vld [vmem:[#allocation5 + $0x4c0] sm:$0xff]
    %v1261 = vld [vmem:[#allocation5 + $0x4c8] sm:$0xff]
    %v1262 = vld [vmem:[#allocation5 + $0x4d0] sm:$0xff]
    %v1263 = vld [vmem:[#allocation5 + $0x4d8] sm:$0xff]
    %v1264 = vld [vmem:[#allocation5 + $0x4e0] sm:$0xff]
    %v1265 = vld [vmem:[#allocation5 + $0x4e8] sm:$0xff]
    %v1266 = vld [vmem:[#allocation5 + $0x4f0] sm:$0xff]
    %v1267 = vld [vmem:[#allocation5 + $0x4f8] sm:$0xff]
    %v1268 = vld [vmem:[#allocation5 + $0x500] sm:$0xff]
    %v1269 = vld [vmem:[#allocation5 + $0x508] sm:$0xff]
    %v1270 = vld [vmem:[#allocation5 + $0x510] sm:$0xff]
    %v1271 = vld [vmem:[#allocation5 + $0x518] sm:$0xff]
    %v1272 = vld [vmem:[#allocation5 + $0x520] sm:$0xff]
    %v1273 = vld [vmem:[#allocation5 + $0x528] sm:$0xff]
    %v1274 = vld [vmem:[#allocation5 + $0x530] sm:$0xff]
    %v1275 = vld [vmem:[#allocation5 + $0x538] sm:$0xff]
    %v1276 = vld [vmem:[#allocation5 + $0x540] sm:$0xff]
    %v1277 = vld [vmem:[#allocation5 + $0x548] sm:$0xff]
    %v1278 = vld [vmem:[#allocation5 + $0x550] sm:$0xff]
    %v1279 = vld [vmem:[#allocation5 + $0x558] sm:$0xff]
    %v1280 = vld [vmem:[#allocation5 + $0x560] sm:$0xff]
    %v1281 = vld [vmem:[#allocation5 + $0x568] sm:$0xff]
    %v1282 = vld [vmem:[#allocation5 + $0x570] sm:$0xff]
    %v1283 = vld [vmem:[#allocation5 + $0x578] sm:$0xff]
    %v1284 = vld [vmem:[#allocation5 + $0x580] sm:$0xff]
    %v1285 = vld [vmem:[#allocation5 + $0x588] sm:$0xff]
    %v1286 = vld [vmem:[#allocation5 + $0x590] sm:$0xff]
    %v1287 = vld [vmem:[#allocation5 + $0x598] sm:$0xff]
    %v1288 = vld [vmem:[#allocation5 + $0x5a0] sm:$0xff]
    %v1289 = vld [vmem:[#allocation5 + $0x5a8] sm:$0xff]
    %v1290 = vld [vmem:[#allocation5 + $0x5b0] sm:$0xff]
    %v1291 = vld [vmem:[#allocation5 + $0x5b8] sm:$0xff]
    %v1292 = vld [vmem:[#allocation5 + $0x5c0] sm:$0xff]
    %v1293 = vld [vmem:[#allocation5 + $0x5c8] sm:$0xff]
    %v1294 = vld [vmem:[#allocation5 + $0x5d0] sm:$0xff]
    %v1295 = vld [vmem:[#allocation5 + $0x5d8] sm:$0xff]
    %v1296 = vld [vmem:[#allocation5 + $0x5e0] sm:$0xff]
    %v1297 = vld [vmem:[#allocation5 + $0x5e8] sm:$0xff]
    %v1298 = vld [vmem:[#allocation5 + $0x5f0] sm:$0xff]
    %v1299 = vld [vmem:[#allocation5 + $0x5f8] sm:$0xff]
    %v1300 = vpack.c.bf16 %v1168, %v1168
    %v1301 = vpack.c.bf16 %v1169, %v1169
    %v1302 = vpack.c.bf16 %v1170, %v1170
    %v1303 = vpack.c.bf16 %v1171, %v1171
    %v1432 = vunpack.c.l.b16 %v1172
    %v1433 = vunpack.c.h.b16 %v1172
    %v1434 = vunpack.c.l.b16 %v1173
    %v1435 = vunpack.c.h.b16 %v1173
    %v1436 = vunpack.c.l.b16 %v1174
    %v1437 = vunpack.c.h.b16 %v1174
    %v1438 = vunpack.c.l.b16 %v1175
    %v1439 = vunpack.c.h.b16 %v1175
    %v1440 = vunpack.c.l.b16 %v1176
    %v1441 = vunpack.c.h.b16 %v1176
    %v1442 = vunpack.c.l.b16 %v1177
    %v1443 = vunpack.c.h.b16 %v1177
    %v1444 = vunpack.c.l.b16 %v1178
    %v1445 = vunpack.c.h.b16 %v1178
    %v1446 = vunpack.c.l.b16 %v1179
    %v1447 = vunpack.c.h.b16 %v1179
    %v1448 = vunpack.c.l.b16 %v1180
    %v1449 = vunpack.c.h.b16 %v1180
    %v1450 = vunpack.c.l.b16 %v1181
    %v1451 = vunpack.c.h.b16 %v1181
    %v1452 = vunpack.c.l.b16 %v1182
    %v1453 = vunpack.c.h.b16 %v1182
    %v1454 = vunpack.c.l.b16 %v1183
    %v1455 = vunpack.c.h.b16 %v1183
    %v1456 = vunpack.c.l.b16 %v1184
    %v1457 = vunpack.c.h.b16 %v1184
    %v1458 = vunpack.c.l.b16 %v1185
    %v1459 = vunpack.c.h.b16 %v1185
    %v1460 = vunpack.c.l.b16 %v1186
    %v1461 = vunpack.c.h.b16 %v1186
    %v1462 = vunpack.c.l.b16 %v1187
    %v1463 = vunpack.c.h.b16 %v1187
    %v1464 = vunpack.c.l.b16 %v1188
    %v1465 = vunpack.c.h.b16 %v1188
    %v1466 = vunpack.c.l.b16 %v1189
    %v1467 = vunpack.c.h.b16 %v1189
    %v1468 = vunpack.c.l.b16 %v1190
    %v1469 = vunpack.c.h.b16 %v1190
    %v1470 = vunpack.c.l.b16 %v1191
    %v1471 = vunpack.c.h.b16 %v1191
    %v1472 = vunpack.c.l.b16 %v1192
    %v1473 = vunpack.c.h.b16 %v1192
    %v1474 = vunpack.c.l.b16 %v1193
    %v1475 = vunpack.c.h.b16 %v1193
    %v1476 = vunpack.c.l.b16 %v1194
    %v1477 = vunpack.c.h.b16 %v1194
    %v1478 = vunpack.c.l.b16 %v1195
    %v1479 = vunpack.c.h.b16 %v1195
    %v1480 = vunpack.c.l.b16 %v1196
    %v1481 = vunpack.c.h.b16 %v1196
    %v1482 = vunpack.c.l.b16 %v1197
    %v1483 = vunpack.c.h.b16 %v1197
    %v1484 = vunpack.c.l.b16 %v1198
    %v1485 = vunpack.c.h.b16 %v1198
    %v1486 = vunpack.c.l.b16 %v1199
    %v1487 = vunpack.c.h.b16 %v1199
    %v1488 = vunpack.c.l.b16 %v1200
    %v1489 = vunpack.c.h.b16 %v1200
    %v1490 = vunpack.c.l.b16 %v1201
    %v1491 = vunpack.c.h.b16 %v1201
    %v1492 = vunpack.c.l.b16 %v1202
    %v1493 = vunpack.c.h.b16 %v1202
    %v1494 = vunpack.c.l.b16 %v1203
    %v1495 = vunpack.c.h.b16 %v1203
    %v1496 = vunpack.c.l.b16 %v1204
    %v1497 = vunpack.c.h.b16 %v1204
    %v1498 = vunpack.c.l.b16 %v1205
    %v1499 = vunpack.c.h.b16 %v1205
    %v1500 = vunpack.c.l.b16 %v1206
    %v1501 = vunpack.c.h.b16 %v1206
    %v1502 = vunpack.c.l.b16 %v1207
    %v1503 = vunpack.c.h.b16 %v1207
    %v1504 = vunpack.c.l.b16 %v1208
    %v1505 = vunpack.c.h.b16 %v1208
    %v1506 = vunpack.c.l.b16 %v1209
    %v1507 = vunpack.c.h.b16 %v1209
    %v1508 = vunpack.c.l.b16 %v1210
    %v1509 = vunpack.c.h.b16 %v1210
    %v1510 = vunpack.c.l.b16 %v1211
    %v1511 = vunpack.c.h.b16 %v1211
    %v1512 = vunpack.c.l.b16 %v1212
    %v1513 = vunpack.c.h.b16 %v1212
    %v1514 = vunpack.c.l.b16 %v1213
    %v1515 = vunpack.c.h.b16 %v1213
    %v1516 = vunpack.c.l.b16 %v1214
    %v1517 = vunpack.c.h.b16 %v1214
    %v1518 = vunpack.c.l.b16 %v1215
    %v1519 = vunpack.c.h.b16 %v1215
    %v1520 = vunpack.c.l.b16 %v1216
    %v1521 = vunpack.c.h.b16 %v1216
    %v1522 = vunpack.c.l.b16 %v1217
    %v1523 = vunpack.c.h.b16 %v1217
    %v1524 = vunpack.c.l.b16 %v1218
    %v1525 = vunpack.c.h.b16 %v1218
    %v1526 = vunpack.c.l.b16 %v1219
    %v1527 = vunpack.c.h.b16 %v1219
    %v1528 = vunpack.c.l.b16 %v1220
    %v1529 = vunpack.c.h.b16 %v1220
    %v1530 = vunpack.c.l.b16 %v1221
    %v1531 = vunpack.c.h.b16 %v1221
    %v1532 = vunpack.c.l.b16 %v1222
    %v1533 = vunpack.c.h.b16 %v1222
    %v1534 = vunpack.c.l.b16 %v1223
    %v1535 = vunpack.c.h.b16 %v1223
    %v1536 = vunpack.c.l.b16 %v1224
    %v1537 = vunpack.c.h.b16 %v1224
    %v1538 = vunpack.c.l.b16 %v1225
    %v1539 = vunpack.c.h.b16 %v1225
    %v1540 = vunpack.c.l.b16 %v1226
    %v1541 = vunpack.c.h.b16 %v1226
    %v1542 = vunpack.c.l.b16 %v1227
    %v1543 = vunpack.c.h.b16 %v1227
    %v1544 = vunpack.c.l.b16 %v1228
    %v1545 = vunpack.c.h.b16 %v1228
    %v1546 = vunpack.c.l.b16 %v1229
    %v1547 = vunpack.c.h.b16 %v1229
    %v1548 = vunpack.c.l.b16 %v1230
    %v1549 = vunpack.c.h.b16 %v1230
    %v1550 = vunpack.c.l.b16 %v1231
    %v1551 = vunpack.c.h.b16 %v1231
    %v1552 = vunpack.c.l.b16 %v1232
    %v1553 = vunpack.c.h.b16 %v1232
    %v1554 = vunpack.c.l.b16 %v1233
    %v1555 = vunpack.c.h.b16 %v1233
    %v1556 = vunpack.c.l.b16 %v1234
    %v1557 = vunpack.c.h.b16 %v1234
    %v1558 = vunpack.c.l.b16 %v1235
    %v1559 = vunpack.c.h.b16 %v1235
    %v1560 = vunpack.c.l.b16 %v1236
    %v1561 = vunpack.c.h.b16 %v1236
    %v1562 = vunpack.c.l.b16 %v1237
    %v1563 = vunpack.c.h.b16 %v1237
    %v1564 = vunpack.c.l.b16 %v1238
    %v1565 = vunpack.c.h.b16 %v1238
    %v1566 = vunpack.c.l.b16 %v1239
    %v1567 = vunpack.c.h.b16 %v1239
    %v1568 = vunpack.c.l.b16 %v1240
    %v1569 = vunpack.c.h.b16 %v1240
    %v1570 = vunpack.c.l.b16 %v1241
    %v1571 = vunpack.c.h.b16 %v1241
    %v1572 = vunpack.c.l.b16 %v1242
    %v1573 = vunpack.c.h.b16 %v1242
    %v1574 = vunpack.c.l.b16 %v1243
    %v1575 = vunpack.c.h.b16 %v1243
    %v1576 = vunpack.c.l.b16 %v1244
    %v1577 = vunpack.c.h.b16 %v1244
    %v1578 = vunpack.c.l.b16 %v1245
    %v1579 = vunpack.c.h.b16 %v1245
    %v1580 = vunpack.c.l.b16 %v1246
    %v1581 = vunpack.c.h.b16 %v1246
    %v1582 = vunpack.c.l.b16 %v1247
    %v1583 = vunpack.c.h.b16 %v1247
    %v1584 = vunpack.c.l.b16 %v1248
    %v1585 = vunpack.c.h.b16 %v1248
    %v1586 = vunpack.c.l.b16 %v1249
    %v1587 = vunpack.c.h.b16 %v1249
    %v1588 = vunpack.c.l.b16 %v1250
    %v1589 = vunpack.c.h.b16 %v1250
    %v1590 = vunpack.c.l.b16 %v1251
    %v1591 = vunpack.c.h.b16 %v1251
    %v1592 = vunpack.c.l.b16 %v1252
    %v1593 = vunpack.c.h.b16 %v1252
    %v1594 = vunpack.c.l.b16 %v1253
    %v1595 = vunpack.c.h.b16 %v1253
    %v1596 = vunpack.c.l.b16 %v1254
    %v1597 = vunpack.c.h.b16 %v1254
    %v1598 = vunpack.c.l.b16 %v1255
    %v1599 = vunpack.c.h.b16 %v1255
    %v1600 = vunpack.c.l.b16 %v1256
    %v1601 = vunpack.c.h.b16 %v1256
    %v1602 = vunpack.c.l.b16 %v1257
    %v1603 = vunpack.c.h.b16 %v1257
    %v1604 = vunpack.c.l.b16 %v1258
    %v1605 = vunpack.c.h.b16 %v1258
    %v1606 = vunpack.c.l.b16 %v1259
    %v1607 = vunpack.c.h.b16 %v1259
    %v1608 = vunpack.c.l.b16 %v1260
    %v1609 = vunpack.c.h.b16 %v1260
    %v1610 = vunpack.c.l.b16 %v1261
    %v1611 = vunpack.c.h.b16 %v1261
    %v1612 = vunpack.c.l.b16 %v1262
    %v1613 = vunpack.c.h.b16 %v1262
    %v1614 = vunpack.c.l.b16 %v1263
    %v1615 = vunpack.c.h.b16 %v1263
    %v1616 = vunpack.c.l.b16 %v1264
    %v1617 = vunpack.c.h.b16 %v1264
    %v1618 = vunpack.c.l.b16 %v1265
    %v1619 = vunpack.c.h.b16 %v1265
    %v1620 = vunpack.c.l.b16 %v1266
    %v1621 = vunpack.c.h.b16 %v1266
    %v1622 = vunpack.c.l.b16 %v1267
    %v1623 = vunpack.c.h.b16 %v1267
    %v1624 = vunpack.c.l.b16 %v1268
    %v1625 = vunpack.c.h.b16 %v1268
    %v1626 = vunpack.c.l.b16 %v1269
    %v1627 = vunpack.c.h.b16 %v1269
    %v1628 = vunpack.c.l.b16 %v1270
    %v1629 = vunpack.c.h.b16 %v1270
    %v1630 = vunpack.c.l.b16 %v1271
    %v1631 = vunpack.c.h.b16 %v1271
    %v1632 = vunpack.c.l.b16 %v1272
    %v1633 = vunpack.c.h.b16 %v1272
    %v1634 = vunpack.c.l.b16 %v1273
    %v1635 = vunpack.c.h.b16 %v1273
    %v1636 = vunpack.c.l.b16 %v1274
    %v1637 = vunpack.c.h.b16 %v1274
    %v1638 = vunpack.c.l.b16 %v1275
    %v1639 = vunpack.c.h.b16 %v1275
    %v1640 = vunpack.c.l.b16 %v1276
    %v1641 = vunpack.c.h.b16 %v1276
    %v1642 = vunpack.c.l.b16 %v1277
    %v1643 = vunpack.c.h.b16 %v1277
    %v1644 = vunpack.c.l.b16 %v1278
    %v1645 = vunpack.c.h.b16 %v1278
    %v1646 = vunpack.c.l.b16 %v1279
    %v1647 = vunpack.c.h.b16 %v1279
    %v1648 = vunpack.c.l.b16 %v1280
    %v1649 = vunpack.c.h.b16 %v1280
    %v1650 = vunpack.c.l.b16 %v1281
    %v1651 = vunpack.c.h.b16 %v1281
    %v1652 = vunpack.c.l.b16 %v1282
    %v1653 = vunpack.c.h.b16 %v1282
    %v1654 = vunpack.c.l.b16 %v1283
    %v1655 = vunpack.c.h.b16 %v1283
    %v1656 = vunpack.c.l.b16 %v1284
    %v1657 = vunpack.c.h.b16 %v1284
    %v1658 = vunpack.c.l.b16 %v1285
    %v1659 = vunpack.c.h.b16 %v1285
    %v1660 = vunpack.c.l.b16 %v1286
    %v1661 = vunpack.c.h.b16 %v1286
    %v1662 = vunpack.c.l.b16 %v1287
    %v1663 = vunpack.c.h.b16 %v1287
    %v1664 = vunpack.c.l.b16 %v1288
    %v1665 = vunpack.c.h.b16 %v1288
    %v1666 = vunpack.c.l.b16 %v1289
    %v1667 = vunpack.c.h.b16 %v1289
    %v1668 = vunpack.c.l.b16 %v1290
    %v1669 = vunpack.c.h.b16 %v1290
    %v1670 = vunpack.c.l.b16 %v1291
    %v1671 = vunpack.c.h.b16 %v1291
    %v1672 = vunpack.c.l.b16 %v1292
    %v1673 = vunpack.c.h.b16 %v1292
    %v1674 = vunpack.c.l.b16 %v1293
    %v1675 = vunpack.c.h.b16 %v1293
    %v1676 = vunpack.c.l.b16 %v1294
    %v1677 = vunpack.c.h.b16 %v1294
    %v1678 = vunpack.c.l.b16 %v1295
    %v1679 = vunpack.c.h.b16 %v1295
    %v1680 = vunpack.c.l.b16 %v1296
    %v1681 = vunpack.c.h.b16 %v1296
    %v1682 = vunpack.c.l.b16 %v1297
    %v1683 = vunpack.c.h.b16 %v1297
    %v1684 = vunpack.c.l.b16 %v1298
    %v1685 = vunpack.c.h.b16 %v1298
    %v1686 = vunpack.c.l.b16 %v1299
    %v1687 = vunpack.c.h.b16 %v1299
    %v1688 = vpack.c.b16 %v1436, %v1432
    %v1689 = vpack.c.b16 %v1437, %v1433
    %v1690 = vpack.c.b16 %v1438, %v1434
    %v1691 = vpack.c.b16 %v1439, %v1435
    %v1692 = vpack.c.b16 %v1444, %v1440
    %v1693 = vpack.c.b16 %v1445, %v1441
    %v1694 = vpack.c.b16 %v1446, %v1442
    %v1695 = vpack.c.b16 %v1447, %v1443
    %v1696 = vpack.c.b16 %v1452, %v1448
    %v1697 = vpack.c.b16 %v1453, %v1449
    %v1698 = vpack.c.b16 %v1454, %v1450
    %v1699 = vpack.c.b16 %v1455, %v1451
    %v1700 = vpack.c.b16 %v1460, %v1456
    %v1701 = vpack.c.b16 %v1461, %v1457
    %v1702 = vpack.c.b16 %v1462, %v1458
    %v1703 = vpack.c.b16 %v1463, %v1459
    %v1704 = vpack.c.b16 %v1468, %v1464
    %v1705 = vpack.c.b16 %v1469, %v1465
    %v1706 = vpack.c.b16 %v1470, %v1466
    %v1707 = vpack.c.b16 %v1471, %v1467
    %v1708 = vpack.c.b16 %v1476, %v1472
    %v1709 = vpack.c.b16 %v1477, %v1473
    %v1710 = vpack.c.b16 %v1478, %v1474
    %v1711 = vpack.c.b16 %v1479, %v1475
    %v1712 = vpack.c.b16 %v1484, %v1480
    %v1713 = vpack.c.b16 %v1485, %v1481
    %v1714 = vpack.c.b16 %v1486, %v1482
    %v1715 = vpack.c.b16 %v1487, %v1483
    %v1716 = vpack.c.b16 %v1492, %v1488
    %v1717 = vpack.c.b16 %v1493, %v1489
    %v1718 = vpack.c.b16 %v1494, %v1490
    %v1719 = vpack.c.b16 %v1495, %v1491
    %v1720 = vpack.c.b16 %v1500, %v1496
    %v1721 = vpack.c.b16 %v1501, %v1497
    %v1722 = vpack.c.b16 %v1502, %v1498
    %v1723 = vpack.c.b16 %v1503, %v1499
    %v1724 = vpack.c.b16 %v1508, %v1504
    %v1725 = vpack.c.b16 %v1509, %v1505
    %v1726 = vpack.c.b16 %v1510, %v1506
    %v1727 = vpack.c.b16 %v1511, %v1507
    %v1728 = vpack.c.b16 %v1516, %v1512
    %v1729 = vpack.c.b16 %v1517, %v1513
    %v1730 = vpack.c.b16 %v1518, %v1514
    %v1731 = vpack.c.b16 %v1519, %v1515
    %v1732 = vpack.c.b16 %v1524, %v1520
    %v1733 = vpack.c.b16 %v1525, %v1521
    %v1734 = vpack.c.b16 %v1526, %v1522
    %v1735 = vpack.c.b16 %v1527, %v1523
    %v1736 = vpack.c.b16 %v1532, %v1528
    %v1737 = vpack.c.b16 %v1533, %v1529
    %v1738 = vpack.c.b16 %v1534, %v1530
    %v1739 = vpack.c.b16 %v1535, %v1531
    %v1740 = vpack.c.b16 %v1540, %v1536
    %v1741 = vpack.c.b16 %v1541, %v1537
    %v1742 = vpack.c.b16 %v1542, %v1538
    %v1743 = vpack.c.b16 %v1543, %v1539
    %v1744 = vpack.c.b16 %v1548, %v1544
    %v1745 = vpack.c.b16 %v1549, %v1545
    %v1746 = vpack.c.b16 %v1550, %v1546
    %v1747 = vpack.c.b16 %v1551, %v1547
    %v1748 = vpack.c.b16 %v1556, %v1552
    %v1749 = vpack.c.b16 %v1557, %v1553
    %v1750 = vpack.c.b16 %v1558, %v1554
    %v1751 = vpack.c.b16 %v1559, %v1555
    %v1752 = vpack.c.b16 %v1564, %v1560
    %v1753 = vpack.c.b16 %v1565, %v1561
    %v1754 = vpack.c.b16 %v1566, %v1562
    %v1755 = vpack.c.b16 %v1567, %v1563
    %v1756 = vpack.c.b16 %v1572, %v1568
    %v1757 = vpack.c.b16 %v1573, %v1569
    %v1758 = vpack.c.b16 %v1574, %v1570
    %v1759 = vpack.c.b16 %v1575, %v1571
    %v1760 = vpack.c.b16 %v1580, %v1576
    %v1761 = vpack.c.b16 %v1581, %v1577
    %v1762 = vpack.c.b16 %v1582, %v1578
    %v1763 = vpack.c.b16 %v1583, %v1579
    %v1764 = vpack.c.b16 %v1588, %v1584
    %v1765 = vpack.c.b16 %v1589, %v1585
    %v1766 = vpack.c.b16 %v1590, %v1586
    %v1767 = vpack.c.b16 %v1591, %v1587
    %v1768 = vpack.c.b16 %v1596, %v1592
    %v1769 = vpack.c.b16 %v1597, %v1593
    %v1770 = vpack.c.b16 %v1598, %v1594
    %v1771 = vpack.c.b16 %v1599, %v1595
    %v1772 = vpack.c.b16 %v1604, %v1600
    %v1773 = vpack.c.b16 %v1605, %v1601
    %v1774 = vpack.c.b16 %v1606, %v1602
    %v1775 = vpack.c.b16 %v1607, %v1603
    %v1776 = vpack.c.b16 %v1612, %v1608
    %v1777 = vpack.c.b16 %v1613, %v1609
    %v1778 = vpack.c.b16 %v1614, %v1610
    %v1779 = vpack.c.b16 %v1615, %v1611
    %v1780 = vpack.c.b16 %v1620, %v1616
    %v1781 = vpack.c.b16 %v1621, %v1617
    %v1782 = vpack.c.b16 %v1622, %v1618
    %v1783 = vpack.c.b16 %v1623, %v1619
    %v1784 = vpack.c.b16 %v1628, %v1624
    %v1785 = vpack.c.b16 %v1629, %v1625
    %v1786 = vpack.c.b16 %v1630, %v1626
    %v1787 = vpack.c.b16 %v1631, %v1627
    %v1788 = vpack.c.b16 %v1636, %v1632
    %v1789 = vpack.c.b16 %v1637, %v1633
    %v1790 = vpack.c.b16 %v1638, %v1634
    %v1791 = vpack.c.b16 %v1639, %v1635
    %v1792 = vpack.c.b16 %v1644, %v1640
    %v1793 = vpack.c.b16 %v1645, %v1641
    %v1794 = vpack.c.b16 %v1646, %v1642
    %v1795 = vpack.c.b16 %v1647, %v1643
    %v1796 = vpack.c.b16 %v1652, %v1648
    %v1797 = vpack.c.b16 %v1653, %v1649
    %v1798 = vpack.c.b16 %v1654, %v1650
    %v1799 = vpack.c.b16 %v1655, %v1651
    %v1800 = vpack.c.b16 %v1660, %v1656
    %v1801 = vpack.c.b16 %v1661, %v1657
    %v1802 = vpack.c.b16 %v1662, %v1658
    %v1803 = vpack.c.b16 %v1663, %v1659
    %v1804 = vpack.c.b16 %v1668, %v1664
    %v1805 = vpack.c.b16 %v1669, %v1665
    %v1806 = vpack.c.b16 %v1670, %v1666
    %v1807 = vpack.c.b16 %v1671, %v1667
    %v1808 = vpack.c.b16 %v1676, %v1672
    %v1809 = vpack.c.b16 %v1677, %v1673
    %v1810 = vpack.c.b16 %v1678, %v1674
    %v1811 = vpack.c.b16 %v1679, %v1675
    %v1812 = vpack.c.b16 %v1684, %v1680
    %v1813 = vpack.c.b16 %v1685, %v1681
    %v1814 = vpack.c.b16 %v1686, %v1682
    %v1815 = vpack.c.b16 %v1687, %v1683
    %1944 = vmatprep.subr.bf16.mxu0 %v1689
    %1945 = vmatpush1.bf16.msra.mxu0 %v1688
    %1946 = vmatprep.subr.bf16.mxu0 %v1693
    %1947 = vmatpush1.bf16.msra.mxu0 %v1692
    %1948 = vmatprep.subr.bf16.mxu0 %v1697
    %1949 = vmatpush1.bf16.msra.mxu0 %v1696
    %1950 = vmatprep.subr.bf16.mxu0 %v1701
    %1951 = vmatpush1.bf16.msra.mxu0 %v1700
    %1952 = vmatprep.subr.bf16.mxu0 %v1705
    %1953 = vmatpush1.bf16.msra.mxu0 %v1704
    %1954 = vmatprep.subr.bf16.mxu0 %v1709
    %1955 = vmatpush1.bf16.msra.mxu0 %v1708
    %1956 = vmatprep.subr.bf16.mxu0 %v1713
    %1957 = vmatpush1.bf16.msra.mxu0 %v1712
    %1958 = vmatprep.subr.bf16.mxu0 %v1717
    %1959 = vmatpush1.bf16.msra.mxu0 %v1716
    %1960 = vmatprep.subr.bf16.mxu0 %v1721
    %1961 = vmatpush1.bf16.msra.mxu0 %v1720
    %1962 = vmatprep.subr.bf16.mxu0 %v1725
    %1963 = vmatpush1.bf16.msra.mxu0 %v1724
    %1964 = vmatprep.subr.bf16.mxu0 %v1729
    %1965 = vmatpush1.bf16.msra.mxu0 %v1728
    %1966 = vmatprep.subr.bf16.mxu0 %v1733
    %1967 = vmatpush1.bf16.msra.mxu0 %v1732
    %1968 = vmatprep.subr.bf16.mxu0 %v1737
    %1969 = vmatpush1.bf16.msra.mxu0 %v1736
    %1970 = vmatprep.subr.bf16.mxu0 %v1741
    %1971 = vmatpush1.bf16.msra.mxu0 %v1740
    %1972 = vmatprep.subr.bf16.mxu0 %v1745
    %1973 = vmatpush1.bf16.msra.mxu0 %v1744
    %1974 = vmatprep.subr.bf16.mxu0 %v1749
    %1975 = vmatpush1.bf16.msra.mxu0 %v1748
    %1976 = vmatprep.mubr.bf16.mxu0 %v1301
    %1977 = vmatmul.mubr.bf16.gmra.mrb[0].mxu0 %v1300
    %v1978 = vpop.f32.mrb[0].mxu0
    %v1979 = vadd.f32 0.0, %v1978
    %v1980 = vpop.f32.mrb[0].mxu0
    %v1981 = vadd.f32 0.0, %v1980
    %v1982 = vpop.f32.mrb[0].mxu0
    %v1983 = vpop.f32.mrb[0].mxu0
    %1984 = vdwg.mxu0
    %1985 = vmatprep.subr.bf16.mxu0 %v1753
    %1986 = vmatpush1.bf16.msra.mxu0 %v1752
    %1987 = vmatprep.subr.bf16.mxu0 %v1757
    %1988 = vmatpush1.bf16.msra.mxu0 %v1756
    %1989 = vmatprep.subr.bf16.mxu0 %v1761
    %1990 = vmatpush1.bf16.msra.mxu0 %v1760
    %1991 = vmatprep.subr.bf16.mxu0 %v1765
    %1992 = vmatpush1.bf16.msra.mxu0 %v1764
    %1993 = vmatprep.subr.bf16.mxu0 %v1769
    %1994 = vmatpush1.bf16.msra.mxu0 %v1768
    %1995 = vmatprep.subr.bf16.mxu0 %v1773
    %1996 = vmatpush1.bf16.msra.mxu0 %v1772
    %1997 = vmatprep.subr.bf16.mxu0 %v1777
    %1998 = vmatpush1.bf16.msra.mxu0 %v1776
    %1999 = vmatprep.subr.bf16.mxu0 %v1781
    %2000 = vmatpush1.bf16.msra.mxu0 %v1780
    %2001 = vmatprep.subr.bf16.mxu0 %v1785
    %2002 = vmatpush1.bf16.msra.mxu0 %v1784
    %2003 = vmatprep.subr.bf16.mxu0 %v1789
    %2004 = vmatpush1.bf16.msra.mxu0 %v1788
    %2005 = vmatprep.subr.bf16.mxu0 %v1793
    %2006 = vmatpush1.bf16.msra.mxu0 %v1792
    %2007 = vmatprep.subr.bf16.mxu0 %v1797
    %2008 = vmatpush1.bf16.msra.mxu0 %v1796
    %2009 = vmatprep.subr.bf16.mxu0 %v1801
    %2010 = vmatpush1.bf16.msra.mxu0 %v1800
    %2011 = vmatprep.subr.bf16.mxu0 %v1805
    %2012 = vmatpush1.bf16.msra.mxu0 %v1804
    %2013 = vmatprep.subr.bf16.mxu0 %v1809
    %2014 = vmatpush1.bf16.msra.mxu0 %v1808
    %2015 = vmatprep.subr.bf16.mxu0 %v1813
    %2016 = vmatpush1.bf16.msra.mxu0 %v1812
    %2017 = vmatprep.mubr.bf16.mxu0 %v1303
    %2018 = vmatmul.mubr.bf16.gmra.mrb[0].mxu0 %v1302
    %v2019 = vpop.f32.mrb[0].mxu0
    %v2020 = vadd.f32 %v1979, %v2019
    %v2021 = vpop.f32.mrb[0].mxu0
    %v2022 = vadd.f32 %v1981, %v2021
    %v2023 = vpop.f32.mrb[0].mxu0
    %v2024 = vpop.f32.mrb[0].mxu0
    %2025 = vdwg.mxu0
    %2026 = vmatprep.subr.bf16.mxu0 %v1691
    %2027 = vmatpush1.bf16.msra.mxu0 %v1690
    %2028 = vmatprep.subr.bf16.mxu0 %v1695
    %2029 = vmatpush1.bf16.msra.mxu0 %v1694
    %2030 = vmatprep.subr.bf16.mxu0 %v1699
    %2031 = vmatpush1.bf16.msra.mxu0 %v1698
    %2032 = vmatprep.subr.bf16.mxu0 %v1703
    %2033 = vmatpush1.bf16.msra.mxu0 %v1702
    %2034 = vmatprep.subr.bf16.mxu0 %v1707
    %2035 = vmatpush1.bf16.msra.mxu0 %v1706
    %2036 = vmatprep.subr.bf16.mxu0 %v1711
    %2037 = vmatpush1.bf16.msra.mxu0 %v1710
    %2038 = vmatprep.subr.bf16.mxu0 %v1715
    %2039 = vmatpush1.bf16.msra.mxu0 %v1714
    %2040 = vmatprep.subr.bf16.mxu0 %v1719
    %2041 = vmatpush1.bf16.msra.mxu0 %v1718
    %2042 = vmatprep.subr.bf16.mxu0 %v1723
    %2043 = vmatpush1.bf16.msra.mxu0 %v1722
    %2044 = vmatprep.subr.bf16.mxu0 %v1727
    %2045 = vmatpush1.bf16.msra.mxu0 %v1726
    %2046 = vmatprep.subr.bf16.mxu0 %v1731
    %2047 = vmatpush1.bf16.msra.mxu0 %v1730
    %2048 = vmatprep.subr.bf16.mxu0 %v1735
    %2049 = vmatpush1.bf16.msra.mxu0 %v1734
    %2050 = vmatprep.subr.bf16.mxu0 %v1739
    %2051 = vmatpush1.bf16.msra.mxu0 %v1738
    %2052 = vmatprep.subr.bf16.mxu0 %v1743
    %2053 = vmatpush1.bf16.msra.mxu0 %v1742
    %2054 = vmatprep.subr.bf16.mxu0 %v1747
    %2055 = vmatpush1.bf16.msra.mxu0 %v1746
    %2056 = vmatprep.subr.bf16.mxu0 %v1751
    %2057 = vmatpush1.bf16.msra.mxu0 %v1750
    %2058 = vmatprep.mubr.bf16.mxu0 %v1301
    %2059 = vmatmul.mubr.bf16.gmra.mrb[0].mxu0 %v1300
    %v2060 = vpop.f32.mrb[0].mxu0
    %v2061 = vadd.f32 0.0, %v2060
    %v2062 = vpop.f32.mrb[0].mxu0
    %v2063 = vadd.f32 0.0, %v2062
    %v2064 = vpop.f32.mrb[0].mxu0
    %v2065 = vpop.f32.mrb[0].mxu0
    %2066 = vdwg.mxu0
    %2067 = vmatprep.subr.bf16.mxu0 %v1755
    %2068 = vmatpush1.bf16.msra.mxu0 %v1754
    %2069 = vmatprep.subr.bf16.mxu0 %v1759
    %2070 = vmatpush1.bf16.msra.mxu0 %v1758
    %2071 = vmatprep.subr.bf16.mxu0 %v1763
    %2072 = vmatpush1.bf16.msra.mxu0 %v1762
    %2073 = vmatprep.subr.bf16.mxu0 %v1767
    %2074 = vmatpush1.bf16.msra.mxu0 %v1766
    %2075 = vmatprep.subr.bf16.mxu0 %v1771
    %2076 = vmatpush1.bf16.msra.mxu0 %v1770
    %2077 = vmatprep.subr.bf16.mxu0 %v1775
    %2078 = vmatpush1.bf16.msra.mxu0 %v1774
    %2079 = vmatprep.subr.bf16.mxu0 %v1779
    %2080 = vmatpush1.bf16.msra.mxu0 %v1778
    %2081 = vmatprep.subr.bf16.mxu0 %v1783
    %2082 = vmatpush1.bf16.msra.mxu0 %v1782
    %2083 = vmatprep.subr.bf16.mxu0 %v1787
    %2084 = vmatpush1.bf16.msra.mxu0 %v1786
    %2085 = vmatprep.subr.bf16.mxu0 %v1791
    %2086 = vmatpush1.bf16.msra.mxu0 %v1790
    %2087 = vmatprep.subr.bf16.mxu0 %v1795
    %2088 = vmatpush1.bf16.msra.mxu0 %v1794
    %2089 = vmatprep.subr.bf16.mxu0 %v1799
    %2090 = vmatpush1.bf16.msra.mxu0 %v1798
    %2091 = vmatprep.subr.bf16.mxu0 %v1803
    %2092 = vmatpush1.bf16.msra.mxu0 %v1802
    %2093 = vmatprep.subr.bf16.mxu0 %v1807
    %2094 = vmatpush1.bf16.msra.mxu0 %v1806
    %2095 = vmatprep.subr.bf16.mxu0 %v1811
    %2096 = vmatpush1.bf16.msra.mxu0 %v1810
    %2097 = vmatprep.subr.bf16.mxu0 %v1815
    %2098 = vmatpush1.bf16.msra.mxu0 %v1814
    %2099 = vmatprep.mubr.bf16.mxu0 %v1303
    %2100 = vmatmul.mubr.bf16.gmra.mrb[0].mxu0 %v1302
    %v2101 = vpop.f32.mrb[0].mxu0
    %v2102 = vadd.f32 %v2061, %v2101
    %v2103 = vpop.f32.mrb[0].mxu0
    %v2104 = vadd.f32 %v2063, %v2103
    %v2105 = vpop.f32.mrb[0].mxu0
    %v2106 = vpop.f32.mrb[0].mxu0
    %2107 = vdwg.mxu0
    %s2108 = scalar_lea.vmem %s3, 98
    %v2109 = vld [vmem:[%s2108] ss:$8 sm:$0xf]
    %s2110 = scalar_lea.vmem %s3, 99
    %v2111 = vld [vmem:[%s2110] ss:$8 sm:$0xf]
    %v2112 = vrot.slane %v2020, 4
    %v2113 = vadd.f32 %v2020, %v2112
    %v2114 = vrot.slane %v2113, 2
    %v2115 = vadd.f32 %v2113, %v2114
    %v2116 = vrot.slane %v2115, 1
    %v2117 = vadd.f32 %v2115, %v2116
    %v2118 = vrot.slane %v2022, 4
    %v2119 = vadd.f32 %v2022, %v2118
    %v2120 = vrot.slane %v2119, 2
    %v2121 = vadd.f32 %v2119, %v2120
    %v2122 = vrot.slane %v2121, 1
    %v2123 = vadd.f32 %v2121, %v2122
    %v2124 = vrot.slane %v2102, 4
    %v2125 = vadd.f32 %v2102, %v2124
    %v2126 = vrot.slane %v2125, 2
    %v2127 = vadd.f32 %v2125, %v2126
    %v2128 = vrot.slane %v2127, 1
    %v2129 = vadd.f32 %v2127, %v2128
    %v2130 = vrot.slane %v2104, 4
    %v2131 = vadd.f32 %v2104, %v2130
    %v2132 = vrot.slane %v2131, 2
    %v2133 = vadd.f32 %v2131, %v2132
    %v2134 = vrot.slane %v2133, 1
    %v2135 = vadd.f32 %v2133, %v2134
    %v2136 = vmul.f32 %v2117, %v301
    %v2137 = vmul.f32 %v2123, %v301
    %v2138 = vmul.f32 %v2129, %v301
    %v2139 = vmul.f32 %v2135, %v301
    %v2140 = vmul.f32 %v2020, %v2020
    %v2141 = vmul.f32 %v2022, %v2022
    %v2142 = vmul.f32 %v2102, %v2102
    %v2143 = vmul.f32 %v2104, %v2104
    %v2144 = vrot.slane %v2140, 4
    %v2145 = vadd.f32 %v2140, %v2144
    %v2146 = vrot.slane %v2145, 2
    %v2147 = vadd.f32 %v2145, %v2146
    %v2148 = vrot.slane %v2147, 1
    %v2149 = vadd.f32 %v2147, %v2148
    %v2150 = vrot.slane %v2141, 4
    %v2151 = vadd.f32 %v2141, %v2150
    %v2152 = vrot.slane %v2151, 2
    %v2153 = vadd.f32 %v2151, %v2152
    %v2154 = vrot.slane %v2153, 1
    %v2155 = vadd.f32 %v2153, %v2154
    %v2156 = vrot.slane %v2142, 4
    %v2157 = vadd.f32 %v2142, %v2156
    %v2158 = vrot.slane %v2157, 2
    %v2159 = vadd.f32 %v2157, %v2158
    %v2160 = vrot.slane %v2159, 1
    %v2161 = vadd.f32 %v2159, %v2160
    %v2162 = vrot.slane %v2143, 4
    %v2163 = vadd.f32 %v2143, %v2162
    %v2164 = vrot.slane %v2163, 2
    %v2165 = vadd.f32 %v2163, %v2164
    %v2166 = vrot.slane %v2165, 1
    %v2167 = vadd.f32 %v2165, %v2166
    %v2168 = vmul.f32 %v2149, %v301
    %v2169 = vmul.f32 %v2155, %v301
    %v2170 = vmul.f32 %v2161, %v301
    %v2171 = vmul.f32 %v2167, %v301
    %v2172 = vmul.f32 %v2136, %v2136
    %v2173 = vmul.f32 %v2137, %v2137
    %v2174 = vmul.f32 %v2138, %v2138
    %v2175 = vmul.f32 %v2139, %v2139
    %v2176 = vsub.f32 %v2168, %v2172
    %v2177 = vsub.f32 %v2169, %v2173
    %v2178 = vsub.f32 %v2170, %v2174
    %v2179 = vsub.f32 %v2171, %v2175
    %v2180 = vadd.f32 %v2176, 1e-05
    %v2181 = vadd.f32 %v2177, 1e-05
    %v2182 = vadd.f32 %v2178, 1e-05
    %v2183 = vadd.f32 %v2179, 1e-05
    %v2184 = vrsqrt.pop %v2180
    %v2185 = vrsqrt.pop %v2181
    %v2186 = vrsqrt.pop %v2182
    %v2187 = vrsqrt.pop %v2183
    %v2192 = vcombine.low %v2184, %v2185
    %v2193 = vcombine.low %v2186, %v2187
    %v2195 = vunpack.c.l.s4 1966171168
    %v2196 = vunpack.c.0.s8 %v2195
    %v2197 = vlaneseq
    %v2198 = vshrl.u32 %v2197, 7
    %v2199 = vsub.s32 %v2196, %v2198
    %v2200 = vrot.slane %v2192, %v2199
    %v2202 = vunpack.c.l.s4 1966171168
    %v2203 = vunpack.c.0.s8 %v2202
    %v2204 = vlaneseq
    %v2205 = vshrl.u32 %v2204, 7
    %v2206 = vsub.s32 %v2203, %v2205
    %v2207 = vrot.slane %v2193, %v2206
    %v2208 = vcombine.low %v2200, %v2207
    %v2210 = vunpack.c.l.s4 1966171168
    %v2211 = vunpack.c.0.s8 %v2210
    %v2212 = vlaneseq
    %v2213 = vshrl.u32 %v2212, 7
    %v2214 = vsub.s32 %v2211, %v2213
    %v2215 = vrot.slane %v2208, %v2214
    %v2217 = vmul.f32 %v2109, %v2215
    %v2219 = vlaneseq
    %v2220 = vshrl.u32 %v2219, 7
    %v2221 = vsub.s32 0, %v2220
    %v2222 = vrot.slane %v2217, %v2221
    %v2223 = vlaneseq
    %v2224 = vshrl.u32 %v2223, 7
    %v2225 = vsub.s32 1, %v2224
    %v2226 = vrot.slane %v2217, %v2225
    %v2227 = vlaneseq
    %v2228 = vshrl.u32 %v2227, 7
    %v2229 = vsub.s32 2, %v2228
    %v2230 = vrot.slane %v2217, %v2229
    %v2231 = vlaneseq
    %v2232 = vshrl.u32 %v2231, 7
    %v2233 = vsub.s32 3, %v2232
    %v2234 = vrot.slane %v2217, %v2233
    %v2239 = vmul.f32 %v2020, %v2222
    %v2240 = vmul.f32 %v2022, %v2226
    %v2241 = vmul.f32 %v2102, %v2230
    %v2242 = vmul.f32 %v2104, %v2234
    %v2243 = vmul.f32 %v2136, %v2222
    %v2244 = vmul.f32 %v2137, %v2226
    %v2245 = vmul.f32 %v2138, %v2230
    %v2246 = vmul.f32 %v2139, %v2234
    %v2251 = vcombine.low %v2243, %v2244
    %v2252 = vcombine.low %v2245, %v2246
    %v2254 = vunpack.c.l.s4 1966171168
    %v2255 = vunpack.c.0.s8 %v2254
    %v2256 = vlaneseq
    %v2257 = vshrl.u32 %v2256, 7
    %v2258 = vsub.s32 %v2255, %v2257
    %v2259 = vrot.slane %v2251, %v2258
    %v2261 = vunpack.c.l.s4 1966171168
    %v2262 = vunpack.c.0.s8 %v2261
    %v2263 = vlaneseq
    %v2264 = vshrl.u32 %v2263, 7
    %v2265 = vsub.s32 %v2262, %v2264
    %v2266 = vrot.slane %v2252, %v2265
    %v2267 = vcombine.low %v2259, %v2266
    %v2269 = vunpack.c.l.s4 1966171168
    %v2270 = vunpack.c.0.s8 %v2269
    %v2271 = vlaneseq
    %v2272 = vshrl.u32 %v2271, 7
    %v2273 = vsub.s32 %v2270, %v2272
    %v2274 = vrot.slane %v2267, %v2273
    %v2276 = vsub.f32 %v2111, %v2274
    %v2278 = vlaneseq
    %v2279 = vshrl.u32 %v2278, 7
    %v2280 = vsub.s32 0, %v2279
    %v2281 = vrot.slane %v2276, %v2280
    %v2282 = vlaneseq
    %v2283 = vshrl.u32 %v2282, 7
    %v2284 = vsub.s32 1, %v2283
    %v2285 = vrot.slane %v2276, %v2284
    %v2286 = vlaneseq
    %v2287 = vshrl.u32 %v2286, 7
    %v2288 = vsub.s32 2, %v2287
    %v2289 = vrot.slane %v2276, %v2288
    %v2290 = vlaneseq
    %v2291 = vshrl.u32 %v2290, 7
    %v2292 = vsub.s32 3, %v2291
    %v2293 = vrot.slane %v2276, %v2292
    %v2298 = vadd.f32 %v2239, %v2281
    %v2299 = vadd.f32 %v2240, %v2285
    %v2300 = vadd.f32 %v2241, %v2289
    %v2301 = vadd.f32 %v2242, %v2293
    %v2302 = vmax.f32 %v2298, 0.0
    %v2303 = vmax.f32 %v2299, 0.0
    %v2304 = vmax.f32 %v2300, 0.0
    %v2305 = vmax.f32 %v2301, 0.0
    %v2306 = vld [vmem:[#allocation2] sm:$0xff]
    %v2307 = vld [vmem:[#allocation2 + $0x8] sm:$0xff]
    %v2308 = vld [vmem:[#allocation2 + $0x10] sm:$0xff]
    %v2309 = vld [vmem:[#allocation2 + $0x18] sm:$0xff]
    %v2310 = vld [vmem:[#allocation2 + $0x20] sm:$0xff]
    %v2311 = vld [vmem:[#allocation2 + $0x28] sm:$0xff]
    %v2312 = vld [vmem:[#allocation2 + $0x30] sm:$0xff]
    %v2313 = vld [vmem:[#allocation2 + $0x38] sm:$0xff]
    %v2314 = vld [vmem:[#allocation2 + $0x40] sm:$0xff]
    %v2315 = vld [vmem:[#allocation2 + $0x48] sm:$0xff]
    %v2316 = vld [vmem:[#allocation2 + $0x50] sm:$0xff]
    %v2317 = vld [vmem:[#allocation2 + $0x58] sm:$0xff]
    %v2318 = vld [vmem:[#allocation2 + $0x60] sm:$0xff]
    %v2319 = vld [vmem:[#allocation2 + $0x68] sm:$0xff]
    %v2320 = vld [vmem:[#allocation2 + $0x70] sm:$0xff]
    %v2321 = vld [vmem:[#allocation2 + $0x78] sm:$0xff]
    %v2322 = vld [vmem:[#allocation2 + $0x80] sm:$0xff]
    %v2323 = vld [vmem:[#allocation2 + $0x88] sm:$0xff]
    %v2324 = vld [vmem:[#allocation2 + $0x90] sm:$0xff]
    %v2325 = vld [vmem:[#allocation2 + $0x98] sm:$0xff]
    %v2326 = vld [vmem:[#allocation2 + $0xa0] sm:$0xff]
    %v2327 = vld [vmem:[#allocation2 + $0xa8] sm:$0xff]
    %v2328 = vld [vmem:[#allocation2 + $0xb0] sm:$0xff]
    %v2329 = vld [vmem:[#allocation2 + $0xb8] sm:$0xff]
    %v2330 = vld [vmem:[#allocation2 + $0xc0] sm:$0xff]
    %v2331 = vld [vmem:[#allocation2 + $0xc8] sm:$0xff]
    %v2332 = vld [vmem:[#allocation2 + $0xd0] sm:$0xff]
    %v2333 = vld [vmem:[#allocation2 + $0xd8] sm:$0xff]
    %v2334 = vld [vmem:[#allocation2 + $0xe0] sm:$0xff]
    %v2335 = vld [vmem:[#allocation2 + $0xe8] sm:$0xff]
    %v2336 = vld [vmem:[#allocation2 + $0xf0] sm:$0xff]
    %v2337 = vld [vmem:[#allocation2 + $0xf8] sm:$0xff]
    %v2338 = vld [vmem:[#allocation2 + $0x100] sm:$0xff]
    %v2339 = vld [vmem:[#allocation2 + $0x108] sm:$0xff]
    %v2340 = vld [vmem:[#allocation2 + $0x110] sm:$0xff]
    %v2341 = vld [vmem:[#allocation2 + $0x118] sm:$0xff]
    %v2342 = vld [vmem:[#allocation2 + $0x120] sm:$0xff]
    %v2343 = vld [vmem:[#allocation2 + $0x128] sm:$0xff]
    %v2344 = vld [vmem:[#allocation2 + $0x130] sm:$0xff]
    %v2345 = vld [vmem:[#allocation2 + $0x138] sm:$0xff]
    %v2346 = vld [vmem:[#allocation2 + $0x140] sm:$0xff]
    %v2347 = vld [vmem:[#allocation2 + $0x148] sm:$0xff]
    %v2348 = vld [vmem:[#allocation2 + $0x150] sm:$0xff]
    %v2349 = vld [vmem:[#allocation2 + $0x158] sm:$0xff]
    %v2350 = vld [vmem:[#allocation2 + $0x160] sm:$0xff]
    %v2351 = vld [vmem:[#allocation2 + $0x168] sm:$0xff]
    %v2352 = vld [vmem:[#allocation2 + $0x170] sm:$0xff]
    %v2353 = vld [vmem:[#allocation2 + $0x178] sm:$0xff]
    %v2354 = vld [vmem:[#allocation2 + $0x180] sm:$0xff]
    %v2355 = vld [vmem:[#allocation2 + $0x188] sm:$0xff]
    %v2356 = vld [vmem:[#allocation2 + $0x190] sm:$0xff]
    %v2357 = vld [vmem:[#allocation2 + $0x198] sm:$0xff]
    %v2358 = vld [vmem:[#allocation2 + $0x1a0] sm:$0xff]
    %v2359 = vld [vmem:[#allocation2 + $0x1a8] sm:$0xff]
    %v2360 = vld [vmem:[#allocation2 + $0x1b0] sm:$0xff]
    %v2361 = vld [vmem:[#allocation2 + $0x1b8] sm:$0xff]
    %v2362 = vld [vmem:[#allocation2 + $0x1c0] sm:$0xff]
    %v2363 = vld [vmem:[#allocation2 + $0x1c8] sm:$0xff]
    %v2364 = vld [vmem:[#allocation2 + $0x1d0] sm:$0xff]
    %v2365 = vld [vmem:[#allocation2 + $0x1d8] sm:$0xff]
    %v2366 = vld [vmem:[#allocation2 + $0x1e0] sm:$0xff]
    %v2367 = vld [vmem:[#allocation2 + $0x1e8] sm:$0xff]
    %v2368 = vld [vmem:[#allocation2 + $0x1f0] sm:$0xff]
    %v2369 = vld [vmem:[#allocation2 + $0x1f8] sm:$0xff]
    %v2370 = vpack.c.bf16 %v2302, %v2302
    %v2371 = vpack.c.bf16 %v2303, %v2303
    %v2372 = vpack.c.bf16 %v2304, %v2304
    %v2373 = vpack.c.bf16 %v2305, %v2305
    %v2438 = vunpack.c.l.b16 %v2306
    %v2439 = vunpack.c.h.b16 %v2306
    %v2440 = vunpack.c.l.b16 %v2307
    %v2441 = vunpack.c.h.b16 %v2307
    %v2442 = vunpack.c.l.b16 %v2308
    %v2443 = vunpack.c.h.b16 %v2308
    %v2444 = vunpack.c.l.b16 %v2309
    %v2445 = vunpack.c.h.b16 %v2309
    %v2446 = vunpack.c.l.b16 %v2310
    %v2447 = vunpack.c.h.b16 %v2310
    %v2448 = vunpack.c.l.b16 %v2311
    %v2449 = vunpack.c.h.b16 %v2311
    %v2450 = vunpack.c.l.b16 %v2312
    %v2451 = vunpack.c.h.b16 %v2312
    %v2452 = vunpack.c.l.b16 %v2313
    %v2453 = vunpack.c.h.b16 %v2313
    %v2454 = vunpack.c.l.b16 %v2314
    %v2455 = vunpack.c.h.b16 %v2314
    %v2456 = vunpack.c.l.b16 %v2315
    %v2457 = vunpack.c.h.b16 %v2315
    %v2458 = vunpack.c.l.b16 %v2316
    %v2459 = vunpack.c.h.b16 %v2316
    %v2460 = vunpack.c.l.b16 %v2317
    %v2461 = vunpack.c.h.b16 %v2317
    %v2462 = vunpack.c.l.b16 %v2318
    %v2463 = vunpack.c.h.b16 %v2318
    %v2464 = vunpack.c.l.b16 %v2319
    %v2465 = vunpack.c.h.b16 %v2319
    %v2466 = vunpack.c.l.b16 %v2320
    %v2467 = vunpack.c.h.b16 %v2320
    %v2468 = vunpack.c.l.b16 %v2321
    %v2469 = vunpack.c.h.b16 %v2321
    %v2470 = vunpack.c.l.b16 %v2322
    %v2471 = vunpack.c.h.b16 %v2322
    %v2472 = vunpack.c.l.b16 %v2323
    %v2473 = vunpack.c.h.b16 %v2323
    %v2474 = vunpack.c.l.b16 %v2324
    %v2475 = vunpack.c.h.b16 %v2324
    %v2476 = vunpack.c.l.b16 %v2325
    %v2477 = vunpack.c.h.b16 %v2325
    %v2478 = vunpack.c.l.b16 %v2326
    %v2479 = vunpack.c.h.b16 %v2326
    %v2480 = vunpack.c.l.b16 %v2327
    %v2481 = vunpack.c.h.b16 %v2327
    %v2482 = vunpack.c.l.b16 %v2328
    %v2483 = vunpack.c.h.b16 %v2328
    %v2484 = vunpack.c.l.b16 %v2329
    %v2485 = vunpack.c.h.b16 %v2329
    %v2486 = vunpack.c.l.b16 %v2330
    %v2487 = vunpack.c.h.b16 %v2330
    %v2488 = vunpack.c.l.b16 %v2331
    %v2489 = vunpack.c.h.b16 %v2331
    %v2490 = vunpack.c.l.b16 %v2332
    %v2491 = vunpack.c.h.b16 %v2332
    %v2492 = vunpack.c.l.b16 %v2333
    %v2493 = vunpack.c.h.b16 %v2333
    %v2494 = vunpack.c.l.b16 %v2334
    %v2495 = vunpack.c.h.b16 %v2334
    %v2496 = vunpack.c.l.b16 %v2335
    %v2497 = vunpack.c.h.b16 %v2335
    %v2498 = vunpack.c.l.b16 %v2336
    %v2499 = vunpack.c.h.b16 %v2336
    %v2500 = vunpack.c.l.b16 %v2337
    %v2501 = vunpack.c.h.b16 %v2337
    %v2502 = vunpack.c.l.b16 %v2338
    %v2503 = vunpack.c.h.b16 %v2338
    %v2504 = vunpack.c.l.b16 %v2339
    %v2505 = vunpack.c.h.b16 %v2339
    %v2506 = vunpack.c.l.b16 %v2340
    %v2507 = vunpack.c.h.b16 %v2340
    %v2508 = vunpack.c.l.b16 %v2341
    %v2509 = vunpack.c.h.b16 %v2341
    %v2510 = vunpack.c.l.b16 %v2342
    %v2511 = vunpack.c.h.b16 %v2342
    %v2512 = vunpack.c.l.b16 %v2343
    %v2513 = vunpack.c.h.b16 %v2343
    %v2514 = vunpack.c.l.b16 %v2344
    %v2515 = vunpack.c.h.b16 %v2344
    %v2516 = vunpack.c.l.b16 %v2345
    %v2517 = vunpack.c.h.b16 %v2345
    %v2518 = vunpack.c.l.b16 %v2346
    %v2519 = vunpack.c.h.b16 %v2346
    %v2520 = vunpack.c.l.b16 %v2347
    %v2521 = vunpack.c.h.b16 %v2347
    %v2522 = vunpack.c.l.b16 %v2348
    %v2523 = vunpack.c.h.b16 %v2348
    %v2524 = vunpack.c.l.b16 %v2349
    %v2525 = vunpack.c.h.b16 %v2349
    %v2526 = vunpack.c.l.b16 %v2350
    %v2527 = vunpack.c.h.b16 %v2350
    %v2528 = vunpack.c.l.b16 %v2351
    %v2529 = vunpack.c.h.b16 %v2351
    %v2530 = vunpack.c.l.b16 %v2352
    %v2531 = vunpack.c.h.b16 %v2352
    %v2532 = vunpack.c.l.b16 %v2353
    %v2533 = vunpack.c.h.b16 %v2353
    %v2534 = vunpack.c.l.b16 %v2354
    %v2535 = vunpack.c.h.b16 %v2354
    %v2536 = vunpack.c.l.b16 %v2355
    %v2537 = vunpack.c.h.b16 %v2355
    %v2538 = vunpack.c.l.b16 %v2356
    %v2539 = vunpack.c.h.b16 %v2356
    %v2540 = vunpack.c.l.b16 %v2357
    %v2541 = vunpack.c.h.b16 %v2357
    %v2542 = vunpack.c.l.b16 %v2358
    %v2543 = vunpack.c.h.b16 %v2358
    %v2544 = vunpack.c.l.b16 %v2359
    %v2545 = vunpack.c.h.b16 %v2359
    %v2546 = vunpack.c.l.b16 %v2360
    %v2547 = vunpack.c.h.b16 %v2360
    %v2548 = vunpack.c.l.b16 %v2361
    %v2549 = vunpack.c.h.b16 %v2361
    %v2550 = vunpack.c.l.b16 %v2362
    %v2551 = vunpack.c.h.b16 %v2362
    %v2552 = vunpack.c.l.b16 %v2363
    %v2553 = vunpack.c.h.b16 %v2363
    %v2554 = vunpack.c.l.b16 %v2364
    %v2555 = vunpack.c.h.b16 %v2364
    %v2556 = vunpack.c.l.b16 %v2365
    %v2557 = vunpack.c.h.b16 %v2365
    %v2558 = vunpack.c.l.b16 %v2366
    %v2559 = vunpack.c.h.b16 %v2366
    %v2560 = vunpack.c.l.b16 %v2367
    %v2561 = vunpack.c.h.b16 %v2367
    %v2562 = vunpack.c.l.b16 %v2368
    %v2563 = vunpack.c.h.b16 %v2368
    %v2564 = vunpack.c.l.b16 %v2369
    %v2565 = vunpack.c.h.b16 %v2369
    %v2566 = vpack.c.b16 %v2440, %v2438
    %v2567 = vpack.c.b16 %v2441, %v2439
    %v2568 = vpack.c.b16 %v2444, %v2442
    %v2569 = vpack.c.b16 %v2445, %v2443
    %v2570 = vpack.c.b16 %v2448, %v2446
    %v2571 = vpack.c.b16 %v2449, %v2447
    %v2572 = vpack.c.b16 %v2452, %v2450
    %v2573 = vpack.c.b16 %v2453, %v2451
    %v2574 = vpack.c.b16 %v2456, %v2454
    %v2575 = vpack.c.b16 %v2457, %v2455
    %v2576 = vpack.c.b16 %v2460, %v2458
    %v2577 = vpack.c.b16 %v2461, %v2459
    %v2578 = vpack.c.b16 %v2464, %v2462
    %v2579 = vpack.c.b16 %v2465, %v2463
    %v2580 = vpack.c.b16 %v2468, %v2466
    %v2581 = vpack.c.b16 %v2469, %v2467
    %v2582 = vpack.c.b16 %v2472, %v2470
    %v2583 = vpack.c.b16 %v2473, %v2471
    %v2584 = vpack.c.b16 %v2476, %v2474
    %v2585 = vpack.c.b16 %v2477, %v2475
    %v2586 = vpack.c.b16 %v2480, %v2478
    %v2587 = vpack.c.b16 %v2481, %v2479
    %v2588 = vpack.c.b16 %v2484, %v2482
    %v2589 = vpack.c.b16 %v2485, %v2483
    %v2590 = vpack.c.b16 %v2488, %v2486
    %v2591 = vpack.c.b16 %v2489, %v2487
    %v2592 = vpack.c.b16 %v2492, %v2490
    %v2593 = vpack.c.b16 %v2493, %v2491
    %v2594 = vpack.c.b16 %v2496, %v2494
    %v2595 = vpack.c.b16 %v2497, %v2495
    %v2596 = vpack.c.b16 %v2500, %v2498
    %v2597 = vpack.c.b16 %v2501, %v2499
    %v2598 = vpack.c.b16 %v2504, %v2502
    %v2599 = vpack.c.b16 %v2505, %v2503
    %v2600 = vpack.c.b16 %v2508, %v2506
    %v2601 = vpack.c.b16 %v2509, %v2507
    %v2602 = vpack.c.b16 %v2512, %v2510
    %v2603 = vpack.c.b16 %v2513, %v2511
    %v2604 = vpack.c.b16 %v2516, %v2514
    %v2605 = vpack.c.b16 %v2517, %v2515
    %v2606 = vpack.c.b16 %v2520, %v2518
    %v2607 = vpack.c.b16 %v2521, %v2519
    %v2608 = vpack.c.b16 %v2524, %v2522
    %v2609 = vpack.c.b16 %v2525, %v2523
    %v2610 = vpack.c.b16 %v2528, %v2526
    %v2611 = vpack.c.b16 %v2529, %v2527
    %v2612 = vpack.c.b16 %v2532, %v2530
    %v2613 = vpack.c.b16 %v2533, %v2531
    %v2614 = vpack.c.b16 %v2536, %v2534
    %v2615 = vpack.c.b16 %v2537, %v2535
    %v2616 = vpack.c.b16 %v2540, %v2538
    %v2617 = vpack.c.b16 %v2541, %v2539
    %v2618 = vpack.c.b16 %v2544, %v2542
    %v2619 = vpack.c.b16 %v2545, %v2543
    %v2620 = vpack.c.b16 %v2548, %v2546
    %v2621 = vpack.c.b16 %v2549, %v2547
    %v2622 = vpack.c.b16 %v2552, %v2550
    %v2623 = vpack.c.b16 %v2553, %v2551
    %v2624 = vpack.c.b16 %v2556, %v2554
    %v2625 = vpack.c.b16 %v2557, %v2555
    %v2626 = vpack.c.b16 %v2560, %v2558
    %v2627 = vpack.c.b16 %v2561, %v2559
    %v2628 = vpack.c.b16 %v2564, %v2562
    %v2629 = vpack.c.b16 %v2565, %v2563
    %2694 = vmatprep.subr.bf16.mxu0 %v2567
    %2695 = vmatpush1.bf16.msra.mxu0 %v2566
    %2696 = vmatprep.subr.bf16.mxu0 %v2569
    %2697 = vmatpush1.bf16.msra.mxu0 %v2568
    %2698 = vmatprep.subr.bf16.mxu0 %v2571
    %2699 = vmatpush1.bf16.msra.mxu0 %v2570
    %2700 = vmatprep.subr.bf16.mxu0 %v2573
    %2701 = vmatpush1.bf16.msra.mxu0 %v2572
    %2702 = vmatprep.subr.bf16.mxu0 %v2575
    %2703 = vmatpush1.bf16.msra.mxu0 %v2574
    %2704 = vmatprep.subr.bf16.mxu0 %v2577
    %2705 = vmatpush1.bf16.msra.mxu0 %v2576
    %2706 = vmatprep.subr.bf16.mxu0 %v2579
    %2707 = vmatpush1.bf16.msra.mxu0 %v2578
    %2708 = vmatprep.subr.bf16.mxu0 %v2581
    %2709 = vmatpush1.bf16.msra.mxu0 %v2580
    %2710 = vmatprep.subr.bf16.mxu0 %v2583
    %2711 = vmatpush1.bf16.msra.mxu0 %v2582
    %2712 = vmatprep.subr.bf16.mxu0 %v2585
    %2713 = vmatpush1.bf16.msra.mxu0 %v2584
    %2714 = vmatprep.subr.bf16.mxu0 %v2587
    %2715 = vmatpush1.bf16.msra.mxu0 %v2586
    %2716 = vmatprep.subr.bf16.mxu0 %v2589
    %2717 = vmatpush1.bf16.msra.mxu0 %v2588
    %2718 = vmatprep.subr.bf16.mxu0 %v2591
    %2719 = vmatpush1.bf16.msra.mxu0 %v2590
    %2720 = vmatprep.subr.bf16.mxu0 %v2593
    %2721 = vmatpush1.bf16.msra.mxu0 %v2592
    %2722 = vmatprep.subr.bf16.mxu0 %v2595
    %2723 = vmatpush1.bf16.msra.mxu0 %v2594
    %2724 = vmatprep.subr.bf16.mxu0 %v2597
    %2725 = vmatpush1.bf16.msra.mxu0 %v2596
    %2726 = vmatprep.mubr.bf16.mxu0 %v2371
    %2727 = vmatmul.mubr.bf16.gmra.mrb[0].mxu0 %v2370
    %v2728 = vpop.f32.mrb[0].mxu0
    %v2729 = vadd.f32 0.0, %v2728
    %v2730 = vpop.f32.mrb[0].mxu0
    %v2731 = vadd.f32 0.0, %v2730
    %v2732 = vpop.f32.mrb[0].mxu0
    %v2733 = vpop.f32.mrb[0].mxu0
    %2734 = vdwg.mxu0
    %2735 = vmatprep.subr.bf16.mxu0 %v2599
    %2736 = vmatpush1.bf16.msra.mxu0 %v2598
    %2737 = vmatprep.subr.bf16.mxu0 %v2601
    %2738 = vmatpush1.bf16.msra.mxu0 %v2600
    %2739 = vmatprep.subr.bf16.mxu0 %v2603
    %2740 = vmatpush1.bf16.msra.mxu0 %v2602
    %2741 = vmatprep.subr.bf16.mxu0 %v2605
    %2742 = vmatpush1.bf16.msra.mxu0 %v2604
    %2743 = vmatprep.subr.bf16.mxu0 %v2607
    %2744 = vmatpush1.bf16.msra.mxu0 %v2606
    %2745 = vmatprep.subr.bf16.mxu0 %v2609
    %2746 = vmatpush1.bf16.msra.mxu0 %v2608
    %2747 = vmatprep.subr.bf16.mxu0 %v2611
    %2748 = vmatpush1.bf16.msra.mxu0 %v2610
    %2749 = vmatprep.subr.bf16.mxu0 %v2613
    %2750 = vmatpush1.bf16.msra.mxu0 %v2612
    %2751 = vmatprep.subr.bf16.mxu0 %v2615
    %2752 = vmatpush1.bf16.msra.mxu0 %v2614
    %2753 = vmatprep.subr.bf16.mxu0 %v2617
    %2754 = vmatpush1.bf16.msra.mxu0 %v2616
    %2755 = vmatprep.subr.bf16.mxu0 %v2619
    %2756 = vmatpush1.bf16.msra.mxu0 %v2618
    %2757 = vmatprep.subr.bf16.mxu0 %v2621
    %2758 = vmatpush1.bf16.msra.mxu0 %v2620
    %2759 = vmatprep.subr.bf16.mxu0 %v2623
    %2760 = vmatpush1.bf16.msra.mxu0 %v2622
    %2761 = vmatprep.subr.bf16.mxu0 %v2625
    %2762 = vmatpush1.bf16.msra.mxu0 %v2624
    %2763 = vmatprep.subr.bf16.mxu0 %v2627
    %2764 = vmatpush1.bf16.msra.mxu0 %v2626
    %2765 = vmatprep.subr.bf16.mxu0 %v2629
    %2766 = vmatpush1.bf16.msra.mxu0 %v2628
    %2767 = vmatprep.mubr.bf16.mxu0 %v2373
    %2768 = vmatmul.mubr.bf16.gmra.mrb[0].mxu0 %v2372
    %v2769 = vpop.f32.mrb[0].mxu0
    %v2770 = vadd.f32 %v2729, %v2769
    %v2771 = vpop.f32.mrb[0].mxu0
    %v2772 = vadd.f32 %v2731, %v2771
    %v2773 = vpop.f32.mrb[0].mxu0
    %v2774 = vpop.f32.mrb[0].mxu0
    %2775 = vdwg.mxu0
    %s2776 = scalar_lea.vmem %s3, 68
    %v2777 = vld [vmem:[%s2776] ss:$8 sm:$0x3]
    %s2778 = scalar_lea.vmem %s3, 69
    %v2779 = vld [vmem:[%s2778] ss:$8 sm:$0x3]
    %v2780 = vrot.slane %v2770, 4
    %v2781 = vadd.f32 %v2770, %v2780
    %v2782 = vrot.slane %v2781, 2
    %v2783 = vadd.f32 %v2781, %v2782
    %v2784 = vrot.slane %v2783, 1
    %v2785 = vadd.f32 %v2783, %v2784
    %v2786 = vrot.slane %v2772, 4
    %v2787 = vadd.f32 %v2772, %v2786
    %v2788 = vrot.slane %v2787, 2
    %v2789 = vadd.f32 %v2787, %v2788
    %v2790 = vrot.slane %v2789, 1
    %v2791 = vadd.f32 %v2789, %v2790
    %v2792 = vmul.f32 %v2785, %v301
    %v2793 = vmul.f32 %v2791, %v301
    %v2794 = vmul.f32 %v2770, %v2770
    %v2795 = vmul.f32 %v2772, %v2772
    %v2796 = vrot.slane %v2794, 4
    %v2797 = vadd.f32 %v2794, %v2796
    %v2798 = vrot.slane %v2797, 2
    %v2799 = vadd.f32 %v2797, %v2798
    %v2800 = vrot.slane %v2799, 1
    %v2801 = vadd.f32 %v2799, %v2800
    %v2802 = vrot.slane %v2795, 4
    %v2803 = vadd.f32 %v2795, %v2802
    %v2804 = vrot.slane %v2803, 2
    %v2805 = vadd.f32 %v2803, %v2804
    %v2806 = vrot.slane %v2805, 1
    %v2807 = vadd.f32 %v2805, %v2806
    %v2808 = vmul.f32 %v2801, %v301
    %v2809 = vmul.f32 %v2807, %v301
    %v2810 = vmul.f32 %v2792, %v2792
    %v2811 = vmul.f32 %v2793, %v2793
    %v2812 = vsub.f32 %v2808, %v2810
    %v2813 = vsub.f32 %v2809, %v2811
    %v2814 = vadd.f32 %v2812, 1e-05
    %v2815 = vadd.f32 %v2813, 1e-05
    %v2816 = vrsqrt.pop %v2814
    %v2817 = vrsqrt.pop %v2815
    %v2820 = vcombine.low %v2816, %v2817
    %v2822 = vunpack.c.l.s4 1966171168
    %v2823 = vunpack.c.0.s8 %v2822
    %v2824 = vlaneseq
    %v2825 = vshrl.u32 %v2824, 7
    %v2826 = vsub.s32 %v2823, %v2825
    %v2827 = vrot.slane %v2820, %v2826
    %v2829 = vunpack.c.l.s4 1966171168
    %v2830 = vunpack.c.0.s8 %v2829
    %v2831 = vlaneseq
    %v2832 = vshrl.u32 %v2831, 7
    %v2833 = vsub.s32 %v2830, %v2832
    %v2834 = vrot.slane %v2827, %v2833
    %v2836 = vmul.f32 %v2777, %v2834
    %v2838 = vlaneseq
    %v2839 = vshrl.u32 %v2838, 7
    %v2840 = vsub.s32 0, %v2839
    %v2841 = vrot.slane %v2836, %v2840
    %v2842 = vlaneseq
    %v2843 = vshrl.u32 %v2842, 7
    %v2844 = vsub.s32 1, %v2843
    %v2845 = vrot.slane %v2836, %v2844
    %v2848 = vmul.f32 %v2770, %v2841
    %v2849 = vmul.f32 %v2772, %v2845
    %v2850 = vmul.f32 %v2792, %v2841
    %v2851 = vmul.f32 %v2793, %v2845
    %v2854 = vcombine.low %v2850, %v2851
    %v2856 = vunpack.c.l.s4 1966171168
    %v2857 = vunpack.c.0.s8 %v2856
    %v2858 = vlaneseq
    %v2859 = vshrl.u32 %v2858, 7
    %v2860 = vsub.s32 %v2857, %v2859
    %v2861 = vrot.slane %v2854, %v2860
    %v2863 = vunpack.c.l.s4 1966171168
    %v2864 = vunpack.c.0.s8 %v2863
    %v2865 = vlaneseq
    %v2866 = vshrl.u32 %v2865, 7
    %v2867 = vsub.s32 %v2864, %v2866
    %v2868 = vrot.slane %v2861, %v2867
    %v2870 = vsub.f32 %v2779, %v2868
    %v2872 = vlaneseq
    %v2873 = vshrl.u32 %v2872, 7
    %v2874 = vsub.s32 0, %v2873
    %v2875 = vrot.slane %v2870, %v2874
    %v2876 = vlaneseq
    %v2877 = vshrl.u32 %v2876, 7
    %v2878 = vsub.s32 1, %v2877
    %v2879 = vrot.slane %v2870, %v2878
    %v2882 = vadd.f32 %v2848, %v2875
    %v2883 = vadd.f32 %v2849, %v2879
    %v2884 = vadd.f32 %v2882, %v502
    %v2885 = vadd.f32 %v2883, %v503
    %v2886 = vmax.f32 %v2884, 0.0
    %v2887 = vmax.f32 %v2885, 0.0
    %v2888 = vld [vmem:[#allocation5 + $0x600] sm:$0xff]
    %v2889 = vld [vmem:[#allocation5 + $0x608] sm:$0xff]
    %v2890 = vld [vmem:[#allocation5 + $0x610] sm:$0xff]
    %v2891 = vld [vmem:[#allocation5 + $0x618] sm:$0xff]
    %v2892 = vld [vmem:[#allocation5 + $0x620] sm:$0xff]
    %v2893 = vld [vmem:[#allocation5 + $0x628] sm:$0xff]
    %v2894 = vld [vmem:[#allocation5 + $0x630] sm:$0xff]
    %v2895 = vld [vmem:[#allocation5 + $0x638] sm:$0xff]
    %v2896 = vld [vmem:[#allocation5 + $0x640] sm:$0xff]
    %v2897 = vld [vmem:[#allocation5 + $0x648] sm:$0xff]
    %v2898 = vld [vmem:[#allocation5 + $0x650] sm:$0xff]
    %v2899 = vld [vmem:[#allocation5 + $0x658] sm:$0xff]
    %v2900 = vld [vmem:[#allocation5 + $0x660] sm:$0xff]
    %v2901 = vld [vmem:[#allocation5 + $0x668] sm:$0xff]
    %v2902 = vld [vmem:[#allocation5 + $0x670] sm:$0xff]
    %v2903 = vld [vmem:[#allocation5 + $0x678] sm:$0xff]
    %v2904 = vld [vmem:[#allocation5 + $0x680] sm:$0xff]
    %v2905 = vld [vmem:[#allocation5 + $0x688] sm:$0xff]
    %v2906 = vld [vmem:[#allocation5 + $0x690] sm:$0xff]
    %v2907 = vld [vmem:[#allocation5 + $0x698] sm:$0xff]
    %v2908 = vld [vmem:[#allocation5 + $0x6a0] sm:$0xff]
    %v2909 = vld [vmem:[#allocation5 + $0x6a8] sm:$0xff]
    %v2910 = vld [vmem:[#allocation5 + $0x6b0] sm:$0xff]
    %v2911 = vld [vmem:[#allocation5 + $0x6b8] sm:$0xff]
    %v2912 = vld [vmem:[#allocation5 + $0x6c0] sm:$0xff]
    %v2913 = vld [vmem:[#allocation5 + $0x6c8] sm:$0xff]
    %v2914 = vld [vmem:[#allocation5 + $0x6d0] sm:$0xff]
    %v2915 = vld [vmem:[#allocation5 + $0x6d8] sm:$0xff]
    %v2916 = vld [vmem:[#allocation5 + $0x6e0] sm:$0xff]
    %v2917 = vld [vmem:[#allocation5 + $0x6e8] sm:$0xff]
    %v2918 = vld [vmem:[#allocation5 + $0x6f0] sm:$0xff]
    %v2919 = vld [vmem:[#allocation5 + $0x6f8] sm:$0xff]
    %v2920 = vld [vmem:[#allocation5 + $0x700] sm:$0xff]
    %v2921 = vld [vmem:[#allocation5 + $0x708] sm:$0xff]
    %v2922 = vld [vmem:[#allocation5 + $0x710] sm:$0xff]
    %v2923 = vld [vmem:[#allocation5 + $0x718] sm:$0xff]
    %v2924 = vld [vmem:[#allocation5 + $0x720] sm:$0xff]
    %v2925 = vld [vmem:[#allocation5 + $0x728] sm:$0xff]
    %v2926 = vld [vmem:[#allocation5 + $0x730] sm:$0xff]
    %v2927 = vld [vmem:[#allocation5 + $0x738] sm:$0xff]
    %v2928 = vld [vmem:[#allocation5 + $0x740] sm:$0xff]
    %v2929 = vld [vmem:[#allocation5 + $0x748] sm:$0xff]
    %v2930 = vld [vmem:[#allocation5 + $0x750] sm:$0xff]
    %v2931 = vld [vmem:[#allocation5 + $0x758] sm:$0xff]
    %v2932 = vld [vmem:[#allocation5 + $0x760] sm:$0xff]
    %v2933 = vld [vmem:[#allocation5 + $0x768] sm:$0xff]
    %v2934 = vld [vmem:[#allocation5 + $0x770] sm:$0xff]
    %v2935 = vld [vmem:[#allocation5 + $0x778] sm:$0xff]
    %v2936 = vld [vmem:[#allocation5 + $0x780] sm:$0xff]
    %v2937 = vld [vmem:[#allocation5 + $0x788] sm:$0xff]
    %v2938 = vld [vmem:[#allocation5 + $0x790] sm:$0xff]
    %v2939 = vld [vmem:[#allocation5 + $0x798] sm:$0xff]
    %v2940 = vld [vmem:[#allocation5 + $0x7a0] sm:$0xff]
    %v2941 = vld [vmem:[#allocation5 + $0x7a8] sm:$0xff]
    %v2942 = vld [vmem:[#allocation5 + $0x7b0] sm:$0xff]
    %v2943 = vld [vmem:[#allocation5 + $0x7b8] sm:$0xff]
    %v2944 = vld [vmem:[#allocation5 + $0x7c0] sm:$0xff]
    %v2945 = vld [vmem:[#allocation5 + $0x7c8] sm:$0xff]
    %v2946 = vld [vmem:[#allocation5 + $0x7d0] sm:$0xff]
    %v2947 = vld [vmem:[#allocation5 + $0x7d8] sm:$0xff]
    %v2948 = vld [vmem:[#allocation5 + $0x7e0] sm:$0xff]
    %v2949 = vld [vmem:[#allocation5 + $0x7e8] sm:$0xff]
    %v2950 = vld [vmem:[#allocation5 + $0x7f0] sm:$0xff]
    %v2951 = vld [vmem:[#allocation5 + $0x7f8] sm:$0xff]
    %v2952 = vpack.c.bf16 %v2886, %v2886
    %v2953 = vpack.c.bf16 %v2887, %v2887
    %v3018 = vunpack.c.l.b16 %v2888
    %v3019 = vunpack.c.h.b16 %v2888
    %v3020 = vunpack.c.l.b16 %v2889
    %v3021 = vunpack.c.h.b16 %v2889
    %v3022 = vunpack.c.l.b16 %v2890
    %v3023 = vunpack.c.h.b16 %v2890
    %v3024 = vunpack.c.l.b16 %v2891
    %v3025 = vunpack.c.h.b16 %v2891
    %v3026 = vunpack.c.l.b16 %v2892
    %v3027 = vunpack.c.h.b16 %v2892
    %v3028 = vunpack.c.l.b16 %v2893
    %v3029 = vunpack.c.h.b16 %v2893
    %v3030 = vunpack.c.l.b16 %v2894
    %v3031 = vunpack.c.h.b16 %v2894
    %v3032 = vunpack.c.l.b16 %v2895
    %v3033 = vunpack.c.h.b16 %v2895
    %v3034 = vunpack.c.l.b16 %v2896
    %v3035 = vunpack.c.h.b16 %v2896
    %v3036 = vunpack.c.l.b16 %v2897
    %v3037 = vunpack.c.h.b16 %v2897
    %v3038 = vunpack.c.l.b16 %v2898
    %v3039 = vunpack.c.h.b16 %v2898
    %v3040 = vunpack.c.l.b16 %v2899
    %v3041 = vunpack.c.h.b16 %v2899
    %v3042 = vunpack.c.l.b16 %v2900
    %v3043 = vunpack.c.h.b16 %v2900
    %v3044 = vunpack.c.l.b16 %v2901
    %v3045 = vunpack.c.h.b16 %v2901
    %v3046 = vunpack.c.l.b16 %v2902
    %v3047 = vunpack.c.h.b16 %v2902
    %v3048 = vunpack.c.l.b16 %v2903
    %v3049 = vunpack.c.h.b16 %v2903
    %v3050 = vunpack.c.l.b16 %v2904
    %v3051 = vunpack.c.h.b16 %v2904
    %v3052 = vunpack.c.l.b16 %v2905
    %v3053 = vunpack.c.h.b16 %v2905
    %v3054 = vunpack.c.l.b16 %v2906
    %v3055 = vunpack.c.h.b16 %v2906
    %v3056 = vunpack.c.l.b16 %v2907
    %v3057 = vunpack.c.h.b16 %v2907
    %v3058 = vunpack.c.l.b16 %v2908
    %v3059 = vunpack.c.h.b16 %v2908
    %v3060 = vunpack.c.l.b16 %v2909
    %v3061 = vunpack.c.h.b16 %v2909
    %v3062 = vunpack.c.l.b16 %v2910
    %v3063 = vunpack.c.h.b16 %v2910
    %v3064 = vunpack.c.l.b16 %v2911
    %v3065 = vunpack.c.h.b16 %v2911
    %v3066 = vunpack.c.l.b16 %v2912
    %v3067 = vunpack.c.h.b16 %v2912
    %v3068 = vunpack.c.l.b16 %v2913
    %v3069 = vunpack.c.h.b16 %v2913
    %v3070 = vunpack.c.l.b16 %v2914
    %v3071 = vunpack.c.h.b16 %v2914
    %v3072 = vunpack.c.l.b16 %v2915
    %v3073 = vunpack.c.h.b16 %v2915
    %v3074 = vunpack.c.l.b16 %v2916
    %v3075 = vunpack.c.h.b16 %v2916
    %v3076 = vunpack.c.l.b16 %v2917
    %v3077 = vunpack.c.h.b16 %v2917
    %v3078 = vunpack.c.l.b16 %v2918
    %v3079 = vunpack.c.h.b16 %v2918
    %v3080 = vunpack.c.l.b16 %v2919
    %v3081 = vunpack.c.h.b16 %v2919
    %v3082 = vunpack.c.l.b16 %v2920
    %v3083 = vunpack.c.h.b16 %v2920
    %v3084 = vunpack.c.l.b16 %v2921
    %v3085 = vunpack.c.h.b16 %v2921
    %v3086 = vunpack.c.l.b16 %v2922
    %v3087 = vunpack.c.h.b16 %v2922
    %v3088 = vunpack.c.l.b16 %v2923
    %v3089 = vunpack.c.h.b16 %v2923
    %v3090 = vunpack.c.l.b16 %v2924
    %v3091 = vunpack.c.h.b16 %v2924
    %v3092 = vunpack.c.l.b16 %v2925
    %v3093 = vunpack.c.h.b16 %v2925
    %v3094 = vunpack.c.l.b16 %v2926
    %v3095 = vunpack.c.h.b16 %v2926
    %v3096 = vunpack.c.l.b16 %v2927
    %v3097 = vunpack.c.h.b16 %v2927
    %v3098 = vunpack.c.l.b16 %v2928
    %v3099 = vunpack.c.h.b16 %v2928
    %v3100 = vunpack.c.l.b16 %v2929
    %v3101 = vunpack.c.h.b16 %v2929
    %v3102 = vunpack.c.l.b16 %v2930
    %v3103 = vunpack.c.h.b16 %v2930
    %v3104 = vunpack.c.l.b16 %v2931
    %v3105 = vunpack.c.h.b16 %v2931
    %v3106 = vunpack.c.l.b16 %v2932
    %v3107 = vunpack.c.h.b16 %v2932
    %v3108 = vunpack.c.l.b16 %v2933
    %v3109 = vunpack.c.h.b16 %v2933
    %v3110 = vunpack.c.l.b16 %v2934
    %v3111 = vunpack.c.h.b16 %v2934
    %v3112 = vunpack.c.l.b16 %v2935
    %v3113 = vunpack.c.h.b16 %v2935
    %v3114 = vunpack.c.l.b16 %v2936
    %v3115 = vunpack.c.h.b16 %v2936
    %v3116 = vunpack.c.l.b16 %v2937
    %v3117 = vunpack.c.h.b16 %v2937
    %v3118 = vunpack.c.l.b16 %v2938
    %v3119 = vunpack.c.h.b16 %v2938
    %v3120 = vunpack.c.l.b16 %v2939
    %v3121 = vunpack.c.h.b16 %v2939
    %v3122 = vunpack.c.l.b16 %v2940
    %v3123 = vunpack.c.h.b16 %v2940
    %v3124 = vunpack.c.l.b16 %v2941
    %v3125 = vunpack.c.h.b16 %v2941
    %v3126 = vunpack.c.l.b16 %v2942
    %v3127 = vunpack.c.h.b16 %v2942
    %v3128 = vunpack.c.l.b16 %v2943
    %v3129 = vunpack.c.h.b16 %v2943
    %v3130 = vunpack.c.l.b16 %v2944
    %v3131 = vunpack.c.h.b16 %v2944
    %v3132 = vunpack.c.l.b16 %v2945
    %v3133 = vunpack.c.h.b16 %v2945
    %v3134 = vunpack.c.l.b16 %v2946
    %v3135 = vunpack.c.h.b16 %v2946
    %v3136 = vunpack.c.l.b16 %v2947
    %v3137 = vunpack.c.h.b16 %v2947
    %v3138 = vunpack.c.l.b16 %v2948
    %v3139 = vunpack.c.h.b16 %v2948
    %v3140 = vunpack.c.l.b16 %v2949
    %v3141 = vunpack.c.h.b16 %v2949
    %v3142 = vunpack.c.l.b16 %v2950
    %v3143 = vunpack.c.h.b16 %v2950
    %v3144 = vunpack.c.l.b16 %v2951
    %v3145 = vunpack.c.h.b16 %v2951
    %v3146 = vpack.c.b16 %v3022, %v3018
    %v3147 = vpack.c.b16 %v3023, %v3019
    %v3148 = vpack.c.b16 %v3024, %v3020
    %v3149 = vpack.c.b16 %v3025, %v3021
    %v3150 = vpack.c.b16 %v3030, %v3026
    %v3151 = vpack.c.b16 %v3031, %v3027
    %v3152 = vpack.c.b16 %v3032, %v3028
    %v3153 = vpack.c.b16 %v3033, %v3029
    %v3154 = vpack.c.b16 %v3038, %v3034
    %v3155 = vpack.c.b16 %v3039, %v3035
    %v3156 = vpack.c.b16 %v3040, %v3036
    %v3157 = vpack.c.b16 %v3041, %v3037
    %v3158 = vpack.c.b16 %v3046, %v3042
    %v3159 = vpack.c.b16 %v3047, %v3043
    %v3160 = vpack.c.b16 %v3048, %v3044
    %v3161 = vpack.c.b16 %v3049, %v3045
    %v3162 = vpack.c.b16 %v3054, %v3050
    %v3163 = vpack.c.b16 %v3055, %v3051
    %v3164 = vpack.c.b16 %v3056, %v3052
    %v3165 = vpack.c.b16 %v3057, %v3053
    %v3166 = vpack.c.b16 %v3062, %v3058
    %v3167 = vpack.c.b16 %v3063, %v3059
    %v3168 = vpack.c.b16 %v3064, %v3060
    %v3169 = vpack.c.b16 %v3065, %v3061
    %v3170 = vpack.c.b16 %v3070, %v3066
    %v3171 = vpack.c.b16 %v3071, %v3067
    %v3172 = vpack.c.b16 %v3072, %v3068
    %v3173 = vpack.c.b16 %v3073, %v3069
    %v3174 = vpack.c.b16 %v3078, %v3074
    %v3175 = vpack.c.b16 %v3079, %v3075
    %v3176 = vpack.c.b16 %v3080, %v3076
    %v3177 = vpack.c.b16 %v3081, %v3077
    %v3178 = vpack.c.b16 %v3086, %v3082
    %v3179 = vpack.c.b16 %v3087, %v3083
    %v3180 = vpack.c.b16 %v3088, %v3084
    %v3181 = vpack.c.b16 %v3089, %v3085
    %v3182 = vpack.c.b16 %v3094, %v3090
    %v3183 = vpack.c.b16 %v3095, %v3091
    %v3184 = vpack.c.b16 %v3096, %v3092
    %v3185 = vpack.c.b16 %v3097, %v3093
    %v3186 = vpack.c.b16 %v3102, %v3098
    %v3187 = vpack.c.b16 %v3103, %v3099
    %v3188 = vpack.c.b16 %v3104, %v3100
    %v3189 = vpack.c.b16 %v3105, %v3101
    %v3190 = vpack.c.b16 %v3110, %v3106
    %v3191 = vpack.c.b16 %v3111, %v3107
    %v3192 = vpack.c.b16 %v3112, %v3108
    %v3193 = vpack.c.b16 %v3113, %v3109
    %v3194 = vpack.c.b16 %v3118, %v3114
    %v3195 = vpack.c.b16 %v3119, %v3115
    %v3196 = vpack.c.b16 %v3120, %v3116
    %v3197 = vpack.c.b16 %v3121, %v3117
    %v3198 = vpack.c.b16 %v3126, %v3122
    %v3199 = vpack.c.b16 %v3127, %v3123
    %v3200 = vpack.c.b16 %v3128, %v3124
    %v3201 = vpack.c.b16 %v3129, %v3125
    %v3202 = vpack.c.b16 %v3134, %v3130
    %v3203 = vpack.c.b16 %v3135, %v3131
    %v3204 = vpack.c.b16 %v3136, %v3132
    %v3205 = vpack.c.b16 %v3137, %v3133
    %v3206 = vpack.c.b16 %v3142, %v3138
    %v3207 = vpack.c.b16 %v3143, %v3139
    %v3208 = vpack.c.b16 %v3144, %v3140
    %v3209 = vpack.c.b16 %v3145, %v3141
    %3274 = vmatprep.subr.bf16.mxu0 %v3147
    %3275 = vmatpush1.bf16.msra.mxu0 %v3146
    %3276 = vmatprep.subr.bf16.mxu0 %v3151
    %3277 = vmatpush1.bf16.msra.mxu0 %v3150
    %3278 = vmatprep.subr.bf16.mxu0 %v3155
    %3279 = vmatpush1.bf16.msra.mxu0 %v3154
    %3280 = vmatprep.subr.bf16.mxu0 %v3159
    %3281 = vmatpush1.bf16.msra.mxu0 %v3158
    %3282 = vmatprep.subr.bf16.mxu0 %v3163
    %3283 = vmatpush1.bf16.msra.mxu0 %v3162
    %3284 = vmatprep.subr.bf16.mxu0 %v3167
    %3285 = vmatpush1.bf16.msra.mxu0 %v3166
    %3286 = vmatprep.subr.bf16.mxu0 %v3171
    %3287 = vmatpush1.bf16.msra.mxu0 %v3170
    %3288 = vmatprep.subr.bf16.mxu0 %v3175
    %3289 = vmatpush1.bf16.msra.mxu0 %v3174
    %3290 = vmatprep.subr.bf16.mxu0 %v3179
    %3291 = vmatpush1.bf16.msra.mxu0 %v3178
    %3292 = vmatprep.subr.bf16.mxu0 %v3183
    %3293 = vmatpush1.bf16.msra.mxu0 %v3182
    %3294 = vmatprep.subr.bf16.mxu0 %v3187
    %3295 = vmatpush1.bf16.msra.mxu0 %v3186
    %3296 = vmatprep.subr.bf16.mxu0 %v3191
    %3297 = vmatpush1.bf16.msra.mxu0 %v3190
    %3298 = vmatprep.subr.bf16.mxu0 %v3195
    %3299 = vmatpush1.bf16.msra.mxu0 %v3194
    %3300 = vmatprep.subr.bf16.mxu0 %v3199
    %3301 = vmatpush1.bf16.msra.mxu0 %v3198
    %3302 = vmatprep.subr.bf16.mxu0 %v3203
    %3303 = vmatpush1.bf16.msra.mxu0 %v3202
    %3304 = vmatprep.subr.bf16.mxu0 %v3207
    %3305 = vmatpush1.bf16.msra.mxu0 %v3206
    %3306 = vmatprep.mubr.bf16.mxu0 %v2953
    %3307 = vmatmul.mubr.bf16.gmra.mrb[0].mxu0 %v2952
    %v3308 = vpop.f32.mrb[0].mxu0
    %v3309 = vadd.f32 0.0, %v3308
    %v3310 = vpop.f32.mrb[0].mxu0
    %v3311 = vadd.f32 0.0, %v3310
    %v3312 = vpop.f32.mrb[0].mxu0
    %v3313 = vpop.f32.mrb[0].mxu0
    %3314 = vdwg.mxu0
    %3315 = vmatprep.subr.bf16.mxu0 %v3149
    %3316 = vmatpush1.bf16.msra.mxu0 %v3148
    %3317 = vmatprep.subr.bf16.mxu0 %v3153
    %3318 = vmatpush1.bf16.msra.mxu0 %v3152
    %3319 = vmatprep.subr.bf16.mxu0 %v3157
    %3320 = vmatpush1.bf16.msra.mxu0 %v3156
    %3321 = vmatprep.subr.bf16.mxu0 %v3161
    %3322 = vmatpush1.bf16.msra.mxu0 %v3160
    %3323 = vmatprep.subr.bf16.mxu0 %v3165
    %3324 = vmatpush1.bf16.msra.mxu0 %v3164
    %3325 = vmatprep.subr.bf16.mxu0 %v3169
    %3326 = vmatpush1.bf16.msra.mxu0 %v3168
    %3327 = vmatprep.subr.bf16.mxu0 %v3173
    %3328 = vmatpush1.bf16.msra.mxu0 %v3172
    %3329 = vmatprep.subr.bf16.mxu0 %v3177
    %3330 = vmatpush1.bf16.msra.mxu0 %v3176
    %3331 = vmatprep.subr.bf16.mxu0 %v3181
    %3332 = vmatpush1.bf16.msra.mxu0 %v3180
    %3333 = vmatprep.subr.bf16.mxu0 %v3185
    %3334 = vmatpush1.bf16.msra.mxu0 %v3184
    %3335 = vmatprep.subr.bf16.mxu0 %v3189
    %3336 = vmatpush1.bf16.msra.mxu0 %v3188
    %3337 = vmatprep.subr.bf16.mxu0 %v3193
    %3338 = vmatpush1.bf16.msra.mxu0 %v3192
    %3339 = vmatprep.subr.bf16.mxu0 %v3197
    %3340 = vmatpush1.bf16.msra.mxu0 %v3196
    %3341 = vmatprep.subr.bf16.mxu0 %v3201
    %3342 = vmatpush1.bf16.msra.mxu0 %v3200
    %3343 = vmatprep.subr.bf16.mxu0 %v3205
    %3344 = vmatpush1.bf16.msra.mxu0 %v3204
    %3345 = vmatprep.subr.bf16.mxu0 %v3209
    %3346 = vmatpush1.bf16.msra.mxu0 %v3208
    %3347 = vmatprep.mubr.bf16.mxu0 %v2953
    %3348 = vmatmul.mubr.bf16.gmra.mrb[0].mxu0 %v2952
    %v3349 = vpop.f32.mrb[0].mxu0
    %v3350 = vadd.f32 0.0, %v3349
    %v3351 = vpop.f32.mrb[0].mxu0
    %v3352 = vadd.f32 0.0, %v3351
    %v3353 = vpop.f32.mrb[0].mxu0
    %v3354 = vpop.f32.mrb[0].mxu0
    %3355 = vdwg.mxu0
    %s3356 = scalar_lea.vmem %s3, 100
    %v3357 = vld [vmem:[%s3356] ss:$8 sm:$0xf]
    %s3358 = scalar_lea.vmem %s3, 101
    %v3359 = vld [vmem:[%s3358] ss:$8 sm:$0xf]
    %v3360 = vrot.slane %v3309, 4
    %v3361 = vadd.f32 %v3309, %v3360
    %v3362 = vrot.slane %v3361, 2
    %v3363 = vadd.f32 %v3361, %v3362
    %v3364 = vrot.slane %v3363, 1
    %v3365 = vadd.f32 %v3363, %v3364
    %v3366 = vrot.slane %v3311, 4
    %v3367 = vadd.f32 %v3311, %v3366
    %v3368 = vrot.slane %v3367, 2
    %v3369 = vadd.f32 %v3367, %v3368
    %v3370 = vrot.slane %v3369, 1
    %v3371 = vadd.f32 %v3369, %v3370
    %v3372 = vrot.slane %v3350, 4
    %v3373 = vadd.f32 %v3350, %v3372
    %v3374 = vrot.slane %v3373, 2
    %v3375 = vadd.f32 %v3373, %v3374
    %v3376 = vrot.slane %v3375, 1
    %v3377 = vadd.f32 %v3375, %v3376
    %v3378 = vrot.slane %v3352, 4
    %v3379 = vadd.f32 %v3352, %v3378
    %v3380 = vrot.slane %v3379, 2
    %v3381 = vadd.f32 %v3379, %v3380
    %v3382 = vrot.slane %v3381, 1
    %v3383 = vadd.f32 %v3381, %v3382
    %v3384 = vmul.f32 %v3365, %v301
    %v3385 = vmul.f32 %v3371, %v301
    %v3386 = vmul.f32 %v3377, %v301
    %v3387 = vmul.f32 %v3383, %v301
    %v3388 = vmul.f32 %v3309, %v3309
    %v3389 = vmul.f32 %v3311, %v3311
    %v3390 = vmul.f32 %v3350, %v3350
    %v3391 = vmul.f32 %v3352, %v3352
    %v3392 = vrot.slane %v3388, 4
    %v3393 = vadd.f32 %v3388, %v3392
    %v3394 = vrot.slane %v3393, 2
    %v3395 = vadd.f32 %v3393, %v3394
    %v3396 = vrot.slane %v3395, 1
    %v3397 = vadd.f32 %v3395, %v3396
    %v3398 = vrot.slane %v3389, 4
    %v3399 = vadd.f32 %v3389, %v3398
    %v3400 = vrot.slane %v3399, 2
    %v3401 = vadd.f32 %v3399, %v3400
    %v3402 = vrot.slane %v3401, 1
    %v3403 = vadd.f32 %v3401, %v3402
    %v3404 = vrot.slane %v3390, 4
    %v3405 = vadd.f32 %v3390, %v3404
    %v3406 = vrot.slane %v3405, 2
    %v3407 = vadd.f32 %v3405, %v3406
    %v3408 = vrot.slane %v3407, 1
    %v3409 = vadd.f32 %v3407, %v3408
    %v3410 = vrot.slane %v3391, 4
    %v3411 = vadd.f32 %v3391, %v3410
    %v3412 = vrot.slane %v3411, 2
    %v3413 = vadd.f32 %v3411, %v3412
    %v3414 = vrot.slane %v3413, 1
    %v3415 = vadd.f32 %v3413, %v3414
    %v3416 = vmul.f32 %v3397, %v301
    %v3417 = vmul.f32 %v3403, %v301
    %v3418 = vmul.f32 %v3409, %v301
    %v3419 = vmul.f32 %v3415, %v301
    %v3420 = vmul.f32 %v3384, %v3384
    %v3421 = vmul.f32 %v3385, %v3385
    %v3422 = vmul.f32 %v3386, %v3386
    %v3423 = vmul.f32 %v3387, %v3387
    %v3424 = vsub.f32 %v3416, %v3420
    %v3425 = vsub.f32 %v3417, %v3421
    %v3426 = vsub.f32 %v3418, %v3422
    %v3427 = vsub.f32 %v3419, %v3423
    %v3428 = vadd.f32 %v3424, 1e-05
    %v3429 = vadd.f32 %v3425, 1e-05
    %v3430 = vadd.f32 %v3426, 1e-05
    %v3431 = vadd.f32 %v3427, 1e-05
    %v3432 = vrsqrt.pop %v3428
    %v3433 = vrsqrt.pop %v3429
    %v3434 = vrsqrt.pop %v3430
    %v3435 = vrsqrt.pop %v3431
    %v3440 = vcombine.low %v3432, %v3433
    %v3441 = vcombine.low %v3434, %v3435
    %v3443 = vunpack.c.l.s4 1966171168
    %v3444 = vunpack.c.0.s8 %v3443
    %v3445 = vlaneseq
    %v3446 = vshrl.u32 %v3445, 7
    %v3447 = vsub.s32 %v3444, %v3446
    %v3448 = vrot.slane %v3440, %v3447
    %v3450 = vunpack.c.l.s4 1966171168
    %v3451 = vunpack.c.0.s8 %v3450
    %v3452 = vlaneseq
    %v3453 = vshrl.u32 %v3452, 7
    %v3454 = vsub.s32 %v3451, %v3453
    %v3455 = vrot.slane %v3441, %v3454
    %v3456 = vcombine.low %v3448, %v3455
    %v3458 = vunpack.c.l.s4 1966171168
    %v3459 = vunpack.c.0.s8 %v3458
    %v3460 = vlaneseq
    %v3461 = vshrl.u32 %v3460, 7
    %v3462 = vsub.s32 %v3459, %v3461
    %v3463 = vrot.slane %v3456, %v3462
    %v3465 = vmul.f32 %v3357, %v3463
    %v3467 = vlaneseq
    %v3468 = vshrl.u32 %v3467, 7
    %v3469 = vsub.s32 0, %v3468
    %v3470 = vrot.slane %v3465, %v3469
    %v3471 = vlaneseq
    %v3472 = vshrl.u32 %v3471, 7
    %v3473 = vsub.s32 1, %v3472
    %v3474 = vrot.slane %v3465, %v3473
    %v3475 = vlaneseq
    %v3476 = vshrl.u32 %v3475, 7
    %v3477 = vsub.s32 2, %v3476
    %v3478 = vrot.slane %v3465, %v3477
    %v3479 = vlaneseq
    %v3480 = vshrl.u32 %v3479, 7
    %v3481 = vsub.s32 3, %v3480
    %v3482 = vrot.slane %v3465, %v3481
    %v3487 = vmul.f32 %v3309, %v3470
    %v3488 = vmul.f32 %v3311, %v3474
    %v3489 = vmul.f32 %v3350, %v3478
    %v3490 = vmul.f32 %v3352, %v3482
    %v3491 = vmul.f32 %v3384, %v3470
    %v3492 = vmul.f32 %v3385, %v3474
    %v3493 = vmul.f32 %v3386, %v3478
    %v3494 = vmul.f32 %v3387, %v3482
    %v3499 = vcombine.low %v3491, %v3492
    %v3500 = vcombine.low %v3493, %v3494
    %v3502 = vunpack.c.l.s4 1966171168
    %v3503 = vunpack.c.0.s8 %v3502
    %v3504 = vlaneseq
    %v3505 = vshrl.u32 %v3504, 7
    %v3506 = vsub.s32 %v3503, %v3505
    %v3507 = vrot.slane %v3499, %v3506
    %v3509 = vunpack.c.l.s4 1966171168
    %v3510 = vunpack.c.0.s8 %v3509
    %v3511 = vlaneseq
    %v3512 = vshrl.u32 %v3511, 7
    %v3513 = vsub.s32 %v3510, %v3512
    %v3514 = vrot.slane %v3500, %v3513
    %v3515 = vcombine.low %v3507, %v3514
    %v3517 = vunpack.c.l.s4 1966171168
    %v3518 = vunpack.c.0.s8 %v3517
    %v3519 = vlaneseq
    %v3520 = vshrl.u32 %v3519, 7
    %v3521 = vsub.s32 %v3518, %v3520
    %v3522 = vrot.slane %v3515, %v3521
    %v3524 = vsub.f32 %v3359, %v3522
    %v3526 = vlaneseq
    %v3527 = vshrl.u32 %v3526, 7
    %v3528 = vsub.s32 0, %v3527
    %v3529 = vrot.slane %v3524, %v3528
    %v3530 = vlaneseq
    %v3531 = vshrl.u32 %v3530, 7
    %v3532 = vsub.s32 1, %v3531
    %v3533 = vrot.slane %v3524, %v3532
    %v3534 = vlaneseq
    %v3535 = vshrl.u32 %v3534, 7
    %v3536 = vsub.s32 2, %v3535
    %v3537 = vrot.slane %v3524, %v3536
    %v3538 = vlaneseq
    %v3539 = vshrl.u32 %v3538, 7
    %v3540 = vsub.s32 3, %v3539
    %v3541 = vrot.slane %v3524, %v3540
    %v3546 = vadd.f32 %v3487, %v3529
    %v3547 = vadd.f32 %v3488, %v3533
    %v3548 = vadd.f32 %v3489, %v3537
    %v3549 = vadd.f32 %v3490, %v3541
    %v3550 = vmax.f32 %v3546, 0.0
    %v3551 = vmax.f32 %v3547, 0.0
    %v3552 = vmax.f32 %v3548, 0.0
    %v3553 = vmax.f32 %v3549, 0.0
    %v3554 = vld [vmem:[#allocation2 + $0x200] sm:$0xff]
    %v3555 = vld [vmem:[#allocation2 + $0x208] sm:$0xff]
    %v3556 = vld [vmem:[#allocation2 + $0x210] sm:$0xff]
    %v3557 = vld [vmem:[#allocation2 + $0x218] sm:$0xff]
    %v3558 = vld [vmem:[#allocation2 + $0x220] sm:$0xff]
    %v3559 = vld [vmem:[#allocation2 + $0x228] sm:$0xff]
    %v3560 = vld [vmem:[#allocation2 + $0x230] sm:$0xff]
    %v3561 = vld [vmem:[#allocation2 + $0x238] sm:$0xff]
    %v3562 = vld [vmem:[#allocation2 + $0x240] sm:$0xff]
    %v3563 = vld [vmem:[#allocation2 + $0x248] sm:$0xff]
    %v3564 = vld [vmem:[#allocation2 + $0x250] sm:$0xff]
    %v3565 = vld [vmem:[#allocation2 + $0x258] sm:$0xff]
    %v3566 = vld [vmem:[#allocation2 + $0x260] sm:$0xff]
    %v3567 = vld [vmem:[#allocation2 + $0x268] sm:$0xff]
    %v3568 = vld [vmem:[#allocation2 + $0x270] sm:$0xff]
    %v3569 = vld [vmem:[#allocation2 + $0x278] sm:$0xff]
    %v3570 = vld [vmem:[#allocation2 + $0x280] sm:$0xff]
    %v3571 = vld [vmem:[#allocation2 + $0x288] sm:$0xff]
    %v3572 = vld [vmem:[#allocation2 + $0x290] sm:$0xff]
    %v3573 = vld [vmem:[#allocation2 + $0x298] sm:$0xff]
    %v3574 = vld [vmem:[#allocation2 + $0x2a0] sm:$0xff]
    %v3575 = vld [vmem:[#allocation2 + $0x2a8] sm:$0xff]
    %v3576 = vld [vmem:[#allocation2 + $0x2b0] sm:$0xff]
    %v3577 = vld [vmem:[#allocation2 + $0x2b8] sm:$0xff]
    %v3578 = vld [vmem:[#allocation2 + $0x2c0] sm:$0xff]
    %v3579 = vld [vmem:[#allocation2 + $0x2c8] sm:$0xff]
    %v3580 = vld [vmem:[#allocation2 + $0x2d0] sm:$0xff]
    %v3581 = vld [vmem:[#allocation2 + $0x2d8] sm:$0xff]
    %v3582 = vld [vmem:[#allocation2 + $0x2e0] sm:$0xff]
    %v3583 = vld [vmem:[#allocation2 + $0x2e8] sm:$0xff]
    %v3584 = vld [vmem:[#allocation2 + $0x2f0] sm:$0xff]
    %v3585 = vld [vmem:[#allocation2 + $0x2f8] sm:$0xff]
    %v3586 = vld [vmem:[#allocation2 + $0x300] sm:$0xff]
    %v3587 = vld [vmem:[#allocation2 + $0x308] sm:$0xff]
    %v3588 = vld [vmem:[#allocation2 + $0x310] sm:$0xff]
    %v3589 = vld [vmem:[#allocation2 + $0x318] sm:$0xff]
    %v3590 = vld [vmem:[#allocation2 + $0x320] sm:$0xff]
    %v3591 = vld [vmem:[#allocation2 + $0x328] sm:$0xff]
    %v3592 = vld [vmem:[#allocation2 + $0x330] sm:$0xff]
    %v3593 = vld [vmem:[#allocation2 + $0x338] sm:$0xff]
    %v3594 = vld [vmem:[#allocation2 + $0x340] sm:$0xff]
    %v3595 = vld [vmem:[#allocation2 + $0x348] sm:$0xff]
    %v3596 = vld [vmem:[#allocation2 + $0x350] sm:$0xff]
    %v3597 = vld [vmem:[#allocation2 + $0x358] sm:$0xff]
    %v3598 = vld [vmem:[#allocation2 + $0x360] sm:$0xff]
    %v3599 = vld [vmem:[#allocation2 + $0x368] sm:$0xff]
    %v3600 = vld [vmem:[#allocation2 + $0x370] sm:$0xff]
    %v3601 = vld [vmem:[#allocation2 + $0x378] sm:$0xff]
    %v3602 = vld [vmem:[#allocation2 + $0x380] sm:$0xff]
    %v3603 = vld [vmem:[#allocation2 + $0x388] sm:$0xff]
    %v3604 = vld [vmem:[#allocation2 + $0x390] sm:$0xff]
    %v3605 = vld [vmem:[#allocation2 + $0x398] sm:$0xff]
    %v3606 = vld [vmem:[#allocation2 + $0x3a0] sm:$0xff]
    %v3607 = vld [vmem:[#allocation2 + $0x3a8] sm:$0xff]
    %v3608 = vld [vmem:[#allocation2 + $0x3b0] sm:$0xff]
    %v3609 = vld [vmem:[#allocation2 + $0x3b8] sm:$0xff]
    %v3610 = vld [vmem:[#allocation2 + $0x3c0] sm:$0xff]
    %v3611 = vld [vmem:[#allocation2 + $0x3c8] sm:$0xff]
    %v3612 = vld [vmem:[#allocation2 + $0x3d0] sm:$0xff]
    %v3613 = vld [vmem:[#allocation2 + $0x3d8] sm:$0xff]
    %v3614 = vld [vmem:[#allocation2 + $0x3e0] sm:$0xff]
    %v3615 = vld [vmem:[#allocation2 + $0x3e8] sm:$0xff]
    %v3616 = vld [vmem:[#allocation2 + $0x3f0] sm:$0xff]
    %v3617 = vld [vmem:[#allocation2 + $0x3f8] sm:$0xff]
    %v3618 = vpack.c.bf16 %v3550, %v3550
    %v3619 = vpack.c.bf16 %v3551, %v3551
    %v3620 = vpack.c.bf16 %v3552, %v3552
    %v3621 = vpack.c.bf16 %v3553, %v3553
    %v3686 = vunpack.c.l.b16 %v3554
    %v3687 = vunpack.c.h.b16 %v3554
    %v3688 = vunpack.c.l.b16 %v3555
    %v3689 = vunpack.c.h.b16 %v3555
    %v3690 = vunpack.c.l.b16 %v3556
    %v3691 = vunpack.c.h.b16 %v3556
    %v3692 = vunpack.c.l.b16 %v3557
    %v3693 = vunpack.c.h.b16 %v3557
    %v3694 = vunpack.c.l.b16 %v3558
    %v3695 = vunpack.c.h.b16 %v3558
    %v3696 = vunpack.c.l.b16 %v3559
    %v3697 = vunpack.c.h.b16 %v3559
    %v3698 = vunpack.c.l.b16 %v3560
    %v3699 = vunpack.c.h.b16 %v3560
    %v3700 = vunpack.c.l.b16 %v3561
    %v3701 = vunpack.c.h.b16 %v3561
    %v3702 = vunpack.c.l.b16 %v3562
    %v3703 = vunpack.c.h.b16 %v3562
    %v3704 = vunpack.c.l.b16 %v3563
    %v3705 = vunpack.c.h.b16 %v3563
    %v3706 = vunpack.c.l.b16 %v3564
    %v3707 = vunpack.c.h.b16 %v3564
    %v3708 = vunpack.c.l.b16 %v3565
    %v3709 = vunpack.c.h.b16 %v3565
    %v3710 = vunpack.c.l.b16 %v3566
    %v3711 = vunpack.c.h.b16 %v3566
    %v3712 = vunpack.c.l.b16 %v3567
    %v3713 = vunpack.c.h.b16 %v3567
    %v3714 = vunpack.c.l.b16 %v3568
    %v3715 = vunpack.c.h.b16 %v3568
    %v3716 = vunpack.c.l.b16 %v3569
    %v3717 = vunpack.c.h.b16 %v3569
    %v3718 = vunpack.c.l.b16 %v3570
    %v3719 = vunpack.c.h.b16 %v3570
    %v3720 = vunpack.c.l.b16 %v3571
    %v3721 = vunpack.c.h.b16 %v3571
    %v3722 = vunpack.c.l.b16 %v3572
    %v3723 = vunpack.c.h.b16 %v3572
    %v3724 = vunpack.c.l.b16 %v3573
    %v3725 = vunpack.c.h.b16 %v3573
    %v3726 = vunpack.c.l.b16 %v3574
    %v3727 = vunpack.c.h.b16 %v3574
    %v3728 = vunpack.c.l.b16 %v3575
    %v3729 = vunpack.c.h.b16 %v3575
    %v3730 = vunpack.c.l.b16 %v3576
    %v3731 = vunpack.c.h.b16 %v3576
    %v3732 = vunpack.c.l.b16 %v3577
    %v3733 = vunpack.c.h.b16 %v3577
    %v3734 = vunpack.c.l.b16 %v3578
    %v3735 = vunpack.c.h.b16 %v3578
    %v3736 = vunpack.c.l.b16 %v3579
    %v3737 = vunpack.c.h.b16 %v3579
    %v3738 = vunpack.c.l.b16 %v3580
    %v3739 = vunpack.c.h.b16 %v3580
    %v3740 = vunpack.c.l.b16 %v3581
    %v3741 = vunpack.c.h.b16 %v3581
    %v3742 = vunpack.c.l.b16 %v3582
    %v3743 = vunpack.c.h.b16 %v3582
    %v3744 = vunpack.c.l.b16 %v3583
    %v3745 = vunpack.c.h.b16 %v3583
    %v3746 = vunpack.c.l.b16 %v3584
    %v3747 = vunpack.c.h.b16 %v3584
    %v3748 = vunpack.c.l.b16 %v3585
    %v3749 = vunpack.c.h.b16 %v3585
    %v3750 = vunpack.c.l.b16 %v3586
    %v3751 = vunpack.c.h.b16 %v3586
    %v3752 = vunpack.c.l.b16 %v3587
    %v3753 = vunpack.c.h.b16 %v3587
    %v3754 = vunpack.c.l.b16 %v3588
    %v3755 = vunpack.c.h.b16 %v3588
    %v3756 = vunpack.c.l.b16 %v3589
    %v3757 = vunpack.c.h.b16 %v3589
    %v3758 = vunpack.c.l.b16 %v3590
    %v3759 = vunpack.c.h.b16 %v3590
    %v3760 = vunpack.c.l.b16 %v3591
    %v3761 = vunpack.c.h.b16 %v3591
    %v3762 = vunpack.c.l.b16 %v3592
    %v3763 = vunpack.c.h.b16 %v3592
    %v3764 = vunpack.c.l.b16 %v3593
    %v3765 = vunpack.c.h.b16 %v3593
    %v3766 = vunpack.c.l.b16 %v3594
    %v3767 = vunpack.c.h.b16 %v3594
    %v3768 = vunpack.c.l.b16 %v3595
    %v3769 = vunpack.c.h.b16 %v3595
    %v3770 = vunpack.c.l.b16 %v3596
    %v3771 = vunpack.c.h.b16 %v3596
    %v3772 = vunpack.c.l.b16 %v3597
    %v3773 = vunpack.c.h.b16 %v3597
    %v3774 = vunpack.c.l.b16 %v3598
    %v3775 = vunpack.c.h.b16 %v3598
    %v3776 = vunpack.c.l.b16 %v3599
    %v3777 = vunpack.c.h.b16 %v3599
    %v3778 = vunpack.c.l.b16 %v3600
    %v3779 = vunpack.c.h.b16 %v3600
    %v3780 = vunpack.c.l.b16 %v3601
    %v3781 = vunpack.c.h.b16 %v3601
    %v3782 = vunpack.c.l.b16 %v3602
    %v3783 = vunpack.c.h.b16 %v3602
    %v3784 = vunpack.c.l.b16 %v3603
    %v3785 = vunpack.c.h.b16 %v3603
    %v3786 = vunpack.c.l.b16 %v3604
    %v3787 = vunpack.c.h.b16 %v3604
    %v3788 = vunpack.c.l.b16 %v3605
    %v3789 = vunpack.c.h.b16 %v3605
    %v3790 = vunpack.c.l.b16 %v3606
    %v3791 = vunpack.c.h.b16 %v3606
    %v3792 = vunpack.c.l.b16 %v3607
    %v3793 = vunpack.c.h.b16 %v3607
    %v3794 = vunpack.c.l.b16 %v3608
    %v3795 = vunpack.c.h.b16 %v3608
    %v3796 = vunpack.c.l.b16 %v3609
    %v3797 = vunpack.c.h.b16 %v3609
    %v3798 = vunpack.c.l.b16 %v3610
    %v3799 = vunpack.c.h.b16 %v3610
    %v3800 = vunpack.c.l.b16 %v3611
    %v3801 = vunpack.c.h.b16 %v3611
    %v3802 = vunpack.c.l.b16 %v3612
    %v3803 = vunpack.c.h.b16 %v3612
    %v3804 = vunpack.c.l.b16 %v3613
    %v3805 = vunpack.c.h.b16 %v3613
    %v3806 = vunpack.c.l.b16 %v3614
    %v3807 = vunpack.c.h.b16 %v3614
    %v3808 = vunpack.c.l.b16 %v3615
    %v3809 = vunpack.c.h.b16 %v3615
    %v3810 = vunpack.c.l.b16 %v3616
    %v3811 = vunpack.c.h.b16 %v3616
    %v3812 = vunpack.c.l.b16 %v3617
    %v3813 = vunpack.c.h.b16 %v3617
    %v3814 = vpack.c.b16 %v3688, %v3686
    %v3815 = vpack.c.b16 %v3689, %v3687
    %v3816 = vpack.c.b16 %v3692, %v3690
    %v3817 = vpack.c.b16 %v3693, %v3691
    %v3818 = vpack.c.b16 %v3696, %v3694
    %v3819 = vpack.c.b16 %v3697, %v3695
    %v3820 = vpack.c.b16 %v3700, %v3698
    %v3821 = vpack.c.b16 %v3701, %v3699
    %v3822 = vpack.c.b16 %v3704, %v3702
    %v3823 = vpack.c.b16 %v3705, %v3703
    %v3824 = vpack.c.b16 %v3708, %v3706
    %v3825 = vpack.c.b16 %v3709, %v3707
    %v3826 = vpack.c.b16 %v3712, %v3710
    %v3827 = vpack.c.b16 %v3713, %v3711
    %v3828 = vpack.c.b16 %v3716, %v3714
    %v3829 = vpack.c.b16 %v3717, %v3715
    %v3830 = vpack.c.b16 %v3720, %v3718
    %v3831 = vpack.c.b16 %v3721, %v3719
    %v3832 = vpack.c.b16 %v3724, %v3722
    %v3833 = vpack.c.b16 %v3725, %v3723
    %v3834 = vpack.c.b16 %v3728, %v3726
    %v3835 = vpack.c.b16 %v3729, %v3727
    %v3836 = vpack.c.b16 %v3732, %v3730
    %v3837 = vpack.c.b16 %v3733, %v3731
    %v3838 = vpack.c.b16 %v3736, %v3734
    %v3839 = vpack.c.b16 %v3737, %v3735
    %v3840 = vpack.c.b16 %v3740, %v3738
    %v3841 = vpack.c.b16 %v3741, %v3739
    %v3842 = vpack.c.b16 %v3744, %v3742
    %v3843 = vpack.c.b16 %v3745, %v3743
    %v3844 = vpack.c.b16 %v3748, %v3746
    %v3845 = vpack.c.b16 %v3749, %v3747
    %v3846 = vpack.c.b16 %v3752, %v3750
    %v3847 = vpack.c.b16 %v3753, %v3751
    %v3848 = vpack.c.b16 %v3756, %v3754
    %v3849 = vpack.c.b16 %v3757, %v3755
    %v3850 = vpack.c.b16 %v3760, %v3758
    %v3851 = vpack.c.b16 %v3761, %v3759
    %v3852 = vpack.c.b16 %v3764, %v3762
    %v3853 = vpack.c.b16 %v3765, %v3763
    %v3854 = vpack.c.b16 %v3768, %v3766
    %v3855 = vpack.c.b16 %v3769, %v3767
    %v3856 = vpack.c.b16 %v3772, %v3770
    %v3857 = vpack.c.b16 %v3773, %v3771
    %v3858 = vpack.c.b16 %v3776, %v3774
    %v3859 = vpack.c.b16 %v3777, %v3775
    %v3860 = vpack.c.b16 %v3780, %v3778
    %v3861 = vpack.c.b16 %v3781, %v3779
    %v3862 = vpack.c.b16 %v3784, %v3782
    %v3863 = vpack.c.b16 %v3785, %v3783
    %v3864 = vpack.c.b16 %v3788, %v3786
    %v3865 = vpack.c.b16 %v3789, %v3787
    %v3866 = vpack.c.b16 %v3792, %v3790
    %v3867 = vpack.c.b16 %v3793, %v3791
    %v3868 = vpack.c.b16 %v3796, %v3794
    %v3869 = vpack.c.b16 %v3797, %v3795
    %v3870 = vpack.c.b16 %v3800, %v3798
    %v3871 = vpack.c.b16 %v3801, %v3799
    %v3872 = vpack.c.b16 %v3804, %v3802
    %v3873 = vpack.c.b16 %v3805, %v3803
    %v3874 = vpack.c.b16 %v3808, %v3806
    %v3875 = vpack.c.b16 %v3809, %v3807
    %v3876 = vpack.c.b16 %v3812, %v3810
    %v3877 = vpack.c.b16 %v3813, %v3811
    %3942 = vmatprep.subr.bf16.mxu0 %v3815
    %3943 = vmatpush1.bf16.msra.mxu0 %v3814
    %3944 = vmatprep.subr.bf16.mxu0 %v3817
    %3945 = vmatpush1.bf16.msra.mxu0 %v3816
    %3946 = vmatprep.subr.bf16.mxu0 %v3819
    %3947 = vmatpush1.bf16.msra.mxu0 %v3818
    %3948 = vmatprep.subr.bf16.mxu0 %v3821
    %3949 = vmatpush1.bf16.msra.mxu0 %v3820
    %3950 = vmatprep.subr.bf16.mxu0 %v3823
    %3951 = vmatpush1.bf16.msra.mxu0 %v3822
    %3952 = vmatprep.subr.bf16.mxu0 %v3825
    %3953 = vmatpush1.bf16.msra.mxu0 %v3824
    %3954 = vmatprep.subr.bf16.mxu0 %v3827
    %3955 = vmatpush1.bf16.msra.mxu0 %v3826
    %3956 = vmatprep.subr.bf16.mxu0 %v3829
    %3957 = vmatpush1.bf16.msra.mxu0 %v3828
    %3958 = vmatprep.subr.bf16.mxu0 %v3831
    %3959 = vmatpush1.bf16.msra.mxu0 %v3830
    %3960 = vmatprep.subr.bf16.mxu0 %v3833
    %3961 = vmatpush1.bf16.msra.mxu0 %v3832
    %3962 = vmatprep.subr.bf16.mxu0 %v3835
    %3963 = vmatpush1.bf16.msra.mxu0 %v3834
    %3964 = vmatprep.subr.bf16.mxu0 %v3837
    %3965 = vmatpush1.bf16.msra.mxu0 %v3836
    %3966 = vmatprep.subr.bf16.mxu0 %v3839
    %3967 = vmatpush1.bf16.msra.mxu0 %v3838
    %3968 = vmatprep.subr.bf16.mxu0 %v3841
    %3969 = vmatpush1.bf16.msra.mxu0 %v3840
    %3970 = vmatprep.subr.bf16.mxu0 %v3843
    %3971 = vmatpush1.bf16.msra.mxu0 %v3842
    %3972 = vmatprep.subr.bf16.mxu0 %v3845
    %3973 = vmatpush1.bf16.msra.mxu0 %v3844
    %3974 = vmatprep.mubr.bf16.mxu0 %v3619
    %3975 = vmatmul.mubr.bf16.gmra.mrb[0].mxu0 %v3618
    %v3976 = vpop.f32.mrb[0].mxu0
    %v3977 = vadd.f32 0.0, %v3976
    %v3978 = vpop.f32.mrb[0].mxu0
    %v3979 = vadd.f32 0.0, %v3978
    %v3980 = vpop.f32.mrb[0].mxu0
    %v3981 = vpop.f32.mrb[0].mxu0
    %3982 = vdwg.mxu0
    %3983 = vmatprep.subr.bf16.mxu0 %v3847
    %3984 = vmatpush1.bf16.msra.mxu0 %v3846
    %3985 = vmatprep.subr.bf16.mxu0 %v3849
    %3986 = vmatpush1.bf16.msra.mxu0 %v3848
    %3987 = vmatprep.subr.bf16.mxu0 %v3851
    %3988 = vmatpush1.bf16.msra.mxu0 %v3850
    %3989 = vmatprep.subr.bf16.mxu0 %v3853
    %3990 = vmatpush1.bf16.msra.mxu0 %v3852
    %3991 = vmatprep.subr.bf16.mxu0 %v3855
    %3992 = vmatpush1.bf16.msra.mxu0 %v3854
    %3993 = vmatprep.subr.bf16.mxu0 %v3857
    %3994 = vmatpush1.bf16.msra.mxu0 %v3856
    %3995 = vmatprep.subr.bf16.mxu0 %v3859
    %3996 = vmatpush1.bf16.msra.mxu0 %v3858
    %3997 = vmatprep.subr.bf16.mxu0 %v3861
    %3998 = vmatpush1.bf16.msra.mxu0 %v3860
    %3999 = vmatprep.subr.bf16.mxu0 %v3863
    %4000 = vmatpush1.bf16.msra.mxu0 %v3862
    %4001 = vmatprep.subr.bf16.mxu0 %v3865
    %4002 = vmatpush1.bf16.msra.mxu0 %v3864
    %4003 = vmatprep.subr.bf16.mxu0 %v3867
    %4004 = vmatpush1.bf16.msra.mxu0 %v3866
    %4005 = vmatprep.subr.bf16.mxu0 %v3869
    %4006 = vmatpush1.bf16.msra.mxu0 %v3868
    %4007 = vmatprep.subr.bf16.mxu0 %v3871
    %4008 = vmatpush1.bf16.msra.mxu0 %v3870
    %4009 = vmatprep.subr.bf16.mxu0 %v3873
    %4010 = vmatpush1.bf16.msra.mxu0 %v3872
    %4011 = vmatprep.subr.bf16.mxu0 %v3875
    %4012 = vmatpush1.bf16.msra.mxu0 %v3874
    %4013 = vmatprep.subr.bf16.mxu0 %v3877
    %4014 = vmatpush1.bf16.msra.mxu0 %v3876
    %4015 = vmatprep.mubr.bf16.mxu0 %v3621
    %4016 = vmatmul.mubr.bf16.gmra.mrb[0].mxu0 %v3620
    %v4017 = vpop.f32.mrb[0].mxu0
    %v4018 = vadd.f32 %v3977, %v4017
    %v4019 = vpop.f32.mrb[0].mxu0
    %v4020 = vadd.f32 %v3979, %v4019
    %v4021 = vpop.f32.mrb[0].mxu0
    %v4022 = vpop.f32.mrb[0].mxu0
    %4023 = vdwg.mxu0
    %s4024 = scalar_lea.vmem %s3, 70
    %v4025 = vld [vmem:[%s4024] ss:$8 sm:$0x3]
    %s4026 = scalar_lea.vmem %s3, 71
    %v4027 = vld [vmem:[%s4026] ss:$8 sm:$0x3]
    %v4028 = vrot.slane %v4018, 4
    %v4029 = vadd.f32 %v4018, %v4028
    %v4030 = vrot.slane %v4029, 2
    %v4031 = vadd.f32 %v4029, %v4030
    %v4032 = vrot.slane %v4031, 1
    %v4033 = vadd.f32 %v4031, %v4032
    %v4034 = vrot.slane %v4020, 4
    %v4035 = vadd.f32 %v4020, %v4034
    %v4036 = vrot.slane %v4035, 2
    %v4037 = vadd.f32 %v4035, %v4036
    %v4038 = vrot.slane %v4037, 1
    %v4039 = vadd.f32 %v4037, %v4038
    %v4040 = vmul.f32 %v4033, %v301
    %v4041 = vmul.f32 %v4039, %v301
    %v4042 = vmul.f32 %v4018, %v4018
    %v4043 = vmul.f32 %v4020, %v4020
    %v4044 = vrot.slane %v4042, 4
    %v4045 = vadd.f32 %v4042, %v4044
    %v4046 = vrot.slane %v4045, 2
    %v4047 = vadd.f32 %v4045, %v4046
    %v4048 = vrot.slane %v4047, 1
    %v4049 = vadd.f32 %v4047, %v4048
    %v4050 = vrot.slane %v4043, 4
    %v4051 = vadd.f32 %v4043, %v4050
    %v4052 = vrot.slane %v4051, 2
    %v4053 = vadd.f32 %v4051, %v4052
    %v4054 = vrot.slane %v4053, 1
    %v4055 = vadd.f32 %v4053, %v4054
    %v4056 = vmul.f32 %v4049, %v301
    %v4057 = vmul.f32 %v4055, %v301
    %v4058 = vmul.f32 %v4040, %v4040
    %v4059 = vmul.f32 %v4041, %v4041
    %v4060 = vsub.f32 %v4056, %v4058
    %v4061 = vsub.f32 %v4057, %v4059
    %v4062 = vadd.f32 %v4060, 1e-05
    %v4063 = vadd.f32 %v4061, 1e-05
    %v4064 = vrsqrt.pop %v4062
    %v4065 = vrsqrt.pop %v4063
    %v4068 = vcombine.low %v4064, %v4065
    %v4070 = vunpack.c.l.s4 1966171168
    %v4071 = vunpack.c.0.s8 %v4070
    %v4072 = vlaneseq
    %v4073 = vshrl.u32 %v4072, 7
    %v4074 = vsub.s32 %v4071, %v4073
    %v4075 = vrot.slane %v4068, %v4074
    %v4077 = vunpack.c.l.s4 1966171168
    %v4078 = vunpack.c.0.s8 %v4077
    %v4079 = vlaneseq
    %v4080 = vshrl.u32 %v4079, 7
    %v4081 = vsub.s32 %v4078, %v4080
    %v4082 = vrot.slane %v4075, %v4081
    %v4084 = vmul.f32 %v4025, %v4082
    %v4086 = vlaneseq
    %v4087 = vshrl.u32 %v4086, 7
    %v4088 = vsub.s32 0, %v4087
    %v4089 = vrot.slane %v4084, %v4088
    %v4090 = vlaneseq
    %v4091 = vshrl.u32 %v4090, 7
    %v4092 = vsub.s32 1, %v4091
    %v4093 = vrot.slane %v4084, %v4092
    %v4096 = vmul.f32 %v4018, %v4089
    %v4097 = vmul.f32 %v4020, %v4093
    %v4098 = vmul.f32 %v4040, %v4089
    %v4099 = vmul.f32 %v4041, %v4093
    %v4102 = vcombine.low %v4098, %v4099
    %v4104 = vunpack.c.l.s4 1966171168
    %v4105 = vunpack.c.0.s8 %v4104
    %v4106 = vlaneseq
    %v4107 = vshrl.u32 %v4106, 7
    %v4108 = vsub.s32 %v4105, %v4107
    %v4109 = vrot.slane %v4102, %v4108
    %v4111 = vunpack.c.l.s4 1966171168
    %v4112 = vunpack.c.0.s8 %v4111
    %v4113 = vlaneseq
    %v4114 = vshrl.u32 %v4113, 7
    %v4115 = vsub.s32 %v4112, %v4114
    %v4116 = vrot.slane %v4109, %v4115
    %v4118 = vsub.f32 %v4027, %v4116
    %v4120 = vlaneseq
    %v4121 = vshrl.u32 %v4120, 7
    %v4122 = vsub.s32 0, %v4121
    %v4123 = vrot.slane %v4118, %v4122
    %v4124 = vlaneseq
    %v4125 = vshrl.u32 %v4124, 7
    %v4126 = vsub.s32 1, %v4125
    %v4127 = vrot.slane %v4118, %v4126
    %v4130 = vadd.f32 %v4096, %v4123
    %v4131 = vadd.f32 %v4097, %v4127
    %v4132 = vadd.f32 %v4130, %v2884
    %v4133 = vadd.f32 %v4131, %v2885
    %v4134 = vmax.f32 %v4132, 0.0
    %v4135 = vmax.f32 %v4133, 0.0
    %v4136 = vld [vmem:[%s6] sm:$0xff]
    %v4137 = vld [vmem:[%s6 + $0x8] sm:$0xff]
    %v4138 = vld [vmem:[%s6 + $0x10] sm:$0xff]
    %v4139 = vld [vmem:[%s6 + $0x18] sm:$0xff]
    %v4140 = vld [vmem:[%s6 + $0x20] sm:$0xff]
    %v4141 = vld [vmem:[%s6 + $0x28] sm:$0xff]
    %v4142 = vld [vmem:[%s6 + $0x30] sm:$0xff]
    %v4143 = vld [vmem:[%s6 + $0x38] sm:$0xff]
    %v4144 = vld [vmem:[%s6 + $0x40] sm:$0xff]
    %v4145 = vld [vmem:[%s6 + $0x48] sm:$0xff]
    %v4146 = vld [vmem:[%s6 + $0x50] sm:$0xff]
    %v4147 = vld [vmem:[%s6 + $0x58] sm:$0xff]
    %v4148 = vld [vmem:[%s6 + $0x60] sm:$0xff]
    %v4149 = vld [vmem:[%s6 + $0x68] sm:$0xff]
    %v4150 = vld [vmem:[%s6 + $0x70] sm:$0xff]
    %v4151 = vld [vmem:[%s6 + $0x78] sm:$0xff]
    %v4152 = vld [vmem:[%s6 + $0x80] sm:$0xff]
    %v4153 = vld [vmem:[%s6 + $0x88] sm:$0xff]
    %v4154 = vld [vmem:[%s6 + $0x90] sm:$0xff]
    %v4155 = vld [vmem:[%s6 + $0x98] sm:$0xff]
    %v4156 = vld [vmem:[%s6 + $0xa0] sm:$0xff]
    %v4157 = vld [vmem:[%s6 + $0xa8] sm:$0xff]
    %v4158 = vld [vmem:[%s6 + $0xb0] sm:$0xff]
    %v4159 = vld [vmem:[%s6 + $0xb8] sm:$0xff]
    %v4160 = vld [vmem:[%s6 + $0xc0] sm:$0xff]
    %v4161 = vld [vmem:[%s6 + $0xc8] sm:$0xff]
    %v4162 = vld [vmem:[%s6 + $0xd0] sm:$0xff]
    %v4163 = vld [vmem:[%s6 + $0xd8] sm:$0xff]
    %v4164 = vld [vmem:[%s6 + $0xe0] sm:$0xff]
    %v4165 = vld [vmem:[%s6 + $0xe8] sm:$0xff]
    %v4166 = vld [vmem:[%s6 + $0xf0] sm:$0xff]
    %v4167 = vld [vmem:[%s6 + $0xf8] sm:$0xff]
    %v4168 = vld [vmem:[%s6 + $0x100] sm:$0x1]
    %v4169 = vlaneseq
    %v4170 = vshrl.u32 %v4169, 7
    %v4171 = vsub.s32 0, %v4170
    %v4172 = vrot.slane %v4168, %v4171
    %4173 = vmatprep.subr.mxu0 0.0
    %4174 = vmatpush1.msra.mxu0 %v4136
    %4175 = vmatprep.subr.mxu0 0.0
    %4176 = vmatpush1.msra.mxu0 %v4137
    %4177 = vmatprep.subr.mxu0 0.0
    %4178 = vmatpush1.msra.mxu0 %v4138
    %4179 = vmatprep.subr.mxu0 0.0
    %4180 = vmatpush1.msra.mxu0 %v4139
    %4181 = vmatprep.subr.mxu0 0.0
    %4182 = vmatpush1.msra.mxu0 %v4140
    %4183 = vmatprep.subr.mxu0 0.0
    %4184 = vmatpush1.msra.mxu0 %v4141
    %4185 = vmatprep.subr.mxu0 0.0
    %4186 = vmatpush1.msra.mxu0 %v4142
    %4187 = vmatprep.subr.mxu0 0.0
    %4188 = vmatpush1.msra.mxu0 %v4143
    %4189 = vmatprep.subr.mxu0 0.0
    %4190 = vmatpush1.msra.mxu0 %v4144
    %4191 = vmatprep.subr.mxu0 0.0
    %4192 = vmatpush1.msra.mxu0 %v4145
    %4193 = vmatprep.subr.mxu0 0.0
    %4194 = vmatpush1.msra.mxu0 %v4146
    %4195 = vmatprep.subr.mxu0 0.0
    %4196 = vmatpush1.msra.mxu0 %v4147
    %4197 = vmatprep.subr.mxu0 0.0
    %4198 = vmatpush1.msra.mxu0 %v4148
    %4199 = vmatprep.subr.mxu0 0.0
    %4200 = vmatpush1.msra.mxu0 %v4149
    %4201 = vmatprep.subr.mxu0 0.0
    %4202 = vmatpush1.msra.mxu0 %v4150
    %4203 = vmatprep.subr.mxu0 0.0
    %4204 = vmatpush1.msra.mxu0 %v4151
    %4205 = vmatprep.subr.mxu0 0.0
    %4206 = vmatpush1.msra.mxu0 %v4152
    %4207 = vmatprep.subr.mxu0 0.0
    %4208 = vmatpush1.msra.mxu0 %v4153
    %4209 = vmatprep.subr.mxu0 0.0
    %4210 = vmatpush1.msra.mxu0 %v4154
    %4211 = vmatprep.subr.mxu0 0.0
    %4212 = vmatpush1.msra.mxu0 %v4155
    %4213 = vmatprep.subr.mxu0 0.0
    %4214 = vmatpush1.msra.mxu0 %v4156
    %4215 = vmatprep.subr.mxu0 0.0
    %4216 = vmatpush1.msra.mxu0 %v4157
    %4217 = vmatprep.subr.mxu0 0.0
    %4218 = vmatpush1.msra.mxu0 %v4158
    %4219 = vmatprep.subr.mxu0 0.0
    %4220 = vmatpush1.msra.mxu0 %v4159
    %4221 = vmatprep.subr.mxu0 0.0
    %4222 = vmatpush1.msra.mxu0 %v4160
    %4223 = vmatprep.subr.mxu0 0.0
    %4224 = vmatpush1.msra.mxu0 %v4161
    %4225 = vmatprep.subr.mxu0 0.0
    %4226 = vmatpush1.msra.mxu0 %v4162
    %4227 = vmatprep.subr.mxu0 0.0
    %4228 = vmatpush1.msra.mxu0 %v4163
    %4229 = vmatprep.subr.mxu0 0.0
    %4230 = vmatpush1.msra.mxu0 %v4164
    %4231 = vmatprep.subr.mxu0 0.0
    %4232 = vmatpush1.msra.mxu0 %v4165
    %4233 = vmatprep.subr.mxu0 0.0
    %4234 = vmatpush1.msra.mxu0 %v4166
    %4235 = vmatprep.subr.mxu0 0.0
    %4236 = vmatpush1.msra.mxu0 %v4167
    %4237 = vmatprep.mubr.f32.mxu0 %v4135
    %4238 = vmatmul.mubr.f32.gmra.mrb[0].mxu0 %v4134
    %v4239 = vpop.f32.mrb[0].mxu0
    %v4240 = vadd.f32 %v4172, %v4239
    %v4241 = vpop.f32.mrb[0].mxu0
    %4242 = vdwg.mxu0
    %4243 = vst.msk [vmem:[#allocation7] sm:$0xff] %vm82, %v4240
    // Predicated region
    $region38: #{residual_net2_forward.1} parent=1 // pred_check
      _
    $region39: #{residual_net2_forward.1} parent=1 // pred_check_branch
      %4245 = sbr.rel (0) target = $region41
    $region40: #{residual_net2_forward.1} parent=1 // pred_region
      %s4247 = ssub.s32 128, 128
      %4248 = vsyncadd [#allocation4], %s4247
      %s4250 = sshll.u32 [#allocation7], 4
      %s4251 = int_to_ptr.vmem [resolvable:$true] %s4250
      %4253 = dma.vmem_to_hbm [thread:$0]  %s4251, 128, %s7, [#allocation4]
    $region41: #{residual_net2_forward.1} parent=1 // pred_fallthru
      _
    // Predicated region
    $region42: #{residual_net2_forward.1} parent=1 // pred_check
      _
    $region43: #{residual_net2_forward.1} parent=1 // pred_check_branch
      %4255 = sbr.rel (0) target = $region45
    $region44: #{residual_net2_forward.1} parent=1 // pred_region
      %4256 = dma.done [#allocation4], 128
    $region45: #{residual_net2_forward.1} parent=1 // pred_fallthru
      _
    %4257 = vsyncpa [#allocation3], 1
    %4258 = vsyncpa [#allocation6], 1
    %4259 = vsyncpa [#allocation4], 1

</llo_original>
